<compile_context>
chip_gen: v7x
topology: tpu7x:2x2x1
jax: 0.10.0
libtpu: 0.0.40
codegen_flags: <defaults>
</compile_context>

<pallas_src>
from functools import partial

import jax
import jax.numpy as jnp
from jax.experimental import pallas as pl
from jax.experimental.pallas import tpu as pltpu


# -----------------------------------------------------------------------------
# Fused complex 3x3 conv (padding=1) kernel: 9 accumulated MXU matmuls against
# the block-complex weight.  One grid step == one batch image.
# -----------------------------------------------------------------------------
def _cconv3x3_kernel(x_ref, w_ref, o_ref, s_ref, *, H, W, C2, O2):
    """
    x_ref : (1, H, W, C2)     input image, channels = [real | imag]   (C2 = 2*Cin)
    w_ref : (3, 3, C2, O2)    block-complex weight per tap            (O2 = 2*Cout)
    o_ref : (1, H, W, O2)     conv output, channels = [real | imag]
    s_ref : (3, H+2, W, C2)   scratch: three dx-shifted, H-padded slabs
                              S_dx[h', w] = X[h'-1, w+dx-1] (zero outside image)
    """
    zrow = jnp.zeros((3, 1, W, C2), jnp.float32)
    zcol = jnp.zeros((1, H + 2, 1, C2), jnp.float32)

    # Top / bottom halo rows of every slab are zero.
    s_ref[:, 0:1, :, :] = zrow
    s_ref[:, H + 1:H + 2, :, :] = zrow
    # Columns shifted in from outside the image are zero.
    s_ref[0:1, :, 0:1, :] = zcol
    s_ref[2:3, :, W - 1:W, :] = zcol
    # Interiors (built once; the 9 taps below only take free row slices).
    s_ref[0:1, 1:H + 1, 1:W, :] = x_ref[:, :, 0:W - 1, :]   # dx = 0 (shift right)
    s_ref[1:2, 1:H + 1, :, :] = x_ref[...]                  # dx = 1 (no shift)
    s_ref[2:3, 1:H + 1, 0:W - 1, :] = x_ref[:, :, 1:W, :]   # dx = 2 (shift left)

    acc = jnp.zeros((H * W, O2), jnp.float32)
    for dy in range(3):
        for dx in range(3):
            lhs = s_ref[dx, dy:dy + H, :, :].reshape(H * W, C2)
            acc = acc + jnp.dot(lhs, w_ref[dy, dx],
                                preferred_element_type=jnp.float32)
    o_ref[...] = acc.reshape(1, H, W, O2)


# -----------------------------------------------------------------------------
# CDownsample forward wrapper
# -----------------------------------------------------------------------------
def cdownsample(x, w_real, w_imag):
    """
    x      : (B, n_feat, H, W, 2)  float32 (complex kept as trailing dim of 2)
    w_real : (n_feat//2, n_feat, 3, 3)  ComplexConv.real Conv2d weight
    w_imag : (n_feat//2, n_feat, 3, 3)  ComplexConv.imag Conv2d weight
    returns: (B, 2*n_feat, H//2, W//2, 2)
    """
    B, Cin, H, W, _ = x.shape
    Cout = w_real.shape[0]
    C2, O2 = 2 * Cin, 2 * Cout
    assert H % 2 == 0 and W % 2 == 0

    # Channels-last with real/imag stacked along channels: (B, H, W, [xr | xi]).
    x_cat = jnp.transpose(x, (0, 2, 3, 4, 1)).reshape(B, H, W, C2)

    # Block-complex weight, taps first: Wc[dy, dx] = [[Wr, Wi], [-Wi, Wr]].
    wr = jnp.transpose(w_real, (2, 3, 1, 0))     # (3, 3, Cin, Cout)
    wi = jnp.transpose(w_imag, (2, 3, 1, 0))
    wc = jnp.concatenate(
        [jnp.concatenate([wr, wi], axis=-1),
         jnp.concatenate([-wi, wr], axis=-1)], axis=2)        # (3, 3, 2Cin, 2Cout)

    kernel = partial(_cconv3x3_kernel, H=H, W=W, C2=C2, O2=O2)
    y_cat = pl.pallas_call(
        kernel,
        grid=(B,),
        in_specs=[
            pl.BlockSpec((1, H, W, C2), lambda b: (b, 0, 0, 0)),
            pl.BlockSpec((3, 3, C2, O2), lambda b: (0, 0, 0, 0)),
        ],
        out_specs=pl.BlockSpec((1, H, W, O2), lambda b: (b, 0, 0, 0)),
        out_shape=jax.ShapeDtypeStruct((B, H, W, O2), jnp.float32),
        scratch_shapes=[pltpu.VMEM((3, H + 2, W, C2), jnp.float32)],
        compiler_params=pltpu.CompilerParams(
            dimension_semantics=("parallel",)),
    )(x_cat, wc)                                  # (B, H, W, 2*Cout), [real | imag]

    # pixel_unshuffle(2) + move complex dim last + channels to the front.
    # y_cat last dim is ordered (ri, c); split spatial into 2x2 blocks (i, j).
    y = y_cat.reshape(B, H // 2, 2, W // 2, 2, 2, Cout)   # b h2 i w2 j ri c
    y = jnp.transpose(y, (0, 6, 2, 4, 1, 3, 5))           # b c i j h2 w2 ri
    return y.reshape(B, 4 * Cout, H // 2, W // 2, 2)


# -----------------------------------------------------------------------------
# Pure-JAX reference mirroring the PyTorch module op-by-op (for the check).
# -----------------------------------------------------------------------------
def reference(x, w_real, w_imag):
    B, Cin, H, W, _ = x.shape
    Cout = w_real.shape[0]
    xr, xi = x[..., 0], x[..., 1]

    def conv3x3(a, w):
        ap = jnp.pad(a, ((0, 0), (0, 0), (1, 1), (1, 1)))
        out = jnp.zeros((B, Cout, H, W), jnp.float32)
        for dy in range(3):
            for dx in range(3):
                out = out + jnp.einsum("bchw,oc->bohw",
                                       ap[:, :, dy:dy + H, dx:dx + W],
                                       w[:, :, dy, dx])
        return out

    yr = conv3x3(xr, w_real) - conv3x3(xi, w_imag)
    yi = conv3x3(xr, w_imag) + conv3x3(xi, w_real)
    y = jnp.stack([yr, yi], axis=-1)                        # (B, Cout, H, W, 2)

    yp = jnp.transpose(y, (0, 4, 1, 2, 3))                  # (B, 2, Cout, H, W)
    yp = yp.reshape(B, 2, Cout, H // 2, 2, W // 2, 2)       # b ri c h2 i w2 j
    yp = jnp.transpose(yp, (0, 1, 2, 4, 6, 3, 5))           # b ri c i j h2 w2
    yp = yp.reshape(B, 2, Cout * 4, H // 2, W // 2)         # pixel_unshuffle(2)
    return jnp.transpose(yp, (0, 2, 3, 4, 1))               # (B, 4Cout, H/2, W/2, 2)


if __name__ == "__main__":
    # Small shapes consistent with the module: x (B, n_feat, H, W, 2).
    B, n_feat, H, W = 2, 8, 16, 16
    Cout = n_feat // 2

    key = jax.random.PRNGKey(0)
    k0, k1, k2 = jax.random.split(key, 3)
    x = jax.random.normal(k0, (B, n_feat, H, W, 2), jnp.float32)
    w_real = 0.1 * jax.random.normal(k1, (Cout, n_feat, 3, 3), jnp.float32)
    w_imag = 0.1 * jax.random.normal(k2, (Cout, n_feat, 3, 3), jnp.float32)

    out = jax.jit(cdownsample)(x, w_real, w_imag)
    out = jax.block_until_ready(out)

    ref = reference(x, w_real, w_imag)
    assert out.shape == (B, 2 * n_feat, H // 2, W // 2, 2), out.shape
    max_err = float(jnp.max(jnp.abs(out - ref)))
    assert max_err < 1e-3, max_err
    print("KERNEL_OK")
</pallas_src>

<mosaic_0001>
module attributes {stable_mosaic.version = 11 : i64} {
  func.func @_cconv3x3_kernel(%arg0: i32, %arg1: memref<1x16x16x16xf32, #tpu.memory_space<vmem>>, %arg2: memref<3x3x16x8xf32, #tpu.memory_space<vmem>>, %arg3: memref<1x16x16x8xf32, #tpu.memory_space<vmem>>, %arg4: memref<3x18x16x16xf32, #tpu.memory_space<vmem>>) attributes {dimension_semantics = [#tpu.dimension_semantics<parallel>], iteration_bounds = array<i64: 2>, scalar_prefetch = 0 : i64, scratch_operands = 1 : i64, tpu.core_type = #tpu.core_type<tc>, window_params = [{transform_indices = @transform_0, window_bounds = array<i64: 1, 16, 16, 16>}, {pipeline_mode = #tpu.pipeline_mode<synchronous>, transform_indices = @transform_1, window_bounds = array<i64: 3, 3, 16, 8>}, {transform_indices = @transform_2, window_bounds = array<i64: 1, 16, 16, 8>}]} {
    %cst = arith.constant 0.000000e+00 : f32
    %0 = vector.broadcast %cst : f32 to vector<3x1x16x16xf32>
    %cst_0 = arith.constant 0.000000e+00 : f32
    %1 = vector.broadcast %cst_0 : f32 to vector<1x18x1x16xf32>
    %c0 = arith.constant 0 : index
    %c0_1 = arith.constant 0 : index
    %c0_2 = arith.constant 0 : index
    %c0_3 = arith.constant 0 : index
    %2 = vector.load %arg4[%c0, %c0_1, %c0_2, %c0_3] : memref<3x18x16x16xf32, #tpu.memory_space<vmem>>, vector<3x1x16x16xf32>
    tpu.vector_store %arg4[%c0, %c0_1, %c0_2, %c0_3], %0 {strides = array<i32>} : memref<3x18x16x16xf32, #tpu.memory_space<vmem>>, vector<3x1x16x16xf32>,
    %c0_4 = arith.constant 0 : index
    %c17 = arith.constant 17 : index
    %c0_5 = arith.constant 0 : index
    %c0_6 = arith.constant 0 : index
    %3 = vector.load %arg4[%c0_4, %c17, %c0_5, %c0_6] : memref<3x18x16x16xf32, #tpu.memory_space<vmem>>, vector<3x1x16x16xf32>
    tpu.vector_store %arg4[%c0_4, %c17, %c0_5, %c0_6], %0 {strides = array<i32>} : memref<3x18x16x16xf32, #tpu.memory_space<vmem>>, vector<3x1x16x16xf32>,
    %c0_7 = arith.constant 0 : index
    %c0_8 = arith.constant 0 : index
    %c0_9 = arith.constant 0 : index
    %c0_10 = arith.constant 0 : index
    %4 = vector.load %arg4[%c0_7, %c0_8, %c0_9, %c0_10] : memref<3x18x16x16xf32, #tpu.memory_space<vmem>>, vector<1x18x1x16xf32>
    tpu.vector_store %arg4[%c0_7, %c0_8, %c0_9, %c0_10], %1 {strides = array<i32>} : memref<3x18x16x16xf32, #tpu.memory_space<vmem>>, vector<1x18x1x16xf32>,
    %c2 = arith.constant 2 : index
    %c0_11 = arith.constant 0 : index
    %c15 = arith.constant 15 : index
    %c0_12 = arith.constant 0 : index
    %5 = vector.load %arg4[%c2, %c0_11, %c15, %c0_12] : memref<3x18x16x16xf32, #tpu.memory_space<vmem>>, vector<1x18x1x16xf32>
    tpu.vector_store %arg4[%c2, %c0_11, %c15, %c0_12], %1 {strides = array<i32>} : memref<3x18x16x16xf32, #tpu.memory_space<vmem>>, vector<1x18x1x16xf32>,
    %c0_13 = arith.constant 0 : index
    %c0_14 = arith.constant 0 : index
    %c0_15 = arith.constant 0 : index
    %c0_16 = arith.constant 0 : index
    %6 = vector.load %arg1[%c0_13, %c0_14, %c0_15, %c0_16] : memref<1x16x16x16xf32, #tpu.memory_space<vmem>>, vector<1x16x15x16xf32>
    %c0_17 = arith.constant 0 : index
    %c1 = arith.constant 1 : index
    %c1_18 = arith.constant 1 : index
    %c0_19 = arith.constant 0 : index
    %7 = vector.load %arg4[%c0_17, %c1, %c1_18, %c0_19] : memref<3x18x16x16xf32, #tpu.memory_space<vmem>>, vector<1x16x15x16xf32>
    tpu.vector_store %arg4[%c0_17, %c1, %c1_18, %c0_19], %6 {strides = array<i32>} : memref<3x18x16x16xf32, #tpu.memory_space<vmem>>, vector<1x16x15x16xf32>,
    %c0_20 = arith.constant 0 : index
    %c0_21 = arith.constant 0 : index
    %c0_22 = arith.constant 0 : index
    %c0_23 = arith.constant 0 : index
    %8 = vector.load %arg1[%c0_20, %c0_21, %c0_22, %c0_23] : memref<1x16x16x16xf32, #tpu.memory_space<vmem>>, vector<1x16x16x16xf32>
    %c1_24 = arith.constant 1 : index
    %c1_25 = arith.constant 1 : index
    %c0_26 = arith.constant 0 : index
    %c0_27 = arith.constant 0 : index
    %9 = vector.load %arg4[%c1_24, %c1_25, %c0_26, %c0_27] : memref<3x18x16x16xf32, #tpu.memory_space<vmem>>, vector<1x16x16x16xf32>
    tpu.vector_store %arg4[%c1_24, %c1_25, %c0_26, %c0_27], %8 {strides = array<i32>} : memref<3x18x16x16xf32, #tpu.memory_space<vmem>>, vector<1x16x16x16xf32>,
    %c0_28 = arith.constant 0 : index
    %c0_29 = arith.constant 0 : index
    %c1_30 = arith.constant 1 : index
    %c0_31 = arith.constant 0 : index
    %10 = vector.load %arg1[%c0_28, %c0_29, %c1_30, %c0_31] : memref<1x16x16x16xf32, #tpu.memory_space<vmem>>, vector<1x16x15x16xf32>
    %c2_32 = arith.constant 2 : index
    %c1_33 = arith.constant 1 : index
    %c0_34 = arith.constant 0 : index
    %c0_35 = arith.constant 0 : index
    %11 = vector.load %arg4[%c2_32, %c1_33, %c0_34, %c0_35] : memref<3x18x16x16xf32, #tpu.memory_space<vmem>>, vector<1x16x15x16xf32>
    tpu.vector_store %arg4[%c2_32, %c1_33, %c0_34, %c0_35], %10 {strides = array<i32>} : memref<3x18x16x16xf32, #tpu.memory_space<vmem>>, vector<1x16x15x16xf32>,
    %cst_36 = arith.constant 0.000000e+00 : f32
    %12 = vector.broadcast %cst_36 : f32 to vector<256x8xf32>
    %c0_37 = arith.constant 0 : index
    %c0_38 = arith.constant 0 : index
    %c0_39 = arith.constant 0 : index
    %c0_40 = arith.constant 0 : index
    %13 = vector.load %arg4[%c0_37, %c0_38, %c0_39, %c0_40] : memref<3x18x16x16xf32, #tpu.memory_space<vmem>>, vector<1x16x16x16xf32>
    %14 = vector.shape_cast %13 : vector<1x16x16x16xf32> to vector<16x16x16xf32>
    %15 = vector.shape_cast %14 : vector<16x16x16xf32> to vector<256x16xf32>
    %c0_41 = arith.constant 0 : index
    %c0_42 = arith.constant 0 : index
    %c0_43 = arith.constant 0 : index
    %c0_44 = arith.constant 0 : index
    %16 = vector.load %arg2[%c0_41, %c0_42, %c0_43, %c0_44] : memref<3x3x16x8xf32, #tpu.memory_space<vmem>>, vector<1x1x16x8xf32>
    %17 = vector.shape_cast %16 : vector<1x1x16x8xf32> to vector<16x8xf32>
    %cst_45 = arith.constant dense<0.000000e+00> : vector<256x8xf32>
    %18 = tpu.matmul %15, %17, %cst_45 {dimension_numbers = #tpu.dot_dimension_numbers<[1], [0], [0], [1], [0, 0, 1, 1], [], []>} : vector<256x16xf32>, vector<16x8xf32>, vector<256x8xf32> -> vector<256x8xf32>
    %19 = arith.addf %12, %18 : vector<256x8xf32>
    %c1_46 = arith.constant 1 : index
    %c0_47 = arith.constant 0 : index
    %c0_48 = arith.constant 0 : index
    %c0_49 = arith.constant 0 : index
    %20 = vector.load %arg4[%c1_46, %c0_47, %c0_48, %c0_49] : memref<3x18x16x16xf32, #tpu.memory_space<vmem>>, vector<1x16x16x16xf32>
    %21 = vector.shape_cast %20 : vector<1x16x16x16xf32> to vector<16x16x16xf32>
    %22 = vector.shape_cast %21 : vector<16x16x16xf32> to vector<256x16xf32>
    %c0_50 = arith.constant 0 : index
    %c1_51 = arith.constant 1 : index
    %c0_52 = arith.constant 0 : index
    %c0_53 = arith.constant 0 : index
    %23 = vector.load %arg2[%c0_50, %c1_51, %c0_52, %c0_53] : memref<3x3x16x8xf32, #tpu.memory_space<vmem>>, vector<1x1x16x8xf32>
    %24 = vector.shape_cast %23 : vector<1x1x16x8xf32> to vector<16x8xf32>
    %cst_54 = arith.constant dense<0.000000e+00> : vector<256x8xf32>
    %25 = tpu.matmul %22, %24, %cst_54 {dimension_numbers = #tpu.dot_dimension_numbers<[1], [0], [0], [1], [0, 0, 1, 1], [], []>} : vector<256x16xf32>, vector<16x8xf32>, vector<256x8xf32> -> vector<256x8xf32>
    %26 = arith.addf %19, %25 : vector<256x8xf32>
    %c2_55 = arith.constant 2 : index
    %c0_56 = arith.constant 0 : index
    %c0_57 = arith.constant 0 : index
    %c0_58 = arith.constant 0 : index
    %27 = vector.load %arg4[%c2_55, %c0_56, %c0_57, %c0_58] : memref<3x18x16x16xf32, #tpu.memory_space<vmem>>, vector<1x16x16x16xf32>
    %28 = vector.shape_cast %27 : vector<1x16x16x16xf32> to vector<16x16x16xf32>
    %29 = vector.shape_cast %28 : vector<16x16x16xf32> to vector<256x16xf32>
    %c0_59 = arith.constant 0 : index
    %c2_60 = arith.constant 2 : index
    %c0_61 = arith.constant 0 : index
    %c0_62 = arith.constant 0 : index
    %30 = vector.load %arg2[%c0_59, %c2_60, %c0_61, %c0_62] : memref<3x3x16x8xf32, #tpu.memory_space<vmem>>, vector<1x1x16x8xf32>
    %31 = vector.shape_cast %30 : vector<1x1x16x8xf32> to vector<16x8xf32>
    %cst_63 = arith.constant dense<0.000000e+00> : vector<256x8xf32>
    %32 = tpu.matmul %29, %31, %cst_63 {dimension_numbers = #tpu.dot_dimension_numbers<[1], [0], [0], [1], [0, 0, 1, 1], [], []>} : vector<256x16xf32>, vector<16x8xf32>, vector<256x8xf32> -> vector<256x8xf32>
    %33 = arith.addf %26, %32 : vector<256x8xf32>
    %c0_64 = arith.constant 0 : index
    %c1_65 = arith.constant 1 : index
    %c0_66 = arith.constant 0 : index
    %c0_67 = arith.constant 0 : index
    %34 = vector.load %arg4[%c0_64, %c1_65, %c0_66, %c0_67] : memref<3x18x16x16xf32, #tpu.memory_space<vmem>>, vector<1x16x16x16xf32>
    %35 = vector.shape_cast %34 : vector<1x16x16x16xf32> to vector<16x16x16xf32>
    %36 = vector.shape_cast %35 : vector<16x16x16xf32> to vector<256x16xf32>
    %c1_68 = arith.constant 1 : index
    %c0_69 = arith.constant 0 : index
    %c0_70 = arith.constant 0 : index
    %c0_71 = arith.constant 0 : index
    %37 = vector.load %arg2[%c1_68, %c0_69, %c0_70, %c0_71] : memref<3x3x16x8xf32, #tpu.memory_space<vmem>>, vector<1x1x16x8xf32>
    %38 = vector.shape_cast %37 : vector<1x1x16x8xf32> to vector<16x8xf32>
    %cst_72 = arith.constant dense<0.000000e+00> : vector<256x8xf32>
    %39 = tpu.matmul %36, %38, %cst_72 {dimension_numbers = #tpu.dot_dimension_numbers<[1], [0], [0], [1], [0, 0, 1, 1], [], []>} : vector<256x16xf32>, vector<16x8xf32>, vector<256x8xf32> -> vector<256x8xf32>
    %40 = arith.addf %33, %39 : vector<256x8xf32>
    %c1_73 = arith.constant 1 : index
    %c1_74 = arith.constant 1 : index
    %c0_75 = arith.constant 0 : index
    %c0_76 = arith.constant 0 : index
    %41 = vector.load %arg4[%c1_73, %c1_74, %c0_75, %c0_76] : memref<3x18x16x16xf32, #tpu.memory_space<vmem>>, vector<1x16x16x16xf32>
    %42 = vector.shape_cast %41 : vector<1x16x16x16xf32> to vector<16x16x16xf32>
    %43 = vector.shape_cast %42 : vector<16x16x16xf32> to vector<256x16xf32>
    %c1_77 = arith.constant 1 : index
    %c1_78 = arith.constant 1 : index
    %c0_79 = arith.constant 0 : index
    %c0_80 = arith.constant 0 : index
    %44 = vector.load %arg2[%c1_77, %c1_78, %c0_79, %c0_80] : memref<3x3x16x8xf32, #tpu.memory_space<vmem>>, vector<1x1x16x8xf32>
    %45 = vector.shape_cast %44 : vector<1x1x16x8xf32> to vector<16x8xf32>
    %cst_81 = arith.constant dense<0.000000e+00> : vector<256x8xf32>
    %46 = tpu.matmul %43, %45, %cst_81 {dimension_numbers = #tpu.dot_dimension_numbers<[1], [0], [0], [1], [0, 0, 1, 1], [], []>} : vector<256x16xf32>, vector<16x8xf32>, vector<256x8xf32> -> vector<256x8xf32>
    %47 = arith.addf %40, %46 : vector<256x8xf32>
    %c2_82 = arith.constant 2 : index
    %c1_83 = arith.constant 1 : index
    %c0_84 = arith.constant 0 : index
    %c0_85 = arith.constant 0 : index
    %48 = vector.load %arg4[%c2_82, %c1_83, %c0_84, %c0_85] : memref<3x18x16x16xf32, #tpu.memory_space<vmem>>, vector<1x16x16x16xf32>
    %49 = vector.shape_cast %48 : vector<1x16x16x16xf32> to vector<16x16x16xf32>
    %50 = vector.shape_cast %49 : vector<16x16x16xf32> to vector<256x16xf32>
    %c1_86 = arith.constant 1 : index
    %c2_87 = arith.constant 2 : index
    %c0_88 = arith.constant 0 : index
    %c0_89 = arith.constant 0 : index
    %51 = vector.load %arg2[%c1_86, %c2_87, %c0_88, %c0_89] : memref<3x3x16x8xf32, #tpu.memory_space<vmem>>, vector<1x1x16x8xf32>
    %52 = vector.shape_cast %51 : vector<1x1x16x8xf32> to vector<16x8xf32>
    %cst_90 = arith.constant dense<0.000000e+00> : vector<256x8xf32>
    %53 = tpu.matmul %50, %52, %cst_90 {dimension_numbers = #tpu.dot_dimension_numbers<[1], [0], [0], [1], [0, 0, 1, 1], [], []>} : vector<256x16xf32>, vector<16x8xf32>, vector<256x8xf32> -> vector<256x8xf32>
    %54 = arith.addf %47, %53 : vector<256x8xf32>
    %c0_91 = arith.constant 0 : index
    %c2_92 = arith.constant 2 : index
    %c0_93 = arith.constant 0 : index
    %c0_94 = arith.constant 0 : index
    %55 = vector.load %arg4[%c0_91, %c2_92, %c0_93, %c0_94] : memref<3x18x16x16xf32, #tpu.memory_space<vmem>>, vector<1x16x16x16xf32>
    %56 = vector.shape_cast %55 : vector<1x16x16x16xf32> to vector<16x16x16xf32>
    %57 = vector.shape_cast %56 : vector<16x16x16xf32> to vector<256x16xf32>
    %c2_95 = arith.constant 2 : index
    %c0_96 = arith.constant 0 : index
    %c0_97 = arith.constant 0 : index
    %c0_98 = arith.constant 0 : index
    %58 = vector.load %arg2[%c2_95, %c0_96, %c0_97, %c0_98] : memref<3x3x16x8xf32, #tpu.memory_space<vmem>>, vector<1x1x16x8xf32>
    %59 = vector.shape_cast %58 : vector<1x1x16x8xf32> to vector<16x8xf32>
    %cst_99 = arith.constant dense<0.000000e+00> : vector<256x8xf32>
    %60 = tpu.matmul %57, %59, %cst_99 {dimension_numbers = #tpu.dot_dimension_numbers<[1], [0], [0], [1], [0, 0, 1, 1], [], []>} : vector<256x16xf32>, vector<16x8xf32>, vector<256x8xf32> -> vector<256x8xf32>
    %61 = arith.addf %54, %60 : vector<256x8xf32>
    %c1_100 = arith.constant 1 : index
    %c2_101 = arith.constant 2 : index
    %c0_102 = arith.constant 0 : index
    %c0_103 = arith.constant 0 : index
    %62 = vector.load %arg4[%c1_100, %c2_101, %c0_102, %c0_103] : memref<3x18x16x16xf32, #tpu.memory_space<vmem>>, vector<1x16x16x16xf32>
    %63 = vector.shape_cast %62 : vector<1x16x16x16xf32> to vector<16x16x16xf32>
    %64 = vector.shape_cast %63 : vector<16x16x16xf32> to vector<256x16xf32>
    %c2_104 = arith.constant 2 : index
    %c1_105 = arith.constant 1 : index
    %c0_106 = arith.constant 0 : index
    %c0_107 = arith.constant 0 : index
    %65 = vector.load %arg2[%c2_104, %c1_105, %c0_106, %c0_107] : memref<3x3x16x8xf32, #tpu.memory_space<vmem>>, vector<1x1x16x8xf32>
    %66 = vector.shape_cast %65 : vector<1x1x16x8xf32> to vector<16x8xf32>
    %cst_108 = arith.constant dense<0.000000e+00> : vector<256x8xf32>
    %67 = tpu.matmul %64, %66, %cst_108 {dimension_numbers = #tpu.dot_dimension_numbers<[1], [0], [0], [1], [0, 0, 1, 1], [], []>} : vector<256x16xf32>, vector<16x8xf32>, vector<256x8xf32> -> vector<256x8xf32>
    %68 = arith.addf %61, %67 : vector<256x8xf32>
    %c2_109 = arith.constant 2 : index
    %c2_110 = arith.constant 2 : index
    %c0_111 = arith.constant 0 : index
    %c0_112 = arith.constant 0 : index
    %69 = vector.load %arg4[%c2_109, %c2_110, %c0_111, %c0_112] : memref<3x18x16x16xf32, #tpu.memory_space<vmem>>, vector<1x16x16x16xf32>
    %70 = vector.shape_cast %69 : vector<1x16x16x16xf32> to vector<16x16x16xf32>
    %71 = vector.shape_cast %70 : vector<16x16x16xf32> to vector<256x16xf32>
    %c2_113 = arith.constant 2 : index
    %c2_114 = arith.constant 2 : index
    %c0_115 = arith.constant 0 : index
    %c0_116 = arith.constant 0 : index
    %72 = vector.load %arg2[%c2_113, %c2_114, %c0_115, %c0_116] : memref<3x3x16x8xf32, #tpu.memory_space<vmem>>, vector<1x1x16x8xf32>
    %73 = vector.shape_cast %72 : vector<1x1x16x8xf32> to vector<16x8xf32>
    %cst_117 = arith.constant dense<0.000000e+00> : vector<256x8xf32>
    %74 = tpu.matmul %71, %73, %cst_117 {dimension_numbers = #tpu.dot_dimension_numbers<[1], [0], [0], [1], [0, 0, 1, 1], [], []>} : vector<256x16xf32>, vector<16x8xf32>, vector<256x8xf32> -> vector<256x8xf32>
    %75 = arith.addf %68, %74 : vector<256x8xf32>
    %76 = vector.shape_cast %75 : vector<256x8xf32> to vector<1x16x16x8xf32>
    %c0_118 = arith.constant 0 : index
    %c0_119 = arith.constant 0 : index
    %c0_120 = arith.constant 0 : index
    %c0_121 = arith.constant 0 : index
    %77 = vector.load %arg3[%c0_118, %c0_119, %c0_120, %c0_121] : memref<1x16x16x8xf32, #tpu.memory_space<vmem>>, vector<1x16x16x8xf32>
    tpu.vector_store %arg3[%c0_118, %c0_119, %c0_120, %c0_121], %76 {strides = array<i32>} : memref<1x16x16x8xf32, #tpu.memory_space<vmem>>, vector<1x16x16x8xf32>,
    return
  }
  func.func @transform_0(%arg0: i32) -> (i32, i32, i32, i32) {
    %c0_i32 = arith.constant 0 : i32
    %c0_i32_0 = arith.constant 0 : i32
    %c0_i32_1 = arith.constant 0 : i32
    %c0_i32_2 = arith.constant 0 : i32
    return %arg0, %c0_i32, %c0_i32_0, %c0_i32_1 : i32, i32, i32, i32
  }
  func.func @transform_1(%arg0: i32) -> (i32, i32, i32, i32) {
    %c0_i32 = arith.constant 0 : i32
    %c0_i32_0 = arith.constant 0 : i32
    %c0_i32_1 = arith.constant 0 : i32
    %c0_i32_2 = arith.constant 0 : i32
    %c0_i32_3 = arith.constant 0 : i32
    return %c0_i32, %c0_i32_0, %c0_i32_1, %c0_i32_2 : i32, i32, i32, i32
  }
  func.func @transform_2(%arg0: i32) -> (i32, i32, i32, i32) {
    %c0_i32 = arith.constant 0 : i32
    %c0_i32_0 = arith.constant 0 : i32
    %c0_i32_1 = arith.constant 0 : i32
    %c0_i32_2 = arith.constant 0 : i32
    return %arg0, %c0_i32, %c0_i32_0, %c0_i32_1 : i32, i32, i32, i32
  }
}

</mosaic_0001>

<llo_original>
// kernel: cdownsample.1
$region0: #{cdownsample.1}
  #allocation0 [shape = 'u32[]', space=smem, size = 0x4, offset = 0x4, fixed_abs, tag = 'smem constant byte address 0x4 - core index']
  #allocation1 [shape = 'u32[144,128]{1,0:T(1,128)}', space=vmem, size = 0x12000, scoped, tag = 'internal scratch']
  #allocation2 [shape = 'f32[3,18,16,16]{3,2,1,0:T(8,128)}', space=vmem, size = 0x6c000, scoped, tag = 'scratch operand']
  %s0 = inlined_call_operand.vmem [shape: f32[2,16,16,16], index: 0, kind: input, shape index: {}]
  %s1 = inlined_call_operand.vmem [shape: f32[3,3,16,8], index: 1, kind: input, shape index: {}]
  %s2 = inlined_call_operand.vmem [shape: f32[2,16,16,8], index: 2, kind: output, shape index: {}]
  %s3 = sld [smem:[#allocation0]]
  $region41: #{cdownsample.1} parent=0
    _
  %s5 = ssub.s32 1, %s3
  %s6 = scalar_select 0, %s5, %s3
  loop: start=0, step=1, limit=4
  $region2: #{cdownsample.1} parent=0 // loop_pre_header
    _
  $region3: #{cdownsample.1} parent=0 // loop_header
    %s8 = sphi 0, %s12
    %p9 = scmp.ge.s32.totalorder %s8, 4
    %s18 = sphi 0, %s20
    %s21 = sphi 0, %s18
    %s22 = sphi 0, %s21
    %s38 = sphi 0, %s22
    %s42 = sphi 0, %s42
    %s44 = sphi 0, %s42
    %s45 = sphi 0, %s44
    %s59 = sphi 0, %s45
    %s65 = sphi 0, %s67
    %s68 = sphi 0, %s65
    %s69 = sphi 0, %s68
    %s85 = sphi 0, %s69
  $region4: #{cdownsample.1} parent=0 // loop_header_branch
    %11 = sbr.rel (%p9) target = $region8
  $region5: #{cdownsample.1} parent=0 // loop_body
    %s13 = ssub.s32 %s8, 1
    %s14 = ssub.s32 %s8, 2
    %s15 = sadd.s32 %s8, 1
    %s16 = ssub.s32 %s8, %s15
    %p17 = scmp.eq.s32.totalorder %s16, 0
    %s19 = sadd.s32 %s18, 1
    %s20 = scalar_select %p17, %s18, %s19
    %p23 = pneg %p17
    %p24 = scmp.eq.s32.totalorder %s8, 1
    %p25 = por %p23, %p24
    %p26 = scmp.ne.s32.totalorder %s18, %s21
    %p27 = scmp.eq.s32.totalorder %s8, 0
    %p28 = por %p26, %p27
    %p29 = scmp.ne.s32.totalorder %s18, %s21
    %p30 = scmp.eq.s32.totalorder %s13, 1
    %p31 = por %p29, %p30
    %p32 = scmp.ne.s32.totalorder %s21, %s22
    %p33 = scmp.eq.s32.totalorder %s13, 0
    %p34 = por %p32, %p33
    %p35 = scmp.ne.s32.totalorder %s21, %s22
    %p36 = scmp.eq.s32.totalorder %s14, 1
    %p37 = por %p35, %p36
    %p39 = scmp.ne.s32.totalorder %s22, %s38
    %p40 = scmp.eq.s32.totalorder %s14, 0
    %p41 = por %p39, %p40
    %s43 = sadd.s32 %s42, 1
    %p46 = scmp.eq.s32.totalorder %s8, 1
    %p47 = scmp.ne.s32.totalorder %s42, %s44
    %p48 = scmp.eq.s32.totalorder %s8, 0
    %p49 = por %p47, %p48
    %p50 = scmp.ne.s32.totalorder %s42, %s44
    %p51 = scmp.eq.s32.totalorder %s13, 1
    %p52 = por %p50, %p51
    %p53 = scmp.ne.s32.totalorder %s44, %s45
    %p54 = scmp.eq.s32.totalorder %s13, 0
    %p55 = por %p53, %p54
    %p56 = scmp.ne.s32.totalorder %s44, %s45
    %p57 = scmp.eq.s32.totalorder %s14, 1
    %p58 = por %p56, %p57
    %p60 = scmp.ne.s32.totalorder %s45, %s59
    %p61 = scmp.eq.s32.totalorder %s14, 0
    %p62 = por %p60, %p61
    %s63 = ssub.s32 %s8, %s15
    %p64 = scmp.eq.s32.totalorder %s63, 0
    %s66 = sadd.s32 %s65, 1
    %s67 = scalar_select %p64, %s65, %s66
    %p70 = pneg %p64
    %p71 = scmp.eq.s32.totalorder %s8, 1
    %p72 = por %p70, %p71
    %p73 = scmp.ne.s32.totalorder %s65, %s68
    %p74 = scmp.eq.s32.totalorder %s8, 0
    %p75 = por %p73, %p74
    %p76 = scmp.ne.s32.totalorder %s65, %s68
    %p77 = scmp.eq.s32.totalorder %s13, 1
    %p78 = por %p76, %p77
    %p79 = scmp.ne.s32.totalorder %s68, %s69
    %p80 = scmp.eq.s32.totalorder %s13, 0
    %p81 = por %p79, %p80
    %p82 = scmp.ne.s32.totalorder %s68, %s69
    %p83 = scmp.eq.s32.totalorder %s14, 1
    %p84 = por %p82, %p83
    %p86 = scmp.ne.s32.totalorder %s69, %s85
    %p87 = scmp.eq.s32.totalorder %s14, 0
    %p88 = por %p86, %p87
    %p89 = scmp.le.s32.totalorder 1, %s8
    %p90 = scmp.lt.s32.totalorder %s8, 3
    %p91 = pnand %p89, %p90
    %p92 = pneg %p91
    // Predicated region
    $region9: #{cdownsample.1} parent=5 // pred_check
      _
    $region10: #{cdownsample.1} parent=5 // pred_check_branch
      %94 = sbr.rel (%p91) target = $region12
    $region11: #{cdownsample.1} parent=5 // pred_region
      %s95 = ssub.s32 %s8, 1
      // Predicated region
      $region13: #{cdownsample.1} parent=11 // pred_check
        %p96 = pneg %p55
      $region14: #{cdownsample.1} parent=11 // pred_check_branch
        %98 = sbr.rel (%p96) target = $region16
      $region15: #{cdownsample.1} parent=11 // pred_region
        _
      $region16: #{cdownsample.1} parent=11 // pred_fallthru
        _
    $region12: #{cdownsample.1} parent=5 // pred_fallthru
      _
    %p99 = scmp.lt.s32.totalorder %s8, 2
    // Predicated region
    $region17: #{cdownsample.1} parent=5 // pred_check
      %p100 = pneg %p99
    $region18: #{cdownsample.1} parent=5 // pred_check_branch
      %102 = sbr.rel (%p100) target = $region20
    $region19: #{cdownsample.1} parent=5 // pred_region
      // Predicated region
      $region21: #{cdownsample.1} parent=19 // pred_check
        %p103 = pneg %p28
      $region22: #{cdownsample.1} parent=19 // pred_check_branch
        %105 = sbr.rel (%p103) target = $region24
      $region23: #{cdownsample.1} parent=19 // pred_region
        %p106 = scmp.lt.s32.totalorder %s8, 1
        %s107 = scalar_select %p106, %s8, 1
        %s108 = smul.addr %s107, 32
        %s109 = smul.addr %s108, 8
        %s110 = scalar_lea.vmem %s0, %s109
      $region24: #{cdownsample.1} parent=19 // pred_fallthru
        _
    $region20: #{cdownsample.1} parent=5 // pred_fallthru
      _
    %p111 = scmp.le.s32.totalorder 1, %s8
    %p112 = scmp.lt.s32.totalorder %s8, 3
    %p113 = pnand %p111, %p112
    %p114 = pneg %p113
    // Predicated region
    $region25: #{cdownsample.1} parent=5 // pred_check
      _
    $region26: #{cdownsample.1} parent=5 // pred_check_branch
      %116 = sbr.rel (%p113) target = $region28
    $region27: #{cdownsample.1} parent=5 // pred_region
      %s117 = ssub.s32 %s8, 1
      %p118 = scmp.lt.s32.totalorder %s13, 1
      %s119 = scalar_select %p118, %s13, 1
      %s120 = smul.addr %s119, 32
      %s121 = smul.addr %s120, 8
      %s122 = scalar_lea.vmem %s0, %s121
      %p123 = pneg %p34
      %p124 = pneg %p31
      %p125 = pneg %p55
      %p126 = pneg %p52
      %p127 = pneg %p81
      %p128 = pneg %p78
      %p129 = scmp.lt.s32.totalorder %s13, 1
      %s130 = scalar_select %p129, %s13, 1
      %s131 = smul.addr %s130, 32
      %s132 = smul.addr %s131, 8
      %s133 = scalar_lea.vmem %s2, %s132
      %p134 = scmp.lt.s32.totalorder %s13, 1
      %s135 = scalar_select %p134, %s13, 1
      %s136 = smul.addr %s135, 32
      %s137 = smul.addr %s136, 8
      %s138 = scalar_lea.vmem %s0, %s137
      %p139 = scmp.lt.s32.totalorder %s13, 1
      %s140 = scalar_select %p139, %s13, 1
      %s141 = smul.addr %s140, 32
      %s142 = smul.addr %s141, 8
      %s143 = scalar_lea.vmem %s2, %s142
      %vm144 = vcmask 130048
      %145 = vst.msk [vmem:[#allocation2] sm:$0xff] %vm144, 0.0
      %146 = vst.msk [vmem:[#allocation2 + $0x8] sm:$0xff] %vm144, 0.0
      %147 = vst.msk [vmem:[#allocation2 + $0x120] sm:$0xff] %vm144, 0.0
      %148 = vst.msk [vmem:[#allocation2 + $0x128] sm:$0xff] %vm144, 0.0
      %149 = vst.msk [vmem:[#allocation2 + $0x240] sm:$0xff] %vm144, 0.0
      %150 = vst.msk [vmem:[#allocation2 + $0x248] sm:$0xff] %vm144, 0.0
      %s151 = scalar_lea.vmem [#allocation2], 272
      %152 = vst.msk [vmem:[%s151] sm:$0xff] %vm144, 0.0
      %153 = vst.msk [vmem:[%s151 + $0x8] sm:$0xff] %vm144, 0.0
      %154 = vst.msk [vmem:[%s151 + $0x120] sm:$0xff] %vm144, 0.0
      %155 = vst.msk [vmem:[%s151 + $0x128] sm:$0xff] %vm144, 0.0
      %156 = vst.msk [vmem:[%s151 + $0x240] sm:$0xff] %vm144, 0.0
      %157 = vst.msk [vmem:[%s151 + $0x248] sm:$0xff] %vm144, 0.0
      %vm158 = vcmask 122880
      %159 = vst.msk [vmem:[#allocation2] sm:$0x1] %vm158, 0.0
      %160 = vst.msk [vmem:[#allocation2 + $0x10] sm:$0x1] %vm158, 0.0
      %161 = vst.msk [vmem:[#allocation2 + $0x20] sm:$0x1] %vm158, 0.0
      %162 = vst.msk [vmem:[#allocation2 + $0x30] sm:$0x1] %vm158, 0.0
      %163 = vst.msk [vmem:[#allocation2 + $0x40] sm:$0x1] %vm158, 0.0
      %164 = vst.msk [vmem:[#allocation2 + $0x50] sm:$0x1] %vm158, 0.0
      %165 = vst.msk [vmem:[#allocation2 + $0x60] sm:$0x1] %vm158, 0.0
      %166 = vst.msk [vmem:[#allocation2 + $0x70] sm:$0x1] %vm158, 0.0
      %167 = vst.msk [vmem:[#allocation2 + $0x80] sm:$0x1] %vm158, 0.0
      %168 = vst.msk [vmem:[#allocation2 + $0x90] sm:$0x1] %vm158, 0.0
      %169 = vst.msk [vmem:[#allocation2 + $0xa0] sm:$0x1] %vm158, 0.0
      %170 = vst.msk [vmem:[#allocation2 + $0xb0] sm:$0x1] %vm158, 0.0
      %171 = vst.msk [vmem:[#allocation2 + $0xc0] sm:$0x1] %vm158, 0.0
      %172 = vst.msk [vmem:[#allocation2 + $0xd0] sm:$0x1] %vm158, 0.0
      %173 = vst.msk [vmem:[#allocation2 + $0xe0] sm:$0x1] %vm158, 0.0
      %174 = vst.msk [vmem:[#allocation2 + $0xf0] sm:$0x1] %vm158, 0.0
      %175 = vst.msk [vmem:[#allocation2 + $0x100] sm:$0x1] %vm158, 0.0
      %176 = vst.msk [vmem:[#allocation2 + $0x110] sm:$0x1] %vm158, 0.0
      %s177 = scalar_lea.vmem [#allocation2], 576
      %178 = vst.msk [vmem:[%s177 + $0xf] sm:$0x1] %vm158, 0.0
      %179 = vst.msk [vmem:[%s177 + $0x1f] sm:$0x1] %vm158, 0.0
      %180 = vst.msk [vmem:[%s177 + $0x2f] sm:$0x1] %vm158, 0.0
      %181 = vst.msk [vmem:[%s177 + $0x3f] sm:$0x1] %vm158, 0.0
      %182 = vst.msk [vmem:[%s177 + $0x4f] sm:$0x1] %vm158, 0.0
      %183 = vst.msk [vmem:[%s177 + $0x5f] sm:$0x1] %vm158, 0.0
      %184 = vst.msk [vmem:[%s177 + $0x6f] sm:$0x1] %vm158, 0.0
      %185 = vst.msk [vmem:[%s177 + $0x7f] sm:$0x1] %vm158, 0.0
      %186 = vst.msk [vmem:[%s177 + $0x8f] sm:$0x1] %vm158, 0.0
      %187 = vst.msk [vmem:[%s177 + $0x9f] sm:$0x1] %vm158, 0.0
      %188 = vst.msk [vmem:[%s177 + $0xaf] sm:$0x1] %vm158, 0.0
      %189 = vst.msk [vmem:[%s177 + $0xbf] sm:$0x1] %vm158, 0.0
      %190 = vst.msk [vmem:[%s177 + $0xcf] sm:$0x1] %vm158, 0.0
      %191 = vst.msk [vmem:[%s177 + $0xdf] sm:$0x1] %vm158, 0.0
      %192 = vst.msk [vmem:[%s177 + $0xef] sm:$0x1] %vm158, 0.0
      %193 = vst.msk [vmem:[%s177 + $0xff] sm:$0x1] %vm158, 0.0
      %194 = vst.msk [vmem:[%s177 + $0x10f] sm:$0x1] %vm158, 0.0
      %195 = vst.msk [vmem:[%s177 + $0x11f] sm:$0x1] %vm158, 0.0
      %v196 = vld [vmem:[%s138] sm:$0xff]
      %v197 = vld [vmem:[%s138 + $0x8] sm:$0x7f]
      %v198 = vld [vmem:[%s138 + $0x10] sm:$0xff]
      %v199 = vld [vmem:[%s138 + $0x18] sm:$0x7f]
      %v200 = vld [vmem:[%s138 + $0x20] sm:$0xff]
      %v201 = vld [vmem:[%s138 + $0x28] sm:$0x7f]
      %v202 = vld [vmem:[%s138 + $0x30] sm:$0xff]
      %v203 = vld [vmem:[%s138 + $0x38] sm:$0x7f]
      %v204 = vld [vmem:[%s138 + $0x40] sm:$0xff]
      %v205 = vld [vmem:[%s138 + $0x48] sm:$0x7f]
      %v206 = vld [vmem:[%s138 + $0x50] sm:$0xff]
      %v207 = vld [vmem:[%s138 + $0x58] sm:$0x7f]
      %v208 = vld [vmem:[%s138 + $0x60] sm:$0xff]
      %v209 = vld [vmem:[%s138 + $0x68] sm:$0x7f]
      %v210 = vld [vmem:[%s138 + $0x70] sm:$0xff]
      %v211 = vld [vmem:[%s138 + $0x78] sm:$0x7f]
      %v212 = vld [vmem:[%s138 + $0x80] sm:$0xff]
      %v213 = vld [vmem:[%s138 + $0x88] sm:$0x7f]
      %v214 = vld [vmem:[%s138 + $0x90] sm:$0xff]
      %v215 = vld [vmem:[%s138 + $0x98] sm:$0x7f]
      %v216 = vld [vmem:[%s138 + $0xa0] sm:$0xff]
      %v217 = vld [vmem:[%s138 + $0xa8] sm:$0x7f]
      %v218 = vld [vmem:[%s138 + $0xb0] sm:$0xff]
      %v219 = vld [vmem:[%s138 + $0xb8] sm:$0x7f]
      %v220 = vld [vmem:[%s138 + $0xc0] sm:$0xff]
      %v221 = vld [vmem:[%s138 + $0xc8] sm:$0x7f]
      %v222 = vld [vmem:[%s138 + $0xd0] sm:$0xff]
      %v223 = vld [vmem:[%s138 + $0xd8] sm:$0x7f]
      %v224 = vld [vmem:[%s138 + $0xe0] sm:$0xff]
      %v225 = vld [vmem:[%s138 + $0xe8] sm:$0x7f]
      %v226 = vld [vmem:[%s138 + $0xf0] sm:$0xff]
      %v227 = vld [vmem:[%s138 + $0xf8] sm:$0x7f]
      %s228 = scalar_lea.vmem [#allocation2], 16
      %229 = vst.msk [vmem:[%s228 + $0x1] sm:$0xff] %vm144, %v196
      %vm230 = vcmask 129024
      %231 = vst.msk [vmem:[%s228 + $0x9] sm:$0x7f] %vm230, %v197
      %232 = vst.msk [vmem:[%s228 + $0x11] sm:$0xff] %vm144, %v198
      %233 = vst.msk [vmem:[%s228 + $0x19] sm:$0x7f] %vm230, %v199
      %234 = vst.msk [vmem:[%s228 + $0x21] sm:$0xff] %vm144, %v200
      %235 = vst.msk [vmem:[%s228 + $0x29] sm:$0x7f] %vm230, %v201
      %236 = vst.msk [vmem:[%s228 + $0x31] sm:$0xff] %vm144, %v202
      %237 = vst.msk [vmem:[%s228 + $0x39] sm:$0x7f] %vm230, %v203
      %238 = vst.msk [vmem:[%s228 + $0x41] sm:$0xff] %vm144, %v204
      %239 = vst.msk [vmem:[%s228 + $0x49] sm:$0x7f] %vm230, %v205
      %240 = vst.msk [vmem:[%s228 + $0x51] sm:$0xff] %vm144, %v206
      %241 = vst.msk [vmem:[%s228 + $0x59] sm:$0x7f] %vm230, %v207
      %242 = vst.msk [vmem:[%s228 + $0x61] sm:$0xff] %vm144, %v208
      %243 = vst.msk [vmem:[%s228 + $0x69] sm:$0x7f] %vm230, %v209
      %244 = vst.msk [vmem:[%s228 + $0x71] sm:$0xff] %vm144, %v210
      %245 = vst.msk [vmem:[%s228 + $0x79] sm:$0x7f] %vm230, %v211
      %246 = vst.msk [vmem:[%s228 + $0x81] sm:$0xff] %vm144, %v212
      %247 = vst.msk [vmem:[%s228 + $0x89] sm:$0x7f] %vm230, %v213
      %248 = vst.msk [vmem:[%s228 + $0x91] sm:$0xff] %vm144, %v214
      %249 = vst.msk [vmem:[%s228 + $0x99] sm:$0x7f] %vm230, %v215
      %250 = vst.msk [vmem:[%s228 + $0xa1] sm:$0xff] %vm144, %v216
      %251 = vst.msk [vmem:[%s228 + $0xa9] sm:$0x7f] %vm230, %v217
      %252 = vst.msk [vmem:[%s228 + $0xb1] sm:$0xff] %vm144, %v218
      %253 = vst.msk [vmem:[%s228 + $0xb9] sm:$0x7f] %vm230, %v219
      %254 = vst.msk [vmem:[%s228 + $0xc1] sm:$0xff] %vm144, %v220
      %255 = vst.msk [vmem:[%s228 + $0xc9] sm:$0x7f] %vm230, %v221
      %256 = vst.msk [vmem:[%s228 + $0xd1] sm:$0xff] %vm144, %v222
      %257 = vst.msk [vmem:[%s228 + $0xd9] sm:$0x7f] %vm230, %v223
      %258 = vst.msk [vmem:[%s228 + $0xe1] sm:$0xff] %vm144, %v224
      %259 = vst.msk [vmem:[%s228 + $0xe9] sm:$0x7f] %vm230, %v225
      %260 = vst.msk [vmem:[%s228 + $0xf1] sm:$0xff] %vm144, %v226
      %261 = vst.msk [vmem:[%s228 + $0xf9] sm:$0x7f] %vm230, %v227
      %v262 = vld [vmem:[%s138] sm:$0xff]
      %v263 = vld [vmem:[%s138 + $0x8] sm:$0xff]
      %v264 = vld [vmem:[%s138 + $0x10] sm:$0xff]
      %v265 = vld [vmem:[%s138 + $0x18] sm:$0xff]
      %v266 = vld [vmem:[%s138 + $0x20] sm:$0xff]
      %v267 = vld [vmem:[%s138 + $0x28] sm:$0xff]
      %v268 = vld [vmem:[%s138 + $0x30] sm:$0xff]
      %v269 = vld [vmem:[%s138 + $0x38] sm:$0xff]
      %v270 = vld [vmem:[%s138 + $0x40] sm:$0xff]
      %v271 = vld [vmem:[%s138 + $0x48] sm:$0xff]
      %v272 = vld [vmem:[%s138 + $0x50] sm:$0xff]
      %v273 = vld [vmem:[%s138 + $0x58] sm:$0xff]
      %v274 = vld [vmem:[%s138 + $0x60] sm:$0xff]
      %v275 = vld [vmem:[%s138 + $0x68] sm:$0xff]
      %v276 = vld [vmem:[%s138 + $0x70] sm:$0xff]
      %v277 = vld [vmem:[%s138 + $0x78] sm:$0xff]
      %v278 = vld [vmem:[%s138 + $0x80] sm:$0xff]
      %v279 = vld [vmem:[%s138 + $0x88] sm:$0xff]
      %v280 = vld [vmem:[%s138 + $0x90] sm:$0xff]
      %v281 = vld [vmem:[%s138 + $0x98] sm:$0xff]
      %v282 = vld [vmem:[%s138 + $0xa0] sm:$0xff]
      %v283 = vld [vmem:[%s138 + $0xa8] sm:$0xff]
      %v284 = vld [vmem:[%s138 + $0xb0] sm:$0xff]
      %v285 = vld [vmem:[%s138 + $0xb8] sm:$0xff]
      %v286 = vld [vmem:[%s138 + $0xc0] sm:$0xff]
      %v287 = vld [vmem:[%s138 + $0xc8] sm:$0xff]
      %v288 = vld [vmem:[%s138 + $0xd0] sm:$0xff]
      %v289 = vld [vmem:[%s138 + $0xd8] sm:$0xff]
      %v290 = vld [vmem:[%s138 + $0xe0] sm:$0xff]
      %v291 = vld [vmem:[%s138 + $0xe8] sm:$0xff]
      %v292 = vld [vmem:[%s138 + $0xf0] sm:$0xff]
      %v293 = vld [vmem:[%s138 + $0xf8] sm:$0xff]
      %s294 = scalar_lea.vmem [#allocation2], 304
      %295 = vst.msk [vmem:[%s294] sm:$0xff] %vm144, %v262
      %296 = vst.msk [vmem:[%s294 + $0x8] sm:$0xff] %vm144, %v263
      %297 = vst.msk [vmem:[%s294 + $0x10] sm:$0xff] %vm144, %v264
      %298 = vst.msk [vmem:[%s294 + $0x18] sm:$0xff] %vm144, %v265
      %299 = vst.msk [vmem:[%s294 + $0x20] sm:$0xff] %vm144, %v266
      %300 = vst.msk [vmem:[%s294 + $0x28] sm:$0xff] %vm144, %v267
      %301 = vst.msk [vmem:[%s294 + $0x30] sm:$0xff] %vm144, %v268
      %302 = vst.msk [vmem:[%s294 + $0x38] sm:$0xff] %vm144, %v269
      %303 = vst.msk [vmem:[%s294 + $0x40] sm:$0xff] %vm144, %v270
      %304 = vst.msk [vmem:[%s294 + $0x48] sm:$0xff] %vm144, %v271
      %305 = vst.msk [vmem:[%s294 + $0x50] sm:$0xff] %vm144, %v272
      %306 = vst.msk [vmem:[%s294 + $0x58] sm:$0xff] %vm144, %v273
      %307 = vst.msk [vmem:[%s294 + $0x60] sm:$0xff] %vm144, %v274
      %308 = vst.msk [vmem:[%s294 + $0x68] sm:$0xff] %vm144, %v275
      %309 = vst.msk [vmem:[%s294 + $0x70] sm:$0xff] %vm144, %v276
      %310 = vst.msk [vmem:[%s294 + $0x78] sm:$0xff] %vm144, %v277
      %311 = vst.msk [vmem:[%s294 + $0x80] sm:$0xff] %vm144, %v278
      %312 = vst.msk [vmem:[%s294 + $0x88] sm:$0xff] %vm144, %v279
      %313 = vst.msk [vmem:[%s294 + $0x90] sm:$0xff] %vm144, %v280
      %314 = vst.msk [vmem:[%s294 + $0x98] sm:$0xff] %vm144, %v281
      %315 = vst.msk [vmem:[%s294 + $0xa0] sm:$0xff] %vm144, %v282
      %316 = vst.msk [vmem:[%s294 + $0xa8] sm:$0xff] %vm144, %v283
      %317 = vst.msk [vmem:[%s294 + $0xb0] sm:$0xff] %vm144, %v284
      %318 = vst.msk [vmem:[%s294 + $0xb8] sm:$0xff] %vm144, %v285
      %319 = vst.msk [vmem:[%s294 + $0xc0] sm:$0xff] %vm144, %v286
      %320 = vst.msk [vmem:[%s294 + $0xc8] sm:$0xff] %vm144, %v287
      %321 = vst.msk [vmem:[%s294 + $0xd0] sm:$0xff] %vm144, %v288
      %322 = vst.msk [vmem:[%s294 + $0xd8] sm:$0xff] %vm144, %v289
      %323 = vst.msk [vmem:[%s294 + $0xe0] sm:$0xff] %vm144, %v290
      %324 = vst.msk [vmem:[%s294 + $0xe8] sm:$0xff] %vm144, %v291
      %325 = vst.msk [vmem:[%s294 + $0xf0] sm:$0xff] %vm144, %v292
      %326 = vst.msk [vmem:[%s294 + $0xf8] sm:$0xff] %vm144, %v293
      %v327 = vld [vmem:[%s138 + $0x1] sm:$0xff]
      %v328 = vld [vmem:[%s138 + $0x9] sm:$0x7f]
      %v329 = vld [vmem:[%s138 + $0x11] sm:$0xff]
      %v330 = vld [vmem:[%s138 + $0x19] sm:$0x7f]
      %v331 = vld [vmem:[%s138 + $0x21] sm:$0xff]
      %v332 = vld [vmem:[%s138 + $0x29] sm:$0x7f]
      %v333 = vld [vmem:[%s138 + $0x31] sm:$0xff]
      %v334 = vld [vmem:[%s138 + $0x39] sm:$0x7f]
      %v335 = vld [vmem:[%s138 + $0x41] sm:$0xff]
      %v336 = vld [vmem:[%s138 + $0x49] sm:$0x7f]
      %v337 = vld [vmem:[%s138 + $0x51] sm:$0xff]
      %v338 = vld [vmem:[%s138 + $0x59] sm:$0x7f]
      %v339 = vld [vmem:[%s138 + $0x61] sm:$0xff]
      %v340 = vld [vmem:[%s138 + $0x69] sm:$0x7f]
      %v341 = vld [vmem:[%s138 + $0x71] sm:$0xff]
      %v342 = vld [vmem:[%s138 + $0x79] sm:$0x7f]
      %v343 = vld [vmem:[%s138 + $0x81] sm:$0xff]
      %v344 = vld [vmem:[%s138 + $0x89] sm:$0x7f]
      %v345 = vld [vmem:[%s138 + $0x91] sm:$0xff]
      %v346 = vld [vmem:[%s138 + $0x99] sm:$0x7f]
      %v347 = vld [vmem:[%s138 + $0xa1] sm:$0xff]
      %v348 = vld [vmem:[%s138 + $0xa9] sm:$0x7f]
      %v349 = vld [vmem:[%s138 + $0xb1] sm:$0xff]
      %v350 = vld [vmem:[%s138 + $0xb9] sm:$0x7f]
      %v351 = vld [vmem:[%s138 + $0xc1] sm:$0xff]
      %v352 = vld [vmem:[%s138 + $0xc9] sm:$0x7f]
      %v353 = vld [vmem:[%s138 + $0xd1] sm:$0xff]
      %v354 = vld [vmem:[%s138 + $0xd9] sm:$0x7f]
      %v355 = vld [vmem:[%s138 + $0xe1] sm:$0xff]
      %v356 = vld [vmem:[%s138 + $0xe9] sm:$0x7f]
      %v357 = vld [vmem:[%s138 + $0xf1] sm:$0xff]
      %v358 = vld [vmem:[%s138 + $0xf9] sm:$0x7f]
      %s359 = scalar_lea.vmem [#allocation2], 592
      %360 = vst.msk [vmem:[%s359] sm:$0xff] %vm144, %v327
      %361 = vst.msk [vmem:[%s359 + $0x8] sm:$0x7f] %vm230, %v328
      %362 = vst.msk [vmem:[%s359 + $0x10] sm:$0xff] %vm144, %v329
      %363 = vst.msk [vmem:[%s359 + $0x18] sm:$0x7f] %vm230, %v330
      %364 = vst.msk [vmem:[%s359 + $0x20] sm:$0xff] %vm144, %v331
      %365 = vst.msk [vmem:[%s359 + $0x28] sm:$0x7f] %vm230, %v332
      %366 = vst.msk [vmem:[%s359 + $0x30] sm:$0xff] %vm144, %v333
      %367 = vst.msk [vmem:[%s359 + $0x38] sm:$0x7f] %vm230, %v334
      %368 = vst.msk [vmem:[%s359 + $0x40] sm:$0xff] %vm144, %v335
      %369 = vst.msk [vmem:[%s359 + $0x48] sm:$0x7f] %vm230, %v336
      %370 = vst.msk [vmem:[%s359 + $0x50] sm:$0xff] %vm144, %v337
      %371 = vst.msk [vmem:[%s359 + $0x58] sm:$0x7f] %vm230, %v338
      %372 = vst.msk [vmem:[%s359 + $0x60] sm:$0xff] %vm144, %v339
      %373 = vst.msk [vmem:[%s359 + $0x68] sm:$0x7f] %vm230, %v340
      %374 = vst.msk [vmem:[%s359 + $0x70] sm:$0xff] %vm144, %v341
      %375 = vst.msk [vmem:[%s359 + $0x78] sm:$0x7f] %vm230, %v342
      %376 = vst.msk [vmem:[%s359 + $0x80] sm:$0xff] %vm144, %v343
      %377 = vst.msk [vmem:[%s359 + $0x88] sm:$0x7f] %vm230, %v344
      %378 = vst.msk [vmem:[%s359 + $0x90] sm:$0xff] %vm144, %v345
      %379 = vst.msk [vmem:[%s359 + $0x98] sm:$0x7f] %vm230, %v346
      %380 = vst.msk [vmem:[%s359 + $0xa0] sm:$0xff] %vm144, %v347
      %381 = vst.msk [vmem:[%s359 + $0xa8] sm:$0x7f] %vm230, %v348
      %382 = vst.msk [vmem:[%s359 + $0xb0] sm:$0xff] %vm144, %v349
      %383 = vst.msk [vmem:[%s359 + $0xb8] sm:$0x7f] %vm230, %v350
      %384 = vst.msk [vmem:[%s359 + $0xc0] sm:$0xff] %vm144, %v351
      %385 = vst.msk [vmem:[%s359 + $0xc8] sm:$0x7f] %vm230, %v352
      %386 = vst.msk [vmem:[%s359 + $0xd0] sm:$0xff] %vm144, %v353
      %387 = vst.msk [vmem:[%s359 + $0xd8] sm:$0x7f] %vm230, %v354
      %388 = vst.msk [vmem:[%s359 + $0xe0] sm:$0xff] %vm144, %v355
      %389 = vst.msk [vmem:[%s359 + $0xe8] sm:$0x7f] %vm230, %v356
      %390 = vst.msk [vmem:[%s359 + $0xf0] sm:$0xff] %vm144, %v357
      %391 = vst.msk [vmem:[%s359 + $0xf8] sm:$0x7f] %vm230, %v358
      %v392 = vld [vmem:[#allocation2] sm:$0xff]
      %v393 = vld [vmem:[#allocation2 + $0x8] sm:$0xff]
      %v394 = vld [vmem:[#allocation2 + $0x10] sm:$0xff]
      %v395 = vld [vmem:[#allocation2 + $0x18] sm:$0xff]
      %v396 = vld [vmem:[#allocation2 + $0x20] sm:$0xff]
      %v397 = vld [vmem:[#allocation2 + $0x28] sm:$0xff]
      %v398 = vld [vmem:[#allocation2 + $0x30] sm:$0xff]
      %v399 = vld [vmem:[#allocation2 + $0x38] sm:$0xff]
      %v400 = vld [vmem:[#allocation2 + $0x40] sm:$0xff]
      %v401 = vld [vmem:[#allocation2 + $0x48] sm:$0xff]
      %v402 = vld [vmem:[#allocation2 + $0x50] sm:$0xff]
      %v403 = vld [vmem:[#allocation2 + $0x58] sm:$0xff]
      %v404 = vld [vmem:[#allocation2 + $0x60] sm:$0xff]
      %v405 = vld [vmem:[#allocation2 + $0x68] sm:$0xff]
      %v406 = vld [vmem:[#allocation2 + $0x70] sm:$0xff]
      %v407 = vld [vmem:[#allocation2 + $0x78] sm:$0xff]
      %v408 = vld [vmem:[#allocation2 + $0x80] sm:$0xff]
      %v409 = vld [vmem:[#allocation2 + $0x88] sm:$0xff]
      %v410 = vld [vmem:[#allocation2 + $0x90] sm:$0xff]
      %v411 = vld [vmem:[#allocation2 + $0x98] sm:$0xff]
      %v412 = vld [vmem:[#allocation2 + $0xa0] sm:$0xff]
      %v413 = vld [vmem:[#allocation2 + $0xa8] sm:$0xff]
      %v414 = vld [vmem:[#allocation2 + $0xb0] sm:$0xff]
      %v415 = vld [vmem:[#allocation2 + $0xb8] sm:$0xff]
      %v416 = vld [vmem:[#allocation2 + $0xc0] sm:$0xff]
      %v417 = vld [vmem:[#allocation2 + $0xc8] sm:$0xff]
      %v418 = vld [vmem:[#allocation2 + $0xd0] sm:$0xff]
      %v419 = vld [vmem:[#allocation2 + $0xd8] sm:$0xff]
      %v420 = vld [vmem:[#allocation2 + $0xe0] sm:$0xff]
      %v421 = vld [vmem:[#allocation2 + $0xe8] sm:$0xff]
      %v422 = vld [vmem:[#allocation2 + $0xf0] sm:$0xff]
      %v423 = vld [vmem:[#allocation2 + $0xf8] sm:$0xff]
      %v424 = vld [vmem:[%s1] sm:$0xff]
      %v425 = vld [vmem:[%s1 + $0x8] sm:$0xff]
      %s426 = scalar_lea.vmem [#allocation2], 288
      %v427 = vld [vmem:[%s426] sm:$0xff]
      %v428 = vld [vmem:[%s426 + $0x8] sm:$0xff]
      %v429 = vld [vmem:[%s426 + $0x10] sm:$0xff]
      %v430 = vld [vmem:[%s426 + $0x18] sm:$0xff]
      %v431 = vld [vmem:[%s426 + $0x20] sm:$0xff]
      %v432 = vld [vmem:[%s426 + $0x28] sm:$0xff]
      %v433 = vld [vmem:[%s426 + $0x30] sm:$0xff]
      %v434 = vld [vmem:[%s426 + $0x38] sm:$0xff]
      %v435 = vld [vmem:[%s426 + $0x40] sm:$0xff]
      %v436 = vld [vmem:[%s426 + $0x48] sm:$0xff]
      %v437 = vld [vmem:[%s426 + $0x50] sm:$0xff]
      %v438 = vld [vmem:[%s426 + $0x58] sm:$0xff]
      %v439 = vld [vmem:[%s426 + $0x60] sm:$0xff]
      %v440 = vld [vmem:[%s426 + $0x68] sm:$0xff]
      %v441 = vld [vmem:[%s426 + $0x70] sm:$0xff]
      %v442 = vld [vmem:[%s426 + $0x78] sm:$0xff]
      %v443 = vld [vmem:[%s426 + $0x80] sm:$0xff]
      %v444 = vld [vmem:[%s426 + $0x88] sm:$0xff]
      %v445 = vld [vmem:[%s426 + $0x90] sm:$0xff]
      %v446 = vld [vmem:[%s426 + $0x98] sm:$0xff]
      %v447 = vld [vmem:[%s426 + $0xa0] sm:$0xff]
      %v448 = vld [vmem:[%s426 + $0xa8] sm:$0xff]
      %v449 = vld [vmem:[%s426 + $0xb0] sm:$0xff]
      %v450 = vld [vmem:[%s426 + $0xb8] sm:$0xff]
      %v451 = vld [vmem:[%s426 + $0xc0] sm:$0xff]
      %v452 = vld [vmem:[%s426 + $0xc8] sm:$0xff]
      %v453 = vld [vmem:[%s426 + $0xd0] sm:$0xff]
      %v454 = vld [vmem:[%s426 + $0xd8] sm:$0xff]
      %v455 = vld [vmem:[%s426 + $0xe0] sm:$0xff]
      %v456 = vld [vmem:[%s426 + $0xe8] sm:$0xff]
      %v457 = vld [vmem:[%s426 + $0xf0] sm:$0xff]
      %v458 = vld [vmem:[%s426 + $0xf8] sm:$0xff]
      %s459 = scalar_lea.vmem %s1, 16
      %v460 = vld [vmem:[%s459] sm:$0xff]
      %v461 = vld [vmem:[%s459 + $0x8] sm:$0xff]
      %v463 = vsel %vm144, %v427, 0
      %v466 = vsel %vm144, %v428, 0
      %v469 = vsel %vm144, %v429, 0
      %v472 = vsel %vm144, %v430, 0
      %v475 = vsel %vm144, %v431, 0
      %v478 = vsel %vm144, %v432, 0
      %v481 = vsel %vm144, %v433, 0
      %v484 = vsel %vm144, %v434, 0
      %v487 = vsel %vm144, %v435, 0
      %v490 = vsel %vm144, %v436, 0
      %v493 = vsel %vm144, %v437, 0
      %v496 = vsel %vm144, %v438, 0
      %v499 = vsel %vm144, %v439, 0
      %v502 = vsel %vm144, %v440, 0
      %v505 = vsel %vm144, %v441, 0
      %v508 = vsel %vm144, %v442, 0
      %v511 = vsel %vm144, %v443, 0
      %v514 = vsel %vm144, %v444, 0
      %v517 = vsel %vm144, %v445, 0
      %v520 = vsel %vm144, %v446, 0
      %v523 = vsel %vm144, %v447, 0
      %v526 = vsel %vm144, %v448, 0
      %v529 = vsel %vm144, %v449, 0
      %v532 = vsel %vm144, %v450, 0
      %v535 = vsel %vm144, %v451, 0
      %v538 = vsel %vm144, %v452, 0
      %v541 = vsel %vm144, %v453, 0
      %v544 = vsel %vm144, %v454, 0
      %v547 = vsel %vm144, %v455, 0
      %v550 = vsel %vm144, %v456, 0
      %v553 = vsel %vm144, %v457, 0
      %v556 = vsel %vm144, %v458, 0
      %558 = vmatprep.subr.mxu0 0.0
      %559 = vmatpush1.msra.mxu0 %v460
      %560 = vmatprep.subr.mxu0 0.0
      %561 = vmatpush1.msra.mxu0 %v461
      %562 = vmatprep.subr.mxu0 0.0
      %563 = vmatpush1.msra.mxu0 0.0
      %564 = vmatprep.subr.mxu0 0.0
      %565 = vmatpush1.msra.mxu0 0.0
      %566 = vmatprep.subr.mxu0 0.0
      %567 = vmatpush1.msra.mxu0 0.0
      %568 = vmatprep.subr.mxu0 0.0
      %569 = vmatpush1.msra.mxu0 0.0
      %570 = vmatprep.subr.mxu0 0.0
      %571 = vmatpush1.msra.mxu0 0.0
      %572 = vmatprep.subr.mxu0 0.0
      %573 = vmatpush1.msra.mxu0 0.0
      %574 = vmatprep.subr.mxu0 0.0
      %575 = vmatpush1.msra.mxu0 0.0
      %576 = vmatprep.subr.mxu0 0.0
      %577 = vmatpush1.msra.mxu0 0.0
      %578 = vmatprep.subr.mxu0 0.0
      %579 = vmatpush1.msra.mxu0 0.0
      %580 = vmatprep.subr.mxu0 0.0
      %581 = vmatpush1.msra.mxu0 0.0
      %582 = vmatprep.subr.mxu0 0.0
      %583 = vmatpush1.msra.mxu0 0.0
      %584 = vmatprep.subr.mxu0 0.0
      %585 = vmatpush1.msra.mxu0 0.0
      %586 = vmatprep.subr.mxu0 0.0
      %587 = vmatpush1.msra.mxu0 0.0
      %588 = vmatprep.subr.mxu0 0.0
      %589 = vmatpush1.msra.mxu0 0.0
      %590 = vmatprep.subr.mxu0 0.0
      %591 = vmatpush1.msra.mxu0 0.0
      %592 = vmatprep.subr.mxu0 0.0
      %593 = vmatpush1.msra.mxu0 0.0
      %594 = vmatprep.subr.mxu0 0.0
      %595 = vmatpush1.msra.mxu0 0.0
      %596 = vmatprep.subr.mxu0 0.0
      %597 = vmatpush1.msra.mxu0 0.0
      %598 = vmatprep.subr.mxu0 0.0
      %599 = vmatpush1.msra.mxu0 0.0
      %600 = vmatprep.subr.mxu0 0.0
      %601 = vmatpush1.msra.mxu0 0.0
      %602 = vmatprep.subr.mxu0 0.0
      %603 = vmatpush1.msra.mxu0 0.0
      %604 = vmatprep.subr.mxu0 0.0
      %605 = vmatpush1.msra.mxu0 0.0
      %606 = vmatprep.subr.mxu0 0.0
      %607 = vmatpush1.msra.mxu0 0.0
      %608 = vmatprep.subr.mxu0 0.0
      %609 = vmatpush1.msra.mxu0 0.0
      %610 = vmatprep.subr.mxu0 0.0
      %611 = vmatpush1.msra.mxu0 0.0
      %612 = vmatprep.subr.mxu0 0.0
      %613 = vmatpush1.msra.mxu0 0.0
      %614 = vmatprep.subr.mxu0 0.0
      %615 = vmatpush1.msra.mxu0 0.0
      %616 = vmatprep.subr.mxu0 0.0
      %617 = vmatpush1.msra.mxu0 0.0
      %618 = vmatprep.subr.mxu0 0.0
      %619 = vmatpush1.msra.mxu0 0.0
      %620 = vmatprep.subr.mxu0 0.0
      %621 = vmatpush1.msra.mxu0 0.0
      %622 = vmatprep.mubr.f32.mxu0 0.0
      %623 = vmatmul.mubr.f32.gmra.mrb[0].mxu0 %v463
      %v624 = vpop.f32.mrb[0].mxu0
      %v625 = vadd.f32 0.0, %v624
      %v626 = vpop.f32.mrb[0].mxu0
      %627 = vmatprep.mubr.f32.mxu0 0.0
      %628 = vmatmul.mubr.f32.gmra.mrb[0].mxu0 %v466
      %v629 = vpop.f32.mrb[0].mxu0
      %v630 = vadd.f32 0.0, %v629
      %v631 = vpop.f32.mrb[0].mxu0
      %632 = vmatprep.mubr.f32.mxu0 0.0
      %633 = vmatmul.mubr.f32.gmra.mrb[0].mxu0 %v469
      %v634 = vpop.f32.mrb[0].mxu0
      %v635 = vadd.f32 0.0, %v634
      %v636 = vpop.f32.mrb[0].mxu0
      %637 = vmatprep.mubr.f32.mxu0 0.0
      %638 = vmatmul.mubr.f32.gmra.mrb[0].mxu0 %v472
      %v639 = vpop.f32.mrb[0].mxu0
      %v640 = vadd.f32 0.0, %v639
      %v641 = vpop.f32.mrb[0].mxu0
      %642 = vmatprep.mubr.f32.mxu0 0.0
      %643 = vmatmul.mubr.f32.gmra.mrb[0].mxu0 %v475
      %v644 = vpop.f32.mrb[0].mxu0
      %v645 = vadd.f32 0.0, %v644
      %v646 = vpop.f32.mrb[0].mxu0
      %647 = vmatprep.mubr.f32.mxu0 0.0
      %648 = vmatmul.mubr.f32.gmra.mrb[0].mxu0 %v478
      %v649 = vpop.f32.mrb[0].mxu0
      %v650 = vadd.f32 0.0, %v649
      %v651 = vpop.f32.mrb[0].mxu0
      %652 = vmatprep.mubr.f32.mxu0 0.0
      %653 = vmatmul.mubr.f32.gmra.mrb[0].mxu0 %v481
      %v654 = vpop.f32.mrb[0].mxu0
      %v655 = vadd.f32 0.0, %v654
      %v656 = vpop.f32.mrb[0].mxu0
      %657 = vmatprep.mubr.f32.mxu0 0.0
      %658 = vmatmul.mubr.f32.gmra.mrb[0].mxu0 %v484
      %v659 = vpop.f32.mrb[0].mxu0
      %v660 = vadd.f32 0.0, %v659
      %v661 = vpop.f32.mrb[0].mxu0
      %662 = vmatprep.mubr.f32.mxu0 0.0
      %663 = vmatmul.mubr.f32.gmra.mrb[0].mxu0 %v487
      %v664 = vpop.f32.mrb[0].mxu0
      %v665 = vadd.f32 0.0, %v664
      %v666 = vpop.f32.mrb[0].mxu0
      %667 = vmatprep.mubr.f32.mxu0 0.0
      %668 = vmatmul.mubr.f32.gmra.mrb[0].mxu0 %v490
      %v669 = vpop.f32.mrb[0].mxu0
      %v670 = vadd.f32 0.0, %v669
      %v671 = vpop.f32.mrb[0].mxu0
      %672 = vmatprep.mubr.f32.mxu0 0.0
      %673 = vmatmul.mubr.f32.gmra.mrb[0].mxu0 %v493
      %v674 = vpop.f32.mrb[0].mxu0
      %v675 = vadd.f32 0.0, %v674
      %v676 = vpop.f32.mrb[0].mxu0
      %677 = vmatprep.mubr.f32.mxu0 0.0
      %678 = vmatmul.mubr.f32.gmra.mrb[0].mxu0 %v496
      %v679 = vpop.f32.mrb[0].mxu0
      %v680 = vadd.f32 0.0, %v679
      %v681 = vpop.f32.mrb[0].mxu0
      %682 = vmatprep.mubr.f32.mxu0 0.0
      %683 = vmatmul.mubr.f32.gmra.mrb[0].mxu0 %v499
      %v684 = vpop.f32.mrb[0].mxu0
      %v685 = vadd.f32 0.0, %v684
      %v686 = vpop.f32.mrb[0].mxu0
      %687 = vmatprep.mubr.f32.mxu0 0.0
      %688 = vmatmul.mubr.f32.gmra.mrb[0].mxu0 %v502
      %v689 = vpop.f32.mrb[0].mxu0
      %v690 = vadd.f32 0.0, %v689
      %v691 = vpop.f32.mrb[0].mxu0
      %692 = vmatprep.mubr.f32.mxu0 0.0
      %693 = vmatmul.mubr.f32.gmra.mrb[0].mxu0 %v505
      %v694 = vpop.f32.mrb[0].mxu0
      %v695 = vadd.f32 0.0, %v694
      %v696 = vpop.f32.mrb[0].mxu0
      %697 = vmatprep.mubr.f32.mxu0 0.0
      %698 = vmatmul.mubr.f32.gmra.mrb[0].mxu0 %v508
      %v699 = vpop.f32.mrb[0].mxu0
      %v700 = vadd.f32 0.0, %v699
      %v701 = vpop.f32.mrb[0].mxu0
      %702 = vmatprep.mubr.f32.mxu0 0.0
      %703 = vmatmul.mubr.f32.gmra.mrb[0].mxu0 %v511
      %v704 = vpop.f32.mrb[0].mxu0
      %v705 = vadd.f32 0.0, %v704
      %v706 = vpop.f32.mrb[0].mxu0
      %707 = vmatprep.mubr.f32.mxu0 0.0
      %708 = vmatmul.mubr.f32.gmra.mrb[0].mxu0 %v514
      %v709 = vpop.f32.mrb[0].mxu0
      %v710 = vadd.f32 0.0, %v709
      %v711 = vpop.f32.mrb[0].mxu0
      %712 = vmatprep.mubr.f32.mxu0 0.0
      %713 = vmatmul.mubr.f32.gmra.mrb[0].mxu0 %v517
      %v714 = vpop.f32.mrb[0].mxu0
      %v715 = vadd.f32 0.0, %v714
      %v716 = vpop.f32.mrb[0].mxu0
      %717 = vmatprep.mubr.f32.mxu0 0.0
      %718 = vmatmul.mubr.f32.gmra.mrb[0].mxu0 %v520
      %v719 = vpop.f32.mrb[0].mxu0
      %v720 = vadd.f32 0.0, %v719
      %v721 = vpop.f32.mrb[0].mxu0
      %722 = vmatprep.mubr.f32.mxu0 0.0
      %723 = vmatmul.mubr.f32.gmra.mrb[0].mxu0 %v523
      %v724 = vpop.f32.mrb[0].mxu0
      %v725 = vadd.f32 0.0, %v724
      %v726 = vpop.f32.mrb[0].mxu0
      %727 = vmatprep.mubr.f32.mxu0 0.0
      %728 = vmatmul.mubr.f32.gmra.mrb[0].mxu0 %v526
      %v729 = vpop.f32.mrb[0].mxu0
      %v730 = vadd.f32 0.0, %v729
      %v731 = vpop.f32.mrb[0].mxu0
      %732 = vmatprep.mubr.f32.mxu0 0.0
      %733 = vmatmul.mubr.f32.gmra.mrb[0].mxu0 %v529
      %v734 = vpop.f32.mrb[0].mxu0
      %v735 = vadd.f32 0.0, %v734
      %v736 = vpop.f32.mrb[0].mxu0
      %737 = vmatprep.mubr.f32.mxu0 0.0
      %738 = vmatmul.mubr.f32.gmra.mrb[0].mxu0 %v532
      %v739 = vpop.f32.mrb[0].mxu0
      %v740 = vadd.f32 0.0, %v739
      %v741 = vpop.f32.mrb[0].mxu0
      %742 = vmatprep.mubr.f32.mxu0 0.0
      %743 = vmatmul.mubr.f32.gmra.mrb[0].mxu0 %v535
      %v744 = vpop.f32.mrb[0].mxu0
      %v745 = vadd.f32 0.0, %v744
      %v746 = vpop.f32.mrb[0].mxu0
      %747 = vmatprep.mubr.f32.mxu0 0.0
      %748 = vmatmul.mubr.f32.gmra.mrb[0].mxu0 %v538
      %v749 = vpop.f32.mrb[0].mxu0
      %v750 = vadd.f32 0.0, %v749
      %v751 = vpop.f32.mrb[0].mxu0
      %752 = vmatprep.mubr.f32.mxu0 0.0
      %753 = vmatmul.mubr.f32.gmra.mrb[0].mxu0 %v541
      %v754 = vpop.f32.mrb[0].mxu0
      %v755 = vadd.f32 0.0, %v754
      %v756 = vpop.f32.mrb[0].mxu0
      %757 = vmatprep.mubr.f32.mxu0 0.0
      %758 = vmatmul.mubr.f32.gmra.mrb[0].mxu0 %v544
      %v759 = vpop.f32.mrb[0].mxu0
      %v760 = vadd.f32 0.0, %v759
      %v761 = vpop.f32.mrb[0].mxu0
      %762 = vmatprep.mubr.f32.mxu0 0.0
      %763 = vmatmul.mubr.f32.gmra.mrb[0].mxu0 %v547
      %v764 = vpop.f32.mrb[0].mxu0
      %v765 = vadd.f32 0.0, %v764
      %v766 = vpop.f32.mrb[0].mxu0
      %767 = vmatprep.mubr.f32.mxu0 0.0
      %768 = vmatmul.mubr.f32.gmra.mrb[0].mxu0 %v550
      %v769 = vpop.f32.mrb[0].mxu0
      %v770 = vadd.f32 0.0, %v769
      %v771 = vpop.f32.mrb[0].mxu0
      %772 = vmatprep.mubr.f32.mxu0 0.0
      %773 = vmatmul.mubr.f32.gmra.mrb[0].mxu0 %v553
      %v774 = vpop.f32.mrb[0].mxu0
      %v775 = vadd.f32 0.0, %v774
      %v776 = vpop.f32.mrb[0].mxu0
      %777 = vmatprep.mubr.f32.mxu0 0.0
      %778 = vmatmul.mubr.f32.gmra.mrb[0].mxu0 %v556
      %v779 = vpop.f32.mrb[0].mxu0
      %v780 = vadd.f32 0.0, %v779
      %v781 = vpop.f32.mrb[0].mxu0
      %782 = vdwg.mxu0
      %v784 = vsel %vm144, %v392, 0
      %v787 = vsel %vm144, %v393, 0
      %v790 = vsel %vm144, %v394, 0
      %v793 = vsel %vm144, %v395, 0
      %v796 = vsel %vm144, %v396, 0
      %v799 = vsel %vm144, %v397, 0
      %v802 = vsel %vm144, %v398, 0
      %v805 = vsel %vm144, %v399, 0
      %v808 = vsel %vm144, %v400, 0
      %v811 = vsel %vm144, %v401, 0
      %v814 = vsel %vm144, %v402, 0
      %v817 = vsel %vm144, %v403, 0
      %v820 = vsel %vm144, %v404, 0
      %v823 = vsel %vm144, %v405, 0
      %v826 = vsel %vm144, %v406, 0
      %v829 = vsel %vm144, %v407, 0
      %v832 = vsel %vm144, %v408, 0
      %v835 = vsel %vm144, %v409, 0
      %v838 = vsel %vm144, %v410, 0
      %v841 = vsel %vm144, %v411, 0
      %v844 = vsel %vm144, %v412, 0
      %v847 = vsel %vm144, %v413, 0
      %v850 = vsel %vm144, %v414, 0
      %v853 = vsel %vm144, %v415, 0
      %v856 = vsel %vm144, %v416, 0
      %v859 = vsel %vm144, %v417, 0
      %v862 = vsel %vm144, %v418, 0
      %v865 = vsel %vm144, %v419, 0
      %v868 = vsel %vm144, %v420, 0
      %v871 = vsel %vm144, %v421, 0
      %v874 = vsel %vm144, %v422, 0
      %v877 = vsel %vm144, %v423, 0
      %879 = vmatprep.subr.mxu0 0.0
      %880 = vmatpush1.msra.mxu0 %v424
      %881 = vmatprep.subr.mxu0 0.0
      %882 = vmatpush1.msra.mxu0 %v425
      %883 = vmatprep.subr.mxu0 0.0
      %884 = vmatpush1.msra.mxu0 0.0
      %885 = vmatprep.subr.mxu0 0.0
      %886 = vmatpush1.msra.mxu0 0.0
      %887 = vmatprep.subr.mxu0 0.0
      %888 = vmatpush1.msra.mxu0 0.0
      %889 = vmatprep.subr.mxu0 0.0
      %890 = vmatpush1.msra.mxu0 0.0
      %891 = vmatprep.subr.mxu0 0.0
      %892 = vmatpush1.msra.mxu0 0.0
      %893 = vmatprep.subr.mxu0 0.0
      %894 = vmatpush1.msra.mxu0 0.0
      %895 = vmatprep.subr.mxu0 0.0
      %896 = vmatpush1.msra.mxu0 0.0
      %897 = vmatprep.subr.mxu0 0.0
      %898 = vmatpush1.msra.mxu0 0.0
      %899 = vmatprep.subr.mxu0 0.0
      %900 = vmatpush1.msra.mxu0 0.0
      %901 = vmatprep.subr.mxu0 0.0
      %902 = vmatpush1.msra.mxu0 0.0
      %903 = vmatprep.subr.mxu0 0.0
      %904 = vmatpush1.msra.mxu0 0.0
      %905 = vmatprep.subr.mxu0 0.0
      %906 = vmatpush1.msra.mxu0 0.0
      %907 = vmatprep.subr.mxu0 0.0
      %908 = vmatpush1.msra.mxu0 0.0
      %909 = vmatprep.subr.mxu0 0.0
      %910 = vmatpush1.msra.mxu0 0.0
      %911 = vmatprep.subr.mxu0 0.0
      %912 = vmatpush1.msra.mxu0 0.0
      %913 = vmatprep.subr.mxu0 0.0
      %914 = vmatpush1.msra.mxu0 0.0
      %915 = vmatprep.subr.mxu0 0.0
      %916 = vmatpush1.msra.mxu0 0.0
      %917 = vmatprep.subr.mxu0 0.0
      %918 = vmatpush1.msra.mxu0 0.0
      %919 = vmatprep.subr.mxu0 0.0
      %920 = vmatpush1.msra.mxu0 0.0
      %921 = vmatprep.subr.mxu0 0.0
      %922 = vmatpush1.msra.mxu0 0.0
      %923 = vmatprep.subr.mxu0 0.0
      %924 = vmatpush1.msra.mxu0 0.0
      %925 = vmatprep.subr.mxu0 0.0
      %926 = vmatpush1.msra.mxu0 0.0
      %927 = vmatprep.subr.mxu0 0.0
      %928 = vmatpush1.msra.mxu0 0.0
      %929 = vmatprep.subr.mxu0 0.0
      %930 = vmatpush1.msra.mxu0 0.0
      %931 = vmatprep.subr.mxu0 0.0
      %932 = vmatpush1.msra.mxu0 0.0
      %933 = vmatprep.subr.mxu0 0.0
      %934 = vmatpush1.msra.mxu0 0.0
      %935 = vmatprep.subr.mxu0 0.0
      %936 = vmatpush1.msra.mxu0 0.0
      %937 = vmatprep.subr.mxu0 0.0
      %938 = vmatpush1.msra.mxu0 0.0
      %939 = vmatprep.subr.mxu0 0.0
      %940 = vmatpush1.msra.mxu0 0.0
      %941 = vmatprep.subr.mxu0 0.0
      %942 = vmatpush1.msra.mxu0 0.0
      %943 = vmatprep.mubr.f32.mxu0 0.0
      %944 = vmatmul.mubr.f32.gmra.mrb[0].mxu0 %v784
      %v945 = vpop.f32.mrb[0].mxu0
      %v946 = vadd.f32 %v625, %v945
      %v947 = vpop.f32.mrb[0].mxu0
      %948 = vmatprep.mubr.f32.mxu0 0.0
      %949 = vmatmul.mubr.f32.gmra.mrb[0].mxu0 %v787
      %v950 = vpop.f32.mrb[0].mxu0
      %v951 = vadd.f32 %v630, %v950
      %v952 = vpop.f32.mrb[0].mxu0
      %953 = vmatprep.mubr.f32.mxu0 0.0
      %954 = vmatmul.mubr.f32.gmra.mrb[0].mxu0 %v790
      %v955 = vpop.f32.mrb[0].mxu0
      %v956 = vadd.f32 %v635, %v955
      %v957 = vpop.f32.mrb[0].mxu0
      %958 = vmatprep.mubr.f32.mxu0 0.0
      %959 = vmatmul.mubr.f32.gmra.mrb[0].mxu0 %v793
      %v960 = vpop.f32.mrb[0].mxu0
      %v961 = vadd.f32 %v640, %v960
      %v962 = vpop.f32.mrb[0].mxu0
      %963 = vmatprep.mubr.f32.mxu0 0.0
      %964 = vmatmul.mubr.f32.gmra.mrb[0].mxu0 %v796
      %v965 = vpop.f32.mrb[0].mxu0
      %v966 = vadd.f32 %v645, %v965
      %v967 = vpop.f32.mrb[0].mxu0
      %968 = vmatprep.mubr.f32.mxu0 0.0
      %969 = vmatmul.mubr.f32.gmra.mrb[0].mxu0 %v799
      %v970 = vpop.f32.mrb[0].mxu0
      %v971 = vadd.f32 %v650, %v970
      %v972 = vpop.f32.mrb[0].mxu0
      %973 = vmatprep.mubr.f32.mxu0 0.0
      %974 = vmatmul.mubr.f32.gmra.mrb[0].mxu0 %v802
      %v975 = vpop.f32.mrb[0].mxu0
      %v976 = vadd.f32 %v655, %v975
      %v977 = vpop.f32.mrb[0].mxu0
      %978 = vmatprep.mubr.f32.mxu0 0.0
      %979 = vmatmul.mubr.f32.gmra.mrb[0].mxu0 %v805
      %v980 = vpop.f32.mrb[0].mxu0
      %v981 = vadd.f32 %v660, %v980
      %v982 = vpop.f32.mrb[0].mxu0
      %983 = vmatprep.mubr.f32.mxu0 0.0
      %984 = vmatmul.mubr.f32.gmra.mrb[0].mxu0 %v808
      %v985 = vpop.f32.mrb[0].mxu0
      %v986 = vadd.f32 %v665, %v985
      %v987 = vpop.f32.mrb[0].mxu0
      %988 = vmatprep.mubr.f32.mxu0 0.0
      %989 = vmatmul.mubr.f32.gmra.mrb[0].mxu0 %v811
      %v990 = vpop.f32.mrb[0].mxu0
      %v991 = vadd.f32 %v670, %v990
      %v992 = vpop.f32.mrb[0].mxu0
      %993 = vmatprep.mubr.f32.mxu0 0.0
      %994 = vmatmul.mubr.f32.gmra.mrb[0].mxu0 %v814
      %v995 = vpop.f32.mrb[0].mxu0
      %v996 = vadd.f32 %v675, %v995
      %v997 = vpop.f32.mrb[0].mxu0
      %998 = vmatprep.mubr.f32.mxu0 0.0
      %999 = vmatmul.mubr.f32.gmra.mrb[0].mxu0 %v817
      %v1000 = vpop.f32.mrb[0].mxu0
      %v1001 = vadd.f32 %v680, %v1000
      %v1002 = vpop.f32.mrb[0].mxu0
      %1003 = vmatprep.mubr.f32.mxu0 0.0
      %1004 = vmatmul.mubr.f32.gmra.mrb[0].mxu0 %v820
      %v1005 = vpop.f32.mrb[0].mxu0
      %v1006 = vadd.f32 %v685, %v1005
      %v1007 = vpop.f32.mrb[0].mxu0
      %1008 = vmatprep.mubr.f32.mxu0 0.0
      %1009 = vmatmul.mubr.f32.gmra.mrb[0].mxu0 %v823
      %v1010 = vpop.f32.mrb[0].mxu0
      %v1011 = vadd.f32 %v690, %v1010
      %v1012 = vpop.f32.mrb[0].mxu0
      %1013 = vmatprep.mubr.f32.mxu0 0.0
      %1014 = vmatmul.mubr.f32.gmra.mrb[0].mxu0 %v826
      %v1015 = vpop.f32.mrb[0].mxu0
      %v1016 = vadd.f32 %v695, %v1015
      %v1017 = vpop.f32.mrb[0].mxu0
      %1018 = vmatprep.mubr.f32.mxu0 0.0
      %1019 = vmatmul.mubr.f32.gmra.mrb[0].mxu0 %v829
      %v1020 = vpop.f32.mrb[0].mxu0
      %v1021 = vadd.f32 %v700, %v1020
      %v1022 = vpop.f32.mrb[0].mxu0
      %1023 = vmatprep.mubr.f32.mxu0 0.0
      %1024 = vmatmul.mubr.f32.gmra.mrb[0].mxu0 %v832
      %v1025 = vpop.f32.mrb[0].mxu0
      %v1026 = vadd.f32 %v705, %v1025
      %v1027 = vpop.f32.mrb[0].mxu0
      %1028 = vmatprep.mubr.f32.mxu0 0.0
      %1029 = vmatmul.mubr.f32.gmra.mrb[0].mxu0 %v835
      %v1030 = vpop.f32.mrb[0].mxu0
      %v1031 = vadd.f32 %v710, %v1030
      %v1032 = vpop.f32.mrb[0].mxu0
      %1033 = vmatprep.mubr.f32.mxu0 0.0
      %1034 = vmatmul.mubr.f32.gmra.mrb[0].mxu0 %v838
      %v1035 = vpop.f32.mrb[0].mxu0
      %v1036 = vadd.f32 %v715, %v1035
      %v1037 = vpop.f32.mrb[0].mxu0
      %1038 = vmatprep.mubr.f32.mxu0 0.0
      %1039 = vmatmul.mubr.f32.gmra.mrb[0].mxu0 %v841
      %v1040 = vpop.f32.mrb[0].mxu0
      %v1041 = vadd.f32 %v720, %v1040
      %v1042 = vpop.f32.mrb[0].mxu0
      %1043 = vmatprep.mubr.f32.mxu0 0.0
      %1044 = vmatmul.mubr.f32.gmra.mrb[0].mxu0 %v844
      %v1045 = vpop.f32.mrb[0].mxu0
      %v1046 = vadd.f32 %v725, %v1045
      %v1047 = vpop.f32.mrb[0].mxu0
      %1048 = vmatprep.mubr.f32.mxu0 0.0
      %1049 = vmatmul.mubr.f32.gmra.mrb[0].mxu0 %v847
      %v1050 = vpop.f32.mrb[0].mxu0
      %v1051 = vadd.f32 %v730, %v1050
      %v1052 = vpop.f32.mrb[0].mxu0
      %1053 = vmatprep.mubr.f32.mxu0 0.0
      %1054 = vmatmul.mubr.f32.gmra.mrb[0].mxu0 %v850
      %v1055 = vpop.f32.mrb[0].mxu0
      %v1056 = vadd.f32 %v735, %v1055
      %v1057 = vpop.f32.mrb[0].mxu0
      %1058 = vmatprep.mubr.f32.mxu0 0.0
      %1059 = vmatmul.mubr.f32.gmra.mrb[0].mxu0 %v853
      %v1060 = vpop.f32.mrb[0].mxu0
      %v1061 = vadd.f32 %v740, %v1060
      %v1062 = vpop.f32.mrb[0].mxu0
      %1063 = vmatprep.mubr.f32.mxu0 0.0
      %1064 = vmatmul.mubr.f32.gmra.mrb[0].mxu0 %v856
      %v1065 = vpop.f32.mrb[0].mxu0
      %v1066 = vadd.f32 %v745, %v1065
      %v1067 = vpop.f32.mrb[0].mxu0
      %1068 = vmatprep.mubr.f32.mxu0 0.0
      %1069 = vmatmul.mubr.f32.gmra.mrb[0].mxu0 %v859
      %v1070 = vpop.f32.mrb[0].mxu0
      %v1071 = vadd.f32 %v750, %v1070
      %v1072 = vpop.f32.mrb[0].mxu0
      %1073 = vmatprep.mubr.f32.mxu0 0.0
      %1074 = vmatmul.mubr.f32.gmra.mrb[0].mxu0 %v862
      %v1075 = vpop.f32.mrb[0].mxu0
      %v1076 = vadd.f32 %v755, %v1075
      %v1077 = vpop.f32.mrb[0].mxu0
      %1078 = vmatprep.mubr.f32.mxu0 0.0
      %1079 = vmatmul.mubr.f32.gmra.mrb[0].mxu0 %v865
      %v1080 = vpop.f32.mrb[0].mxu0
      %v1081 = vadd.f32 %v760, %v1080
      %v1082 = vpop.f32.mrb[0].mxu0
      %1083 = vmatprep.mubr.f32.mxu0 0.0
      %1084 = vmatmul.mubr.f32.gmra.mrb[0].mxu0 %v868
      %v1085 = vpop.f32.mrb[0].mxu0
      %v1086 = vadd.f32 %v765, %v1085
      %v1087 = vpop.f32.mrb[0].mxu0
      %1088 = vmatprep.mubr.f32.mxu0 0.0
      %1089 = vmatmul.mubr.f32.gmra.mrb[0].mxu0 %v871
      %v1090 = vpop.f32.mrb[0].mxu0
      %v1091 = vadd.f32 %v770, %v1090
      %v1092 = vpop.f32.mrb[0].mxu0
      %1093 = vmatprep.mubr.f32.mxu0 0.0
      %1094 = vmatmul.mubr.f32.gmra.mrb[0].mxu0 %v874
      %v1095 = vpop.f32.mrb[0].mxu0
      %v1096 = vadd.f32 %v775, %v1095
      %v1097 = vpop.f32.mrb[0].mxu0
      %1098 = vmatprep.mubr.f32.mxu0 0.0
      %1099 = vmatmul.mubr.f32.gmra.mrb[0].mxu0 %v877
      %v1100 = vpop.f32.mrb[0].mxu0
      %v1101 = vadd.f32 %v780, %v1100
      %v1102 = vpop.f32.mrb[0].mxu0
      %1103 = vdwg.mxu0
      %v1104 = vld [vmem:[%s177] sm:$0xff]
      %v1105 = vld [vmem:[%s177 + $0x8] sm:$0xff]
      %v1106 = vld [vmem:[%s177 + $0x10] sm:$0xff]
      %v1107 = vld [vmem:[%s177 + $0x18] sm:$0xff]
      %v1108 = vld [vmem:[%s177 + $0x20] sm:$0xff]
      %v1109 = vld [vmem:[%s177 + $0x28] sm:$0xff]
      %v1110 = vld [vmem:[%s177 + $0x30] sm:$0xff]
      %v1111 = vld [vmem:[%s177 + $0x38] sm:$0xff]
      %v1112 = vld [vmem:[%s177 + $0x40] sm:$0xff]
      %v1113 = vld [vmem:[%s177 + $0x48] sm:$0xff]
      %v1114 = vld [vmem:[%s177 + $0x50] sm:$0xff]
      %v1115 = vld [vmem:[%s177 + $0x58] sm:$0xff]
      %v1116 = vld [vmem:[%s177 + $0x60] sm:$0xff]
      %v1117 = vld [vmem:[%s177 + $0x68] sm:$0xff]
      %v1118 = vld [vmem:[%s177 + $0x70] sm:$0xff]
      %v1119 = vld [vmem:[%s177 + $0x78] sm:$0xff]
      %v1120 = vld [vmem:[%s177 + $0x80] sm:$0xff]
      %v1121 = vld [vmem:[%s177 + $0x88] sm:$0xff]
      %v1122 = vld [vmem:[%s177 + $0x90] sm:$0xff]
      %v1123 = vld [vmem:[%s177 + $0x98] sm:$0xff]
      %v1124 = vld [vmem:[%s177 + $0xa0] sm:$0xff]
      %v1125 = vld [vmem:[%s177 + $0xa8] sm:$0xff]
      %v1126 = vld [vmem:[%s177 + $0xb0] sm:$0xff]
      %v1127 = vld [vmem:[%s177 + $0xb8] sm:$0xff]
      %v1128 = vld [vmem:[%s177 + $0xc0] sm:$0xff]
      %v1129 = vld [vmem:[%s177 + $0xc8] sm:$0xff]
      %v1130 = vld [vmem:[%s177 + $0xd0] sm:$0xff]
      %v1131 = vld [vmem:[%s177 + $0xd8] sm:$0xff]
      %v1132 = vld [vmem:[%s177 + $0xe0] sm:$0xff]
      %v1133 = vld [vmem:[%s177 + $0xe8] sm:$0xff]
      %v1134 = vld [vmem:[%s177 + $0xf0] sm:$0xff]
      %v1135 = vld [vmem:[%s177 + $0xf8] sm:$0xff]
      %s1136 = scalar_lea.vmem %s1, 32
      %v1137 = vld [vmem:[%s1136] sm:$0xff]
      %v1138 = vld [vmem:[%s1136 + $0x8] sm:$0xff]
      %v1140 = vsel %vm144, %v1104, 0
      %v1143 = vsel %vm144, %v1105, 0
      %v1146 = vsel %vm144, %v1106, 0
      %v1149 = vsel %vm144, %v1107, 0
      %v1152 = vsel %vm144, %v1108, 0
      %v1155 = vsel %vm144, %v1109, 0
      %v1158 = vsel %vm144, %v1110, 0
      %v1161 = vsel %vm144, %v1111, 0
      %v1164 = vsel %vm144, %v1112, 0
      %v1167 = vsel %vm144, %v1113, 0
      %v1170 = vsel %vm144, %v1114, 0
      %v1173 = vsel %vm144, %v1115, 0
      %v1176 = vsel %vm144, %v1116, 0
      %v1179 = vsel %vm144, %v1117, 0
      %v1182 = vsel %vm144, %v1118, 0
      %v1185 = vsel %vm144, %v1119, 0
      %v1188 = vsel %vm144, %v1120, 0
      %v1191 = vsel %vm144, %v1121, 0
      %v1194 = vsel %vm144, %v1122, 0
      %v1197 = vsel %vm144, %v1123, 0
      %v1200 = vsel %vm144, %v1124, 0
      %v1203 = vsel %vm144, %v1125, 0
      %v1206 = vsel %vm144, %v1126, 0
      %v1209 = vsel %vm144, %v1127, 0
      %v1212 = vsel %vm144, %v1128, 0
      %v1215 = vsel %vm144, %v1129, 0
      %v1218 = vsel %vm144, %v1130, 0
      %v1221 = vsel %vm144, %v1131, 0
      %v1224 = vsel %vm144, %v1132, 0
      %v1227 = vsel %vm144, %v1133, 0
      %v1230 = vsel %vm144, %v1134, 0
      %v1233 = vsel %vm144, %v1135, 0
      %1235 = vmatprep.subr.mxu0 0.0
      %1236 = vmatpush1.msra.mxu0 %v1137
      %1237 = vmatprep.subr.mxu0 0.0
      %1238 = vmatpush1.msra.mxu0 %v1138
      %1239 = vmatprep.subr.mxu0 0.0
      %1240 = vmatpush1.msra.mxu0 0.0
      %1241 = vmatprep.subr.mxu0 0.0
      %1242 = vmatpush1.msra.mxu0 0.0
      %1243 = vmatprep.subr.mxu0 0.0
      %1244 = vmatpush1.msra.mxu0 0.0
      %1245 = vmatprep.subr.mxu0 0.0
      %1246 = vmatpush1.msra.mxu0 0.0
      %1247 = vmatprep.subr.mxu0 0.0
      %1248 = vmatpush1.msra.mxu0 0.0
      %1249 = vmatprep.subr.mxu0 0.0
      %1250 = vmatpush1.msra.mxu0 0.0
      %1251 = vmatprep.subr.mxu0 0.0
      %1252 = vmatpush1.msra.mxu0 0.0
      %1253 = vmatprep.subr.mxu0 0.0
      %1254 = vmatpush1.msra.mxu0 0.0
      %1255 = vmatprep.subr.mxu0 0.0
      %1256 = vmatpush1.msra.mxu0 0.0
      %1257 = vmatprep.subr.mxu0 0.0
      %1258 = vmatpush1.msra.mxu0 0.0
      %1259 = vmatprep.subr.mxu0 0.0
      %1260 = vmatpush1.msra.mxu0 0.0
      %1261 = vmatprep.subr.mxu0 0.0
      %1262 = vmatpush1.msra.mxu0 0.0
      %1263 = vmatprep.subr.mxu0 0.0
      %1264 = vmatpush1.msra.mxu0 0.0
      %1265 = vmatprep.subr.mxu0 0.0
      %1266 = vmatpush1.msra.mxu0 0.0
      %1267 = vmatprep.subr.mxu0 0.0
      %1268 = vmatpush1.msra.mxu0 0.0
      %1269 = vmatprep.subr.mxu0 0.0
      %1270 = vmatpush1.msra.mxu0 0.0
      %1271 = vmatprep.subr.mxu0 0.0
      %1272 = vmatpush1.msra.mxu0 0.0
      %1273 = vmatprep.subr.mxu0 0.0
      %1274 = vmatpush1.msra.mxu0 0.0
      %1275 = vmatprep.subr.mxu0 0.0
      %1276 = vmatpush1.msra.mxu0 0.0
      %1277 = vmatprep.subr.mxu0 0.0
      %1278 = vmatpush1.msra.mxu0 0.0
      %1279 = vmatprep.subr.mxu0 0.0
      %1280 = vmatpush1.msra.mxu0 0.0
      %1281 = vmatprep.subr.mxu0 0.0
      %1282 = vmatpush1.msra.mxu0 0.0
      %1283 = vmatprep.subr.mxu0 0.0
      %1284 = vmatpush1.msra.mxu0 0.0
      %1285 = vmatprep.subr.mxu0 0.0
      %1286 = vmatpush1.msra.mxu0 0.0
      %1287 = vmatprep.subr.mxu0 0.0
      %1288 = vmatpush1.msra.mxu0 0.0
      %1289 = vmatprep.subr.mxu0 0.0
      %1290 = vmatpush1.msra.mxu0 0.0
      %1291 = vmatprep.subr.mxu0 0.0
      %1292 = vmatpush1.msra.mxu0 0.0
      %1293 = vmatprep.subr.mxu0 0.0
      %1294 = vmatpush1.msra.mxu0 0.0
      %1295 = vmatprep.subr.mxu0 0.0
      %1296 = vmatpush1.msra.mxu0 0.0
      %1297 = vmatprep.subr.mxu0 0.0
      %1298 = vmatpush1.msra.mxu0 0.0
      %1299 = vmatprep.mubr.f32.mxu0 0.0
      %1300 = vmatmul.mubr.f32.gmra.mrb[0].mxu0 %v1140
      %v1301 = vpop.f32.mrb[0].mxu0
      %v1302 = vadd.f32 0.0, %v1301
      %v1303 = vpop.f32.mrb[0].mxu0
      %1304 = vmatprep.mubr.f32.mxu0 0.0
      %1305 = vmatmul.mubr.f32.gmra.mrb[0].mxu0 %v1143
      %v1306 = vpop.f32.mrb[0].mxu0
      %v1307 = vadd.f32 0.0, %v1306
      %v1308 = vpop.f32.mrb[0].mxu0
      %1309 = vmatprep.mubr.f32.mxu0 0.0
      %1310 = vmatmul.mubr.f32.gmra.mrb[0].mxu0 %v1146
      %v1311 = vpop.f32.mrb[0].mxu0
      %v1312 = vadd.f32 0.0, %v1311
      %v1313 = vpop.f32.mrb[0].mxu0
      %1314 = vmatprep.mubr.f32.mxu0 0.0
      %1315 = vmatmul.mubr.f32.gmra.mrb[0].mxu0 %v1149
      %v1316 = vpop.f32.mrb[0].mxu0
      %v1317 = vadd.f32 0.0, %v1316
      %v1318 = vpop.f32.mrb[0].mxu0
      %1319 = vmatprep.mubr.f32.mxu0 0.0
      %1320 = vmatmul.mubr.f32.gmra.mrb[0].mxu0 %v1152
      %v1321 = vpop.f32.mrb[0].mxu0
      %v1322 = vadd.f32 0.0, %v1321
      %v1323 = vpop.f32.mrb[0].mxu0
      %1324 = vmatprep.mubr.f32.mxu0 0.0
      %1325 = vmatmul.mubr.f32.gmra.mrb[0].mxu0 %v1155
      %v1326 = vpop.f32.mrb[0].mxu0
      %v1327 = vadd.f32 0.0, %v1326
      %v1328 = vpop.f32.mrb[0].mxu0
      %1329 = vmatprep.mubr.f32.mxu0 0.0
      %1330 = vmatmul.mubr.f32.gmra.mrb[0].mxu0 %v1158
      %v1331 = vpop.f32.mrb[0].mxu0
      %v1332 = vadd.f32 0.0, %v1331
      %v1333 = vpop.f32.mrb[0].mxu0
      %1334 = vmatprep.mubr.f32.mxu0 0.0
      %1335 = vmatmul.mubr.f32.gmra.mrb[0].mxu0 %v1161
      %v1336 = vpop.f32.mrb[0].mxu0
      %v1337 = vadd.f32 0.0, %v1336
      %v1338 = vpop.f32.mrb[0].mxu0
      %1339 = vmatprep.mubr.f32.mxu0 0.0
      %1340 = vmatmul.mubr.f32.gmra.mrb[0].mxu0 %v1164
      %v1341 = vpop.f32.mrb[0].mxu0
      %v1342 = vadd.f32 0.0, %v1341
      %v1343 = vpop.f32.mrb[0].mxu0
      %1344 = vmatprep.mubr.f32.mxu0 0.0
      %1345 = vmatmul.mubr.f32.gmra.mrb[0].mxu0 %v1167
      %v1346 = vpop.f32.mrb[0].mxu0
      %v1347 = vadd.f32 0.0, %v1346
      %v1348 = vpop.f32.mrb[0].mxu0
      %1349 = vmatprep.mubr.f32.mxu0 0.0
      %1350 = vmatmul.mubr.f32.gmra.mrb[0].mxu0 %v1170
      %v1351 = vpop.f32.mrb[0].mxu0
      %v1352 = vadd.f32 0.0, %v1351
      %v1353 = vpop.f32.mrb[0].mxu0
      %1354 = vmatprep.mubr.f32.mxu0 0.0
      %1355 = vmatmul.mubr.f32.gmra.mrb[0].mxu0 %v1173
      %v1356 = vpop.f32.mrb[0].mxu0
      %v1357 = vadd.f32 0.0, %v1356
      %v1358 = vpop.f32.mrb[0].mxu0
      %1359 = vmatprep.mubr.f32.mxu0 0.0
      %1360 = vmatmul.mubr.f32.gmra.mrb[0].mxu0 %v1176
      %v1361 = vpop.f32.mrb[0].mxu0
      %v1362 = vadd.f32 0.0, %v1361
      %v1363 = vpop.f32.mrb[0].mxu0
      %1364 = vmatprep.mubr.f32.mxu0 0.0
      %1365 = vmatmul.mubr.f32.gmra.mrb[0].mxu0 %v1179
      %v1366 = vpop.f32.mrb[0].mxu0
      %v1367 = vadd.f32 0.0, %v1366
      %v1368 = vpop.f32.mrb[0].mxu0
      %1369 = vmatprep.mubr.f32.mxu0 0.0
      %1370 = vmatmul.mubr.f32.gmra.mrb[0].mxu0 %v1182
      %v1371 = vpop.f32.mrb[0].mxu0
      %v1372 = vadd.f32 0.0, %v1371
      %v1373 = vpop.f32.mrb[0].mxu0
      %1374 = vmatprep.mubr.f32.mxu0 0.0
      %1375 = vmatmul.mubr.f32.gmra.mrb[0].mxu0 %v1185
      %v1376 = vpop.f32.mrb[0].mxu0
      %v1377 = vadd.f32 0.0, %v1376
      %v1378 = vpop.f32.mrb[0].mxu0
      %1379 = vmatprep.mubr.f32.mxu0 0.0
      %1380 = vmatmul.mubr.f32.gmra.mrb[0].mxu0 %v1188
      %v1381 = vpop.f32.mrb[0].mxu0
      %v1382 = vadd.f32 0.0, %v1381
      %v1383 = vpop.f32.mrb[0].mxu0
      %1384 = vmatprep.mubr.f32.mxu0 0.0
      %1385 = vmatmul.mubr.f32.gmra.mrb[0].mxu0 %v1191
      %v1386 = vpop.f32.mrb[0].mxu0
      %v1387 = vadd.f32 0.0, %v1386
      %v1388 = vpop.f32.mrb[0].mxu0
      %1389 = vmatprep.mubr.f32.mxu0 0.0
      %1390 = vmatmul.mubr.f32.gmra.mrb[0].mxu0 %v1194
      %v1391 = vpop.f32.mrb[0].mxu0
      %v1392 = vadd.f32 0.0, %v1391
      %v1393 = vpop.f32.mrb[0].mxu0
      %1394 = vmatprep.mubr.f32.mxu0 0.0
      %1395 = vmatmul.mubr.f32.gmra.mrb[0].mxu0 %v1197
      %v1396 = vpop.f32.mrb[0].mxu0
      %v1397 = vadd.f32 0.0, %v1396
      %v1398 = vpop.f32.mrb[0].mxu0
      %1399 = vmatprep.mubr.f32.mxu0 0.0
      %1400 = vmatmul.mubr.f32.gmra.mrb[0].mxu0 %v1200
      %v1401 = vpop.f32.mrb[0].mxu0
      %v1402 = vadd.f32 0.0, %v1401
      %v1403 = vpop.f32.mrb[0].mxu0
      %1404 = vmatprep.mubr.f32.mxu0 0.0
      %1405 = vmatmul.mubr.f32.gmra.mrb[0].mxu0 %v1203
      %v1406 = vpop.f32.mrb[0].mxu0
      %v1407 = vadd.f32 0.0, %v1406
      %v1408 = vpop.f32.mrb[0].mxu0
      %1409 = vmatprep.mubr.f32.mxu0 0.0
      %1410 = vmatmul.mubr.f32.gmra.mrb[0].mxu0 %v1206
      %v1411 = vpop.f32.mrb[0].mxu0
      %v1412 = vadd.f32 0.0, %v1411
      %v1413 = vpop.f32.mrb[0].mxu0
      %1414 = vmatprep.mubr.f32.mxu0 0.0
      %1415 = vmatmul.mubr.f32.gmra.mrb[0].mxu0 %v1209
      %v1416 = vpop.f32.mrb[0].mxu0
      %v1417 = vadd.f32 0.0, %v1416
      %v1418 = vpop.f32.mrb[0].mxu0
      %1419 = vmatprep.mubr.f32.mxu0 0.0
      %1420 = vmatmul.mubr.f32.gmra.mrb[0].mxu0 %v1212
      %v1421 = vpop.f32.mrb[0].mxu0
      %v1422 = vadd.f32 0.0, %v1421
      %v1423 = vpop.f32.mrb[0].mxu0
      %1424 = vmatprep.mubr.f32.mxu0 0.0
      %1425 = vmatmul.mubr.f32.gmra.mrb[0].mxu0 %v1215
      %v1426 = vpop.f32.mrb[0].mxu0
      %v1427 = vadd.f32 0.0, %v1426
      %v1428 = vpop.f32.mrb[0].mxu0
      %1429 = vmatprep.mubr.f32.mxu0 0.0
      %1430 = vmatmul.mubr.f32.gmra.mrb[0].mxu0 %v1218
      %v1431 = vpop.f32.mrb[0].mxu0
      %v1432 = vadd.f32 0.0, %v1431
      %v1433 = vpop.f32.mrb[0].mxu0
      %1434 = vmatprep.mubr.f32.mxu0 0.0
      %1435 = vmatmul.mubr.f32.gmra.mrb[0].mxu0 %v1221
      %v1436 = vpop.f32.mrb[0].mxu0
      %v1437 = vadd.f32 0.0, %v1436
      %v1438 = vpop.f32.mrb[0].mxu0
      %1439 = vmatprep.mubr.f32.mxu0 0.0
      %1440 = vmatmul.mubr.f32.gmra.mrb[0].mxu0 %v1224
      %v1441 = vpop.f32.mrb[0].mxu0
      %v1442 = vadd.f32 0.0, %v1441
      %v1443 = vpop.f32.mrb[0].mxu0
      %1444 = vmatprep.mubr.f32.mxu0 0.0
      %1445 = vmatmul.mubr.f32.gmra.mrb[0].mxu0 %v1227
      %v1446 = vpop.f32.mrb[0].mxu0
      %v1447 = vadd.f32 0.0, %v1446
      %v1448 = vpop.f32.mrb[0].mxu0
      %1449 = vmatprep.mubr.f32.mxu0 0.0
      %1450 = vmatmul.mubr.f32.gmra.mrb[0].mxu0 %v1230
      %v1451 = vpop.f32.mrb[0].mxu0
      %v1452 = vadd.f32 0.0, %v1451
      %v1453 = vpop.f32.mrb[0].mxu0
      %1454 = vmatprep.mubr.f32.mxu0 0.0
      %1455 = vmatmul.mubr.f32.gmra.mrb[0].mxu0 %v1233
      %v1456 = vpop.f32.mrb[0].mxu0
      %v1457 = vadd.f32 0.0, %v1456
      %v1458 = vpop.f32.mrb[0].mxu0
      %1459 = vdwg.mxu0
      %v1460 = vadd.f32 %v946, %v1302
      %v1461 = vadd.f32 %v951, %v1307
      %v1462 = vadd.f32 %v956, %v1312
      %v1463 = vadd.f32 %v961, %v1317
      %v1464 = vadd.f32 %v966, %v1322
      %v1465 = vadd.f32 %v971, %v1327
      %v1466 = vadd.f32 %v976, %v1332
      %v1467 = vadd.f32 %v981, %v1337
      %v1468 = vadd.f32 %v986, %v1342
      %v1469 = vadd.f32 %v991, %v1347
      %v1470 = vadd.f32 %v996, %v1352
      %v1471 = vadd.f32 %v1001, %v1357
      %v1472 = vadd.f32 %v1006, %v1362
      %v1473 = vadd.f32 %v1011, %v1367
      %v1474 = vadd.f32 %v1016, %v1372
      %v1475 = vadd.f32 %v1021, %v1377
      %v1476 = vadd.f32 %v1026, %v1382
      %v1477 = vadd.f32 %v1031, %v1387
      %v1478 = vadd.f32 %v1036, %v1392
      %v1479 = vadd.f32 %v1041, %v1397
      %v1480 = vadd.f32 %v1046, %v1402
      %v1481 = vadd.f32 %v1051, %v1407
      %v1482 = vadd.f32 %v1056, %v1412
      %v1483 = vadd.f32 %v1061, %v1417
      %v1484 = vadd.f32 %v1066, %v1422
      %v1485 = vadd.f32 %v1071, %v1427
      %v1486 = vadd.f32 %v1076, %v1432
      %v1487 = vadd.f32 %v1081, %v1437
      %v1488 = vadd.f32 %v1086, %v1442
      %v1489 = vadd.f32 %v1091, %v1447
      %v1490 = vadd.f32 %v1096, %v1452
      %v1491 = vadd.f32 %v1101, %v1457
      %v1492 = vld [vmem:[%s228] sm:$0xff]
      %v1493 = vld [vmem:[%s228 + $0x8] sm:$0xff]
      %v1494 = vld [vmem:[%s228 + $0x10] sm:$0xff]
      %v1495 = vld [vmem:[%s228 + $0x18] sm:$0xff]
      %v1496 = vld [vmem:[%s228 + $0x20] sm:$0xff]
      %v1497 = vld [vmem:[%s228 + $0x28] sm:$0xff]
      %v1498 = vld [vmem:[%s228 + $0x30] sm:$0xff]
      %v1499 = vld [vmem:[%s228 + $0x38] sm:$0xff]
      %v1500 = vld [vmem:[%s228 + $0x40] sm:$0xff]
      %v1501 = vld [vmem:[%s228 + $0x48] sm:$0xff]
      %v1502 = vld [vmem:[%s228 + $0x50] sm:$0xff]
      %v1503 = vld [vmem:[%s228 + $0x58] sm:$0xff]
      %v1504 = vld [vmem:[%s228 + $0x60] sm:$0xff]
      %v1505 = vld [vmem:[%s228 + $0x68] sm:$0xff]
      %v1506 = vld [vmem:[%s228 + $0x70] sm:$0xff]
      %v1507 = vld [vmem:[%s228 + $0x78] sm:$0xff]
      %v1508 = vld [vmem:[%s228 + $0x80] sm:$0xff]
      %v1509 = vld [vmem:[%s228 + $0x88] sm:$0xff]
      %v1510 = vld [vmem:[%s228 + $0x90] sm:$0xff]
      %v1511 = vld [vmem:[%s228 + $0x98] sm:$0xff]
      %v1512 = vld [vmem:[%s228 + $0xa0] sm:$0xff]
      %v1513 = vld [vmem:[%s228 + $0xa8] sm:$0xff]
      %v1514 = vld [vmem:[%s228 + $0xb0] sm:$0xff]
      %v1515 = vld [vmem:[%s228 + $0xb8] sm:$0xff]
      %v1516 = vld [vmem:[%s228 + $0xc0] sm:$0xff]
      %v1517 = vld [vmem:[%s228 + $0xc8] sm:$0xff]
      %v1518 = vld [vmem:[%s228 + $0xd0] sm:$0xff]
      %v1519 = vld [vmem:[%s228 + $0xd8] sm:$0xff]
      %v1520 = vld [vmem:[%s228 + $0xe0] sm:$0xff]
      %v1521 = vld [vmem:[%s228 + $0xe8] sm:$0xff]
      %v1522 = vld [vmem:[%s228 + $0xf0] sm:$0xff]
      %v1523 = vld [vmem:[%s228 + $0xf8] sm:$0xff]
      %s1524 = scalar_lea.vmem %s1, 48
      %v1525 = vld [vmem:[%s1524] sm:$0xff]
      %v1526 = vld [vmem:[%s1524 + $0x8] sm:$0xff]
      %v1528 = vsel %vm144, %v1492, 0
      %v1531 = vsel %vm144, %v1493, 0
      %v1534 = vsel %vm144, %v1494, 0
      %v1537 = vsel %vm144, %v1495, 0
      %v1540 = vsel %vm144, %v1496, 0
      %v1543 = vsel %vm144, %v1497, 0
      %v1546 = vsel %vm144, %v1498, 0
      %v1549 = vsel %vm144, %v1499, 0
      %v1552 = vsel %vm144, %v1500, 0
      %v1555 = vsel %vm144, %v1501, 0
      %v1558 = vsel %vm144, %v1502, 0
      %v1561 = vsel %vm144, %v1503, 0
      %v1564 = vsel %vm144, %v1504, 0
      %v1567 = vsel %vm144, %v1505, 0
      %v1570 = vsel %vm144, %v1506, 0
      %v1573 = vsel %vm144, %v1507, 0
      %v1576 = vsel %vm144, %v1508, 0
      %v1579 = vsel %vm144, %v1509, 0
      %v1582 = vsel %vm144, %v1510, 0
      %v1585 = vsel %vm144, %v1511, 0
      %v1588 = vsel %vm144, %v1512, 0
      %v1591 = vsel %vm144, %v1513, 0
      %v1594 = vsel %vm144, %v1514, 0
      %v1597 = vsel %vm144, %v1515, 0
      %v1600 = vsel %vm144, %v1516, 0
      %v1603 = vsel %vm144, %v1517, 0
      %v1606 = vsel %vm144, %v1518, 0
      %v1609 = vsel %vm144, %v1519, 0
      %v1612 = vsel %vm144, %v1520, 0
      %v1615 = vsel %vm144, %v1521, 0
      %v1618 = vsel %vm144, %v1522, 0
      %v1621 = vsel %vm144, %v1523, 0
      %1623 = vmatprep.subr.mxu0 0.0
      %1624 = vmatpush1.msra.mxu0 %v1525
      %1625 = vmatprep.subr.mxu0 0.0
      %1626 = vmatpush1.msra.mxu0 %v1526
      %1627 = vmatprep.subr.mxu0 0.0
      %1628 = vmatpush1.msra.mxu0 0.0
      %1629 = vmatprep.subr.mxu0 0.0
      %1630 = vmatpush1.msra.mxu0 0.0
      %1631 = vmatprep.subr.mxu0 0.0
      %1632 = vmatpush1.msra.mxu0 0.0
      %1633 = vmatprep.subr.mxu0 0.0
      %1634 = vmatpush1.msra.mxu0 0.0
      %1635 = vmatprep.subr.mxu0 0.0
      %1636 = vmatpush1.msra.mxu0 0.0
      %1637 = vmatprep.subr.mxu0 0.0
      %1638 = vmatpush1.msra.mxu0 0.0
      %1639 = vmatprep.subr.mxu0 0.0
      %1640 = vmatpush1.msra.mxu0 0.0
      %1641 = vmatprep.subr.mxu0 0.0
      %1642 = vmatpush1.msra.mxu0 0.0
      %1643 = vmatprep.subr.mxu0 0.0
      %1644 = vmatpush1.msra.mxu0 0.0
      %1645 = vmatprep.subr.mxu0 0.0
      %1646 = vmatpush1.msra.mxu0 0.0
      %1647 = vmatprep.subr.mxu0 0.0
      %1648 = vmatpush1.msra.mxu0 0.0
      %1649 = vmatprep.subr.mxu0 0.0
      %1650 = vmatpush1.msra.mxu0 0.0
      %1651 = vmatprep.subr.mxu0 0.0
      %1652 = vmatpush1.msra.mxu0 0.0
      %1653 = vmatprep.subr.mxu0 0.0
      %1654 = vmatpush1.msra.mxu0 0.0
      %1655 = vmatprep.subr.mxu0 0.0
      %1656 = vmatpush1.msra.mxu0 0.0
      %1657 = vmatprep.subr.mxu0 0.0
      %1658 = vmatpush1.msra.mxu0 0.0
      %1659 = vmatprep.subr.mxu0 0.0
      %1660 = vmatpush1.msra.mxu0 0.0
      %1661 = vmatprep.subr.mxu0 0.0
      %1662 = vmatpush1.msra.mxu0 0.0
      %1663 = vmatprep.subr.mxu0 0.0
      %1664 = vmatpush1.msra.mxu0 0.0
      %1665 = vmatprep.subr.mxu0 0.0
      %1666 = vmatpush1.msra.mxu0 0.0
      %1667 = vmatprep.subr.mxu0 0.0
      %1668 = vmatpush1.msra.mxu0 0.0
      %1669 = vmatprep.subr.mxu0 0.0
      %1670 = vmatpush1.msra.mxu0 0.0
      %1671 = vmatprep.subr.mxu0 0.0
      %1672 = vmatpush1.msra.mxu0 0.0
      %1673 = vmatprep.subr.mxu0 0.0
      %1674 = vmatpush1.msra.mxu0 0.0
      %1675 = vmatprep.subr.mxu0 0.0
      %1676 = vmatpush1.msra.mxu0 0.0
      %1677 = vmatprep.subr.mxu0 0.0
      %1678 = vmatpush1.msra.mxu0 0.0
      %1679 = vmatprep.subr.mxu0 0.0
      %1680 = vmatpush1.msra.mxu0 0.0
      %1681 = vmatprep.subr.mxu0 0.0
      %1682 = vmatpush1.msra.mxu0 0.0
      %1683 = vmatprep.subr.mxu0 0.0
      %1684 = vmatpush1.msra.mxu0 0.0
      %1685 = vmatprep.subr.mxu0 0.0
      %1686 = vmatpush1.msra.mxu0 0.0
      %1687 = vmatprep.mubr.f32.mxu0 0.0
      %1688 = vmatmul.mubr.f32.gmra.mrb[0].mxu0 %v1528
      %v1689 = vpop.f32.mrb[0].mxu0
      %v1690 = vadd.f32 0.0, %v1689
      %v1691 = vpop.f32.mrb[0].mxu0
      %1692 = vmatprep.mubr.f32.mxu0 0.0
      %1693 = vmatmul.mubr.f32.gmra.mrb[0].mxu0 %v1531
      %v1694 = vpop.f32.mrb[0].mxu0
      %v1695 = vadd.f32 0.0, %v1694
      %v1696 = vpop.f32.mrb[0].mxu0
      %1697 = vmatprep.mubr.f32.mxu0 0.0
      %1698 = vmatmul.mubr.f32.gmra.mrb[0].mxu0 %v1534
      %v1699 = vpop.f32.mrb[0].mxu0
      %v1700 = vadd.f32 0.0, %v1699
      %v1701 = vpop.f32.mrb[0].mxu0
      %1702 = vmatprep.mubr.f32.mxu0 0.0
      %1703 = vmatmul.mubr.f32.gmra.mrb[0].mxu0 %v1537
      %v1704 = vpop.f32.mrb[0].mxu0
      %v1705 = vadd.f32 0.0, %v1704
      %v1706 = vpop.f32.mrb[0].mxu0
      %1707 = vmatprep.mubr.f32.mxu0 0.0
      %1708 = vmatmul.mubr.f32.gmra.mrb[0].mxu0 %v1540
      %v1709 = vpop.f32.mrb[0].mxu0
      %v1710 = vadd.f32 0.0, %v1709
      %v1711 = vpop.f32.mrb[0].mxu0
      %1712 = vmatprep.mubr.f32.mxu0 0.0
      %1713 = vmatmul.mubr.f32.gmra.mrb[0].mxu0 %v1543
      %v1714 = vpop.f32.mrb[0].mxu0
      %v1715 = vadd.f32 0.0, %v1714
      %v1716 = vpop.f32.mrb[0].mxu0
      %1717 = vmatprep.mubr.f32.mxu0 0.0
      %1718 = vmatmul.mubr.f32.gmra.mrb[0].mxu0 %v1546
      %v1719 = vpop.f32.mrb[0].mxu0
      %v1720 = vadd.f32 0.0, %v1719
      %v1721 = vpop.f32.mrb[0].mxu0
      %1722 = vmatprep.mubr.f32.mxu0 0.0
      %1723 = vmatmul.mubr.f32.gmra.mrb[0].mxu0 %v1549
      %v1724 = vpop.f32.mrb[0].mxu0
      %v1725 = vadd.f32 0.0, %v1724
      %v1726 = vpop.f32.mrb[0].mxu0
      %1727 = vmatprep.mubr.f32.mxu0 0.0
      %1728 = vmatmul.mubr.f32.gmra.mrb[0].mxu0 %v1552
      %v1729 = vpop.f32.mrb[0].mxu0
      %v1730 = vadd.f32 0.0, %v1729
      %v1731 = vpop.f32.mrb[0].mxu0
      %1732 = vmatprep.mubr.f32.mxu0 0.0
      %1733 = vmatmul.mubr.f32.gmra.mrb[0].mxu0 %v1555
      %v1734 = vpop.f32.mrb[0].mxu0
      %v1735 = vadd.f32 0.0, %v1734
      %v1736 = vpop.f32.mrb[0].mxu0
      %1737 = vmatprep.mubr.f32.mxu0 0.0
      %1738 = vmatmul.mubr.f32.gmra.mrb[0].mxu0 %v1558
      %v1739 = vpop.f32.mrb[0].mxu0
      %v1740 = vadd.f32 0.0, %v1739
      %v1741 = vpop.f32.mrb[0].mxu0
      %1742 = vmatprep.mubr.f32.mxu0 0.0
      %1743 = vmatmul.mubr.f32.gmra.mrb[0].mxu0 %v1561
      %v1744 = vpop.f32.mrb[0].mxu0
      %v1745 = vadd.f32 0.0, %v1744
      %v1746 = vpop.f32.mrb[0].mxu0
      %1747 = vmatprep.mubr.f32.mxu0 0.0
      %1748 = vmatmul.mubr.f32.gmra.mrb[0].mxu0 %v1564
      %v1749 = vpop.f32.mrb[0].mxu0
      %v1750 = vadd.f32 0.0, %v1749
      %v1751 = vpop.f32.mrb[0].mxu0
      %1752 = vmatprep.mubr.f32.mxu0 0.0
      %1753 = vmatmul.mubr.f32.gmra.mrb[0].mxu0 %v1567
      %v1754 = vpop.f32.mrb[0].mxu0
      %v1755 = vadd.f32 0.0, %v1754
      %v1756 = vpop.f32.mrb[0].mxu0
      %1757 = vmatprep.mubr.f32.mxu0 0.0
      %1758 = vmatmul.mubr.f32.gmra.mrb[0].mxu0 %v1570
      %v1759 = vpop.f32.mrb[0].mxu0
      %v1760 = vadd.f32 0.0, %v1759
      %v1761 = vpop.f32.mrb[0].mxu0
      %1762 = vmatprep.mubr.f32.mxu0 0.0
      %1763 = vmatmul.mubr.f32.gmra.mrb[0].mxu0 %v1573
      %v1764 = vpop.f32.mrb[0].mxu0
      %v1765 = vadd.f32 0.0, %v1764
      %v1766 = vpop.f32.mrb[0].mxu0
      %1767 = vmatprep.mubr.f32.mxu0 0.0
      %1768 = vmatmul.mubr.f32.gmra.mrb[0].mxu0 %v1576
      %v1769 = vpop.f32.mrb[0].mxu0
      %v1770 = vadd.f32 0.0, %v1769
      %v1771 = vpop.f32.mrb[0].mxu0
      %1772 = vmatprep.mubr.f32.mxu0 0.0
      %1773 = vmatmul.mubr.f32.gmra.mrb[0].mxu0 %v1579
      %v1774 = vpop.f32.mrb[0].mxu0
      %v1775 = vadd.f32 0.0, %v1774
      %v1776 = vpop.f32.mrb[0].mxu0
      %1777 = vmatprep.mubr.f32.mxu0 0.0
      %1778 = vmatmul.mubr.f32.gmra.mrb[0].mxu0 %v1582
      %v1779 = vpop.f32.mrb[0].mxu0
      %v1780 = vadd.f32 0.0, %v1779
      %v1781 = vpop.f32.mrb[0].mxu0
      %1782 = vmatprep.mubr.f32.mxu0 0.0
      %1783 = vmatmul.mubr.f32.gmra.mrb[0].mxu0 %v1585
      %v1784 = vpop.f32.mrb[0].mxu0
      %v1785 = vadd.f32 0.0, %v1784
      %v1786 = vpop.f32.mrb[0].mxu0
      %1787 = vmatprep.mubr.f32.mxu0 0.0
      %1788 = vmatmul.mubr.f32.gmra.mrb[0].mxu0 %v1588
      %v1789 = vpop.f32.mrb[0].mxu0
      %v1790 = vadd.f32 0.0, %v1789
      %v1791 = vpop.f32.mrb[0].mxu0
      %1792 = vmatprep.mubr.f32.mxu0 0.0
      %1793 = vmatmul.mubr.f32.gmra.mrb[0].mxu0 %v1591
      %v1794 = vpop.f32.mrb[0].mxu0
      %v1795 = vadd.f32 0.0, %v1794
      %v1796 = vpop.f32.mrb[0].mxu0
      %1797 = vmatprep.mubr.f32.mxu0 0.0
      %1798 = vmatmul.mubr.f32.gmra.mrb[0].mxu0 %v1594
      %v1799 = vpop.f32.mrb[0].mxu0
      %v1800 = vadd.f32 0.0, %v1799
      %v1801 = vpop.f32.mrb[0].mxu0
      %1802 = vmatprep.mubr.f32.mxu0 0.0
      %1803 = vmatmul.mubr.f32.gmra.mrb[0].mxu0 %v1597
      %v1804 = vpop.f32.mrb[0].mxu0
      %v1805 = vadd.f32 0.0, %v1804
      %v1806 = vpop.f32.mrb[0].mxu0
      %1807 = vmatprep.mubr.f32.mxu0 0.0
      %1808 = vmatmul.mubr.f32.gmra.mrb[0].mxu0 %v1600
      %v1809 = vpop.f32.mrb[0].mxu0
      %v1810 = vadd.f32 0.0, %v1809
      %v1811 = vpop.f32.mrb[0].mxu0
      %1812 = vmatprep.mubr.f32.mxu0 0.0
      %1813 = vmatmul.mubr.f32.gmra.mrb[0].mxu0 %v1603
      %v1814 = vpop.f32.mrb[0].mxu0
      %v1815 = vadd.f32 0.0, %v1814
      %v1816 = vpop.f32.mrb[0].mxu0
      %1817 = vmatprep.mubr.f32.mxu0 0.0
      %1818 = vmatmul.mubr.f32.gmra.mrb[0].mxu0 %v1606
      %v1819 = vpop.f32.mrb[0].mxu0
      %v1820 = vadd.f32 0.0, %v1819
      %v1821 = vpop.f32.mrb[0].mxu0
      %1822 = vmatprep.mubr.f32.mxu0 0.0
      %1823 = vmatmul.mubr.f32.gmra.mrb[0].mxu0 %v1609
      %v1824 = vpop.f32.mrb[0].mxu0
      %v1825 = vadd.f32 0.0, %v1824
      %v1826 = vpop.f32.mrb[0].mxu0
      %1827 = vmatprep.mubr.f32.mxu0 0.0
      %1828 = vmatmul.mubr.f32.gmra.mrb[0].mxu0 %v1612
      %v1829 = vpop.f32.mrb[0].mxu0
      %v1830 = vadd.f32 0.0, %v1829
      %v1831 = vpop.f32.mrb[0].mxu0
      %1832 = vmatprep.mubr.f32.mxu0 0.0
      %1833 = vmatmul.mubr.f32.gmra.mrb[0].mxu0 %v1615
      %v1834 = vpop.f32.mrb[0].mxu0
      %v1835 = vadd.f32 0.0, %v1834
      %v1836 = vpop.f32.mrb[0].mxu0
      %1837 = vmatprep.mubr.f32.mxu0 0.0
      %1838 = vmatmul.mubr.f32.gmra.mrb[0].mxu0 %v1618
      %v1839 = vpop.f32.mrb[0].mxu0
      %v1840 = vadd.f32 0.0, %v1839
      %v1841 = vpop.f32.mrb[0].mxu0
      %1842 = vmatprep.mubr.f32.mxu0 0.0
      %1843 = vmatmul.mubr.f32.gmra.mrb[0].mxu0 %v1621
      %v1844 = vpop.f32.mrb[0].mxu0
      %v1845 = vadd.f32 0.0, %v1844
      %v1846 = vpop.f32.mrb[0].mxu0
      %1847 = vdwg.mxu0
      %v1848 = vadd.f32 %v1460, %v1690
      %v1849 = vadd.f32 %v1461, %v1695
      %v1850 = vadd.f32 %v1462, %v1700
      %v1851 = vadd.f32 %v1463, %v1705
      %v1852 = vadd.f32 %v1464, %v1710
      %v1853 = vadd.f32 %v1465, %v1715
      %v1854 = vadd.f32 %v1466, %v1720
      %v1855 = vadd.f32 %v1467, %v1725
      %v1856 = vadd.f32 %v1468, %v1730
      %v1857 = vadd.f32 %v1469, %v1735
      %v1858 = vadd.f32 %v1470, %v1740
      %v1859 = vadd.f32 %v1471, %v1745
      %v1860 = vadd.f32 %v1472, %v1750
      %v1861 = vadd.f32 %v1473, %v1755
      %v1862 = vadd.f32 %v1474, %v1760
      %v1863 = vadd.f32 %v1475, %v1765
      %v1864 = vadd.f32 %v1476, %v1770
      %v1865 = vadd.f32 %v1477, %v1775
      %v1866 = vadd.f32 %v1478, %v1780
      %v1867 = vadd.f32 %v1479, %v1785
      %v1868 = vadd.f32 %v1480, %v1790
      %v1869 = vadd.f32 %v1481, %v1795
      %v1870 = vadd.f32 %v1482, %v1800
      %v1871 = vadd.f32 %v1483, %v1805
      %v1872 = vadd.f32 %v1484, %v1810
      %v1873 = vadd.f32 %v1485, %v1815
      %v1874 = vadd.f32 %v1486, %v1820
      %v1875 = vadd.f32 %v1487, %v1825
      %v1876 = vadd.f32 %v1488, %v1830
      %v1877 = vadd.f32 %v1489, %v1835
      %v1878 = vadd.f32 %v1490, %v1840
      %v1879 = vadd.f32 %v1491, %v1845
      %v1880 = vld [vmem:[%s294] sm:$0xff]
      %v1881 = vld [vmem:[%s294 + $0x8] sm:$0xff]
      %v1882 = vld [vmem:[%s294 + $0x10] sm:$0xff]
      %v1883 = vld [vmem:[%s294 + $0x18] sm:$0xff]
      %v1884 = vld [vmem:[%s294 + $0x20] sm:$0xff]
      %v1885 = vld [vmem:[%s294 + $0x28] sm:$0xff]
      %v1886 = vld [vmem:[%s294 + $0x30] sm:$0xff]
      %v1887 = vld [vmem:[%s294 + $0x38] sm:$0xff]
      %v1888 = vld [vmem:[%s294 + $0x40] sm:$0xff]
      %v1889 = vld [vmem:[%s294 + $0x48] sm:$0xff]
      %v1890 = vld [vmem:[%s294 + $0x50] sm:$0xff]
      %v1891 = vld [vmem:[%s294 + $0x58] sm:$0xff]
      %v1892 = vld [vmem:[%s294 + $0x60] sm:$0xff]
      %v1893 = vld [vmem:[%s294 + $0x68] sm:$0xff]
      %v1894 = vld [vmem:[%s294 + $0x70] sm:$0xff]
      %v1895 = vld [vmem:[%s294 + $0x78] sm:$0xff]
      %v1896 = vld [vmem:[%s294 + $0x80] sm:$0xff]
      %v1897 = vld [vmem:[%s294 + $0x88] sm:$0xff]
      %v1898 = vld [vmem:[%s294 + $0x90] sm:$0xff]
      %v1899 = vld [vmem:[%s294 + $0x98] sm:$0xff]
      %v1900 = vld [vmem:[%s294 + $0xa0] sm:$0xff]
      %v1901 = vld [vmem:[%s294 + $0xa8] sm:$0xff]
      %v1902 = vld [vmem:[%s294 + $0xb0] sm:$0xff]
      %v1903 = vld [vmem:[%s294 + $0xb8] sm:$0xff]
      %v1904 = vld [vmem:[%s294 + $0xc0] sm:$0xff]
      %v1905 = vld [vmem:[%s294 + $0xc8] sm:$0xff]
      %v1906 = vld [vmem:[%s294 + $0xd0] sm:$0xff]
      %v1907 = vld [vmem:[%s294 + $0xd8] sm:$0xff]
      %v1908 = vld [vmem:[%s294 + $0xe0] sm:$0xff]
      %v1909 = vld [vmem:[%s294 + $0xe8] sm:$0xff]
      %v1910 = vld [vmem:[%s294 + $0xf0] sm:$0xff]
      %v1911 = vld [vmem:[%s294 + $0xf8] sm:$0xff]
      %s1912 = scalar_lea.vmem %s1, 64
      %v1913 = vld [vmem:[%s1912] sm:$0xff]
      %v1914 = vld [vmem:[%s1912 + $0x8] sm:$0xff]
      %v1916 = vsel %vm144, %v1880, 0
      %v1919 = vsel %vm144, %v1881, 0
      %v1922 = vsel %vm144, %v1882, 0
      %v1925 = vsel %vm144, %v1883, 0
      %v1928 = vsel %vm144, %v1884, 0
      %v1931 = vsel %vm144, %v1885, 0
      %v1934 = vsel %vm144, %v1886, 0
      %v1937 = vsel %vm144, %v1887, 0
      %v1940 = vsel %vm144, %v1888, 0
      %v1943 = vsel %vm144, %v1889, 0
      %v1946 = vsel %vm144, %v1890, 0
      %v1949 = vsel %vm144, %v1891, 0
      %v1952 = vsel %vm144, %v1892, 0
      %v1955 = vsel %vm144, %v1893, 0
      %v1958 = vsel %vm144, %v1894, 0
      %v1961 = vsel %vm144, %v1895, 0
      %v1964 = vsel %vm144, %v1896, 0
      %v1967 = vsel %vm144, %v1897, 0
      %v1970 = vsel %vm144, %v1898, 0
      %v1973 = vsel %vm144, %v1899, 0
      %v1976 = vsel %vm144, %v1900, 0
      %v1979 = vsel %vm144, %v1901, 0
      %v1982 = vsel %vm144, %v1902, 0
      %v1985 = vsel %vm144, %v1903, 0
      %v1988 = vsel %vm144, %v1904, 0
      %v1991 = vsel %vm144, %v1905, 0
      %v1994 = vsel %vm144, %v1906, 0
      %v1997 = vsel %vm144, %v1907, 0
      %v2000 = vsel %vm144, %v1908, 0
      %v2003 = vsel %vm144, %v1909, 0
      %v2006 = vsel %vm144, %v1910, 0
      %v2009 = vsel %vm144, %v1911, 0
      %2011 = vmatprep.subr.mxu0 0.0
      %2012 = vmatpush1.msra.mxu0 %v1913
      %2013 = vmatprep.subr.mxu0 0.0
      %2014 = vmatpush1.msra.mxu0 %v1914
      %2015 = vmatprep.subr.mxu0 0.0
      %2016 = vmatpush1.msra.mxu0 0.0
      %2017 = vmatprep.subr.mxu0 0.0
      %2018 = vmatpush1.msra.mxu0 0.0
      %2019 = vmatprep.subr.mxu0 0.0
      %2020 = vmatpush1.msra.mxu0 0.0
      %2021 = vmatprep.subr.mxu0 0.0
      %2022 = vmatpush1.msra.mxu0 0.0
      %2023 = vmatprep.subr.mxu0 0.0
      %2024 = vmatpush1.msra.mxu0 0.0
      %2025 = vmatprep.subr.mxu0 0.0
      %2026 = vmatpush1.msra.mxu0 0.0
      %2027 = vmatprep.subr.mxu0 0.0
      %2028 = vmatpush1.msra.mxu0 0.0
      %2029 = vmatprep.subr.mxu0 0.0
      %2030 = vmatpush1.msra.mxu0 0.0
      %2031 = vmatprep.subr.mxu0 0.0
      %2032 = vmatpush1.msra.mxu0 0.0
      %2033 = vmatprep.subr.mxu0 0.0
      %2034 = vmatpush1.msra.mxu0 0.0
      %2035 = vmatprep.subr.mxu0 0.0
      %2036 = vmatpush1.msra.mxu0 0.0
      %2037 = vmatprep.subr.mxu0 0.0
      %2038 = vmatpush1.msra.mxu0 0.0
      %2039 = vmatprep.subr.mxu0 0.0
      %2040 = vmatpush1.msra.mxu0 0.0
      %2041 = vmatprep.subr.mxu0 0.0
      %2042 = vmatpush1.msra.mxu0 0.0
      %2043 = vmatprep.subr.mxu0 0.0
      %2044 = vmatpush1.msra.mxu0 0.0
      %2045 = vmatprep.subr.mxu0 0.0
      %2046 = vmatpush1.msra.mxu0 0.0
      %2047 = vmatprep.subr.mxu0 0.0
      %2048 = vmatpush1.msra.mxu0 0.0
      %2049 = vmatprep.subr.mxu0 0.0
      %2050 = vmatpush1.msra.mxu0 0.0
      %2051 = vmatprep.subr.mxu0 0.0
      %2052 = vmatpush1.msra.mxu0 0.0
      %2053 = vmatprep.subr.mxu0 0.0
      %2054 = vmatpush1.msra.mxu0 0.0
      %2055 = vmatprep.subr.mxu0 0.0
      %2056 = vmatpush1.msra.mxu0 0.0
      %2057 = vmatprep.subr.mxu0 0.0
      %2058 = vmatpush1.msra.mxu0 0.0
      %2059 = vmatprep.subr.mxu0 0.0
      %2060 = vmatpush1.msra.mxu0 0.0
      %2061 = vmatprep.subr.mxu0 0.0
      %2062 = vmatpush1.msra.mxu0 0.0
      %2063 = vmatprep.subr.mxu0 0.0
      %2064 = vmatpush1.msra.mxu0 0.0
      %2065 = vmatprep.subr.mxu0 0.0
      %2066 = vmatpush1.msra.mxu0 0.0
      %2067 = vmatprep.subr.mxu0 0.0
      %2068 = vmatpush1.msra.mxu0 0.0
      %2069 = vmatprep.subr.mxu0 0.0
      %2070 = vmatpush1.msra.mxu0 0.0
      %2071 = vmatprep.subr.mxu0 0.0
      %2072 = vmatpush1.msra.mxu0 0.0
      %2073 = vmatprep.subr.mxu0 0.0
      %2074 = vmatpush1.msra.mxu0 0.0
      %2075 = vmatprep.mubr.f32.mxu0 0.0
      %2076 = vmatmul.mubr.f32.gmra.mrb[0].mxu0 %v1916
      %v2077 = vpop.f32.mrb[0].mxu0
      %v2078 = vadd.f32 0.0, %v2077
      %v2079 = vpop.f32.mrb[0].mxu0
      %2080 = vmatprep.mubr.f32.mxu0 0.0
      %2081 = vmatmul.mubr.f32.gmra.mrb[0].mxu0 %v1919
      %v2082 = vpop.f32.mrb[0].mxu0
      %v2083 = vadd.f32 0.0, %v2082
      %v2084 = vpop.f32.mrb[0].mxu0
      %2085 = vmatprep.mubr.f32.mxu0 0.0
      %2086 = vmatmul.mubr.f32.gmra.mrb[0].mxu0 %v1922
      %v2087 = vpop.f32.mrb[0].mxu0
      %v2088 = vadd.f32 0.0, %v2087
      %v2089 = vpop.f32.mrb[0].mxu0
      %2090 = vmatprep.mubr.f32.mxu0 0.0
      %2091 = vmatmul.mubr.f32.gmra.mrb[0].mxu0 %v1925
      %v2092 = vpop.f32.mrb[0].mxu0
      %v2093 = vadd.f32 0.0, %v2092
      %v2094 = vpop.f32.mrb[0].mxu0
      %2095 = vmatprep.mubr.f32.mxu0 0.0
      %2096 = vmatmul.mubr.f32.gmra.mrb[0].mxu0 %v1928
      %v2097 = vpop.f32.mrb[0].mxu0
      %v2098 = vadd.f32 0.0, %v2097
      %v2099 = vpop.f32.mrb[0].mxu0
      %2100 = vmatprep.mubr.f32.mxu0 0.0
      %2101 = vmatmul.mubr.f32.gmra.mrb[0].mxu0 %v1931
      %v2102 = vpop.f32.mrb[0].mxu0
      %v2103 = vadd.f32 0.0, %v2102
      %v2104 = vpop.f32.mrb[0].mxu0
      %2105 = vmatprep.mubr.f32.mxu0 0.0
      %2106 = vmatmul.mubr.f32.gmra.mrb[0].mxu0 %v1934
      %v2107 = vpop.f32.mrb[0].mxu0
      %v2108 = vadd.f32 0.0, %v2107
      %v2109 = vpop.f32.mrb[0].mxu0
      %2110 = vmatprep.mubr.f32.mxu0 0.0
      %2111 = vmatmul.mubr.f32.gmra.mrb[0].mxu0 %v1937
      %v2112 = vpop.f32.mrb[0].mxu0
      %v2113 = vadd.f32 0.0, %v2112
      %v2114 = vpop.f32.mrb[0].mxu0
      %2115 = vmatprep.mubr.f32.mxu0 0.0
      %2116 = vmatmul.mubr.f32.gmra.mrb[0].mxu0 %v1940
      %v2117 = vpop.f32.mrb[0].mxu0
      %v2118 = vadd.f32 0.0, %v2117
      %v2119 = vpop.f32.mrb[0].mxu0
      %2120 = vmatprep.mubr.f32.mxu0 0.0
      %2121 = vmatmul.mubr.f32.gmra.mrb[0].mxu0 %v1943
      %v2122 = vpop.f32.mrb[0].mxu0
      %v2123 = vadd.f32 0.0, %v2122
      %v2124 = vpop.f32.mrb[0].mxu0
      %2125 = vmatprep.mubr.f32.mxu0 0.0
      %2126 = vmatmul.mubr.f32.gmra.mrb[0].mxu0 %v1946
      %v2127 = vpop.f32.mrb[0].mxu0
      %v2128 = vadd.f32 0.0, %v2127
      %v2129 = vpop.f32.mrb[0].mxu0
      %2130 = vmatprep.mubr.f32.mxu0 0.0
      %2131 = vmatmul.mubr.f32.gmra.mrb[0].mxu0 %v1949
      %v2132 = vpop.f32.mrb[0].mxu0
      %v2133 = vadd.f32 0.0, %v2132
      %v2134 = vpop.f32.mrb[0].mxu0
      %2135 = vmatprep.mubr.f32.mxu0 0.0
      %2136 = vmatmul.mubr.f32.gmra.mrb[0].mxu0 %v1952
      %v2137 = vpop.f32.mrb[0].mxu0
      %v2138 = vadd.f32 0.0, %v2137
      %v2139 = vpop.f32.mrb[0].mxu0
      %2140 = vmatprep.mubr.f32.mxu0 0.0
      %2141 = vmatmul.mubr.f32.gmra.mrb[0].mxu0 %v1955
      %v2142 = vpop.f32.mrb[0].mxu0
      %v2143 = vadd.f32 0.0, %v2142
      %v2144 = vpop.f32.mrb[0].mxu0
      %2145 = vmatprep.mubr.f32.mxu0 0.0
      %2146 = vmatmul.mubr.f32.gmra.mrb[0].mxu0 %v1958
      %v2147 = vpop.f32.mrb[0].mxu0
      %v2148 = vadd.f32 0.0, %v2147
      %v2149 = vpop.f32.mrb[0].mxu0
      %2150 = vmatprep.mubr.f32.mxu0 0.0
      %2151 = vmatmul.mubr.f32.gmra.mrb[0].mxu0 %v1961
      %v2152 = vpop.f32.mrb[0].mxu0
      %v2153 = vadd.f32 0.0, %v2152
      %v2154 = vpop.f32.mrb[0].mxu0
      %2155 = vmatprep.mubr.f32.mxu0 0.0
      %2156 = vmatmul.mubr.f32.gmra.mrb[0].mxu0 %v1964
      %v2157 = vpop.f32.mrb[0].mxu0
      %v2158 = vadd.f32 0.0, %v2157
      %v2159 = vpop.f32.mrb[0].mxu0
      %2160 = vmatprep.mubr.f32.mxu0 0.0
      %2161 = vmatmul.mubr.f32.gmra.mrb[0].mxu0 %v1967
      %v2162 = vpop.f32.mrb[0].mxu0
      %v2163 = vadd.f32 0.0, %v2162
      %v2164 = vpop.f32.mrb[0].mxu0
      %2165 = vmatprep.mubr.f32.mxu0 0.0
      %2166 = vmatmul.mubr.f32.gmra.mrb[0].mxu0 %v1970
      %v2167 = vpop.f32.mrb[0].mxu0
      %v2168 = vadd.f32 0.0, %v2167
      %v2169 = vpop.f32.mrb[0].mxu0
      %2170 = vmatprep.mubr.f32.mxu0 0.0
      %2171 = vmatmul.mubr.f32.gmra.mrb[0].mxu0 %v1973
      %v2172 = vpop.f32.mrb[0].mxu0
      %v2173 = vadd.f32 0.0, %v2172
      %v2174 = vpop.f32.mrb[0].mxu0
      %2175 = vmatprep.mubr.f32.mxu0 0.0
      %2176 = vmatmul.mubr.f32.gmra.mrb[0].mxu0 %v1976
      %v2177 = vpop.f32.mrb[0].mxu0
      %v2178 = vadd.f32 0.0, %v2177
      %v2179 = vpop.f32.mrb[0].mxu0
      %2180 = vmatprep.mubr.f32.mxu0 0.0
      %2181 = vmatmul.mubr.f32.gmra.mrb[0].mxu0 %v1979
      %v2182 = vpop.f32.mrb[0].mxu0
      %v2183 = vadd.f32 0.0, %v2182
      %v2184 = vpop.f32.mrb[0].mxu0
      %2185 = vmatprep.mubr.f32.mxu0 0.0
      %2186 = vmatmul.mubr.f32.gmra.mrb[0].mxu0 %v1982
      %v2187 = vpop.f32.mrb[0].mxu0
      %v2188 = vadd.f32 0.0, %v2187
      %v2189 = vpop.f32.mrb[0].mxu0
      %2190 = vmatprep.mubr.f32.mxu0 0.0
      %2191 = vmatmul.mubr.f32.gmra.mrb[0].mxu0 %v1985
      %v2192 = vpop.f32.mrb[0].mxu0
      %v2193 = vadd.f32 0.0, %v2192
      %v2194 = vpop.f32.mrb[0].mxu0
      %2195 = vmatprep.mubr.f32.mxu0 0.0
      %2196 = vmatmul.mubr.f32.gmra.mrb[0].mxu0 %v1988
      %v2197 = vpop.f32.mrb[0].mxu0
      %v2198 = vadd.f32 0.0, %v2197
      %v2199 = vpop.f32.mrb[0].mxu0
      %2200 = vmatprep.mubr.f32.mxu0 0.0
      %2201 = vmatmul.mubr.f32.gmra.mrb[0].mxu0 %v1991
      %v2202 = vpop.f32.mrb[0].mxu0
      %v2203 = vadd.f32 0.0, %v2202
      %v2204 = vpop.f32.mrb[0].mxu0
      %2205 = vmatprep.mubr.f32.mxu0 0.0
      %2206 = vmatmul.mubr.f32.gmra.mrb[0].mxu0 %v1994
      %v2207 = vpop.f32.mrb[0].mxu0
      %v2208 = vadd.f32 0.0, %v2207
      %v2209 = vpop.f32.mrb[0].mxu0
      %2210 = vmatprep.mubr.f32.mxu0 0.0
      %2211 = vmatmul.mubr.f32.gmra.mrb[0].mxu0 %v1997
      %v2212 = vpop.f32.mrb[0].mxu0
      %v2213 = vadd.f32 0.0, %v2212
      %v2214 = vpop.f32.mrb[0].mxu0
      %2215 = vmatprep.mubr.f32.mxu0 0.0
      %2216 = vmatmul.mubr.f32.gmra.mrb[0].mxu0 %v2000
      %v2217 = vpop.f32.mrb[0].mxu0
      %v2218 = vadd.f32 0.0, %v2217
      %v2219 = vpop.f32.mrb[0].mxu0
      %2220 = vmatprep.mubr.f32.mxu0 0.0
      %2221 = vmatmul.mubr.f32.gmra.mrb[0].mxu0 %v2003
      %v2222 = vpop.f32.mrb[0].mxu0
      %v2223 = vadd.f32 0.0, %v2222
      %v2224 = vpop.f32.mrb[0].mxu0
      %2225 = vmatprep.mubr.f32.mxu0 0.0
      %2226 = vmatmul.mubr.f32.gmra.mrb[0].mxu0 %v2006
      %v2227 = vpop.f32.mrb[0].mxu0
      %v2228 = vadd.f32 0.0, %v2227
      %v2229 = vpop.f32.mrb[0].mxu0
      %2230 = vmatprep.mubr.f32.mxu0 0.0
      %2231 = vmatmul.mubr.f32.gmra.mrb[0].mxu0 %v2009
      %v2232 = vpop.f32.mrb[0].mxu0
      %v2233 = vadd.f32 0.0, %v2232
      %v2234 = vpop.f32.mrb[0].mxu0
      %2235 = vdwg.mxu0
      %v2236 = vadd.f32 %v1848, %v2078
      %v2237 = vadd.f32 %v1849, %v2083
      %v2238 = vadd.f32 %v1850, %v2088
      %v2239 = vadd.f32 %v1851, %v2093
      %v2240 = vadd.f32 %v1852, %v2098
      %v2241 = vadd.f32 %v1853, %v2103
      %v2242 = vadd.f32 %v1854, %v2108
      %v2243 = vadd.f32 %v1855, %v2113
      %v2244 = vadd.f32 %v1856, %v2118
      %v2245 = vadd.f32 %v1857, %v2123
      %v2246 = vadd.f32 %v1858, %v2128
      %v2247 = vadd.f32 %v1859, %v2133
      %v2248 = vadd.f32 %v1860, %v2138
      %v2249 = vadd.f32 %v1861, %v2143
      %v2250 = vadd.f32 %v1862, %v2148
      %v2251 = vadd.f32 %v1863, %v2153
      %v2252 = vadd.f32 %v1864, %v2158
      %v2253 = vadd.f32 %v1865, %v2163
      %v2254 = vadd.f32 %v1866, %v2168
      %v2255 = vadd.f32 %v1867, %v2173
      %v2256 = vadd.f32 %v1868, %v2178
      %v2257 = vadd.f32 %v1869, %v2183
      %v2258 = vadd.f32 %v1870, %v2188
      %v2259 = vadd.f32 %v1871, %v2193
      %v2260 = vadd.f32 %v1872, %v2198
      %v2261 = vadd.f32 %v1873, %v2203
      %v2262 = vadd.f32 %v1874, %v2208
      %v2263 = vadd.f32 %v1875, %v2213
      %v2264 = vadd.f32 %v1876, %v2218
      %v2265 = vadd.f32 %v1877, %v2223
      %v2266 = vadd.f32 %v1878, %v2228
      %v2267 = vadd.f32 %v1879, %v2233
      %v2268 = vld [vmem:[%s359] sm:$0xff]
      %v2269 = vld [vmem:[%s359 + $0x8] sm:$0xff]
      %v2270 = vld [vmem:[%s359 + $0x10] sm:$0xff]
      %v2271 = vld [vmem:[%s359 + $0x18] sm:$0xff]
      %v2272 = vld [vmem:[%s359 + $0x20] sm:$0xff]
      %v2273 = vld [vmem:[%s359 + $0x28] sm:$0xff]
      %v2274 = vld [vmem:[%s359 + $0x30] sm:$0xff]
      %v2275 = vld [vmem:[%s359 + $0x38] sm:$0xff]
      %v2276 = vld [vmem:[%s359 + $0x40] sm:$0xff]
      %v2277 = vld [vmem:[%s359 + $0x48] sm:$0xff]
      %v2278 = vld [vmem:[%s359 + $0x50] sm:$0xff]
      %v2279 = vld [vmem:[%s359 + $0x58] sm:$0xff]
      %v2280 = vld [vmem:[%s359 + $0x60] sm:$0xff]
      %v2281 = vld [vmem:[%s359 + $0x68] sm:$0xff]
      %v2282 = vld [vmem:[%s359 + $0x70] sm:$0xff]
      %v2283 = vld [vmem:[%s359 + $0x78] sm:$0xff]
      %v2284 = vld [vmem:[%s359 + $0x80] sm:$0xff]
      %v2285 = vld [vmem:[%s359 + $0x88] sm:$0xff]
      %v2286 = vld [vmem:[%s359 + $0x90] sm:$0xff]
      %v2287 = vld [vmem:[%s359 + $0x98] sm:$0xff]
      %v2288 = vld [vmem:[%s359 + $0xa0] sm:$0xff]
      %v2289 = vld [vmem:[%s359 + $0xa8] sm:$0xff]
      %v2290 = vld [vmem:[%s359 + $0xb0] sm:$0xff]
      %v2291 = vld [vmem:[%s359 + $0xb8] sm:$0xff]
      %v2292 = vld [vmem:[%s359 + $0xc0] sm:$0xff]
      %v2293 = vld [vmem:[%s359 + $0xc8] sm:$0xff]
      %v2294 = vld [vmem:[%s359 + $0xd0] sm:$0xff]
      %v2295 = vld [vmem:[%s359 + $0xd8] sm:$0xff]
      %v2296 = vld [vmem:[%s359 + $0xe0] sm:$0xff]
      %v2297 = vld [vmem:[%s359 + $0xe8] sm:$0xff]
      %v2298 = vld [vmem:[%s359 + $0xf0] sm:$0xff]
      %v2299 = vld [vmem:[%s359 + $0xf8] sm:$0xff]
      %s2300 = scalar_lea.vmem %s1, 80
      %v2301 = vld [vmem:[%s2300] sm:$0xff]
      %v2302 = vld [vmem:[%s2300 + $0x8] sm:$0xff]
      %v2304 = vsel %vm144, %v2268, 0
      %v2307 = vsel %vm144, %v2269, 0
      %v2310 = vsel %vm144, %v2270, 0
      %v2313 = vsel %vm144, %v2271, 0
      %v2316 = vsel %vm144, %v2272, 0
      %v2319 = vsel %vm144, %v2273, 0
      %v2322 = vsel %vm144, %v2274, 0
      %v2325 = vsel %vm144, %v2275, 0
      %v2328 = vsel %vm144, %v2276, 0
      %v2331 = vsel %vm144, %v2277, 0
      %v2334 = vsel %vm144, %v2278, 0
      %v2337 = vsel %vm144, %v2279, 0
      %v2340 = vsel %vm144, %v2280, 0
      %v2343 = vsel %vm144, %v2281, 0
      %v2346 = vsel %vm144, %v2282, 0
      %v2349 = vsel %vm144, %v2283, 0
      %v2352 = vsel %vm144, %v2284, 0
      %v2355 = vsel %vm144, %v2285, 0
      %v2358 = vsel %vm144, %v2286, 0
      %v2361 = vsel %vm144, %v2287, 0
      %v2364 = vsel %vm144, %v2288, 0
      %v2367 = vsel %vm144, %v2289, 0
      %v2370 = vsel %vm144, %v2290, 0
      %v2373 = vsel %vm144, %v2291, 0
      %v2376 = vsel %vm144, %v2292, 0
      %v2379 = vsel %vm144, %v2293, 0
      %v2382 = vsel %vm144, %v2294, 0
      %v2385 = vsel %vm144, %v2295, 0
      %v2388 = vsel %vm144, %v2296, 0
      %v2391 = vsel %vm144, %v2297, 0
      %v2394 = vsel %vm144, %v2298, 0
      %v2397 = vsel %vm144, %v2299, 0
      %2399 = vmatprep.subr.mxu0 0.0
      %2400 = vmatpush1.msra.mxu0 %v2301
      %2401 = vmatprep.subr.mxu0 0.0
      %2402 = vmatpush1.msra.mxu0 %v2302
      %2403 = vmatprep.subr.mxu0 0.0
      %2404 = vmatpush1.msra.mxu0 0.0
      %2405 = vmatprep.subr.mxu0 0.0
      %2406 = vmatpush1.msra.mxu0 0.0
      %2407 = vmatprep.subr.mxu0 0.0
      %2408 = vmatpush1.msra.mxu0 0.0
      %2409 = vmatprep.subr.mxu0 0.0
      %2410 = vmatpush1.msra.mxu0 0.0
      %2411 = vmatprep.subr.mxu0 0.0
      %2412 = vmatpush1.msra.mxu0 0.0
      %2413 = vmatprep.subr.mxu0 0.0
      %2414 = vmatpush1.msra.mxu0 0.0
      %2415 = vmatprep.subr.mxu0 0.0
      %2416 = vmatpush1.msra.mxu0 0.0
      %2417 = vmatprep.subr.mxu0 0.0
      %2418 = vmatpush1.msra.mxu0 0.0
      %2419 = vmatprep.subr.mxu0 0.0
      %2420 = vmatpush1.msra.mxu0 0.0
      %2421 = vmatprep.subr.mxu0 0.0
      %2422 = vmatpush1.msra.mxu0 0.0
      %2423 = vmatprep.subr.mxu0 0.0
      %2424 = vmatpush1.msra.mxu0 0.0
      %2425 = vmatprep.subr.mxu0 0.0
      %2426 = vmatpush1.msra.mxu0 0.0
      %2427 = vmatprep.subr.mxu0 0.0
      %2428 = vmatpush1.msra.mxu0 0.0
      %2429 = vmatprep.subr.mxu0 0.0
      %2430 = vmatpush1.msra.mxu0 0.0
      %2431 = vmatprep.subr.mxu0 0.0
      %2432 = vmatpush1.msra.mxu0 0.0
      %2433 = vmatprep.subr.mxu0 0.0
      %2434 = vmatpush1.msra.mxu0 0.0
      %2435 = vmatprep.subr.mxu0 0.0
      %2436 = vmatpush1.msra.mxu0 0.0
      %2437 = vmatprep.subr.mxu0 0.0
      %2438 = vmatpush1.msra.mxu0 0.0
      %2439 = vmatprep.subr.mxu0 0.0
      %2440 = vmatpush1.msra.mxu0 0.0
      %2441 = vmatprep.subr.mxu0 0.0
      %2442 = vmatpush1.msra.mxu0 0.0
      %2443 = vmatprep.subr.mxu0 0.0
      %2444 = vmatpush1.msra.mxu0 0.0
      %2445 = vmatprep.subr.mxu0 0.0
      %2446 = vmatpush1.msra.mxu0 0.0
      %2447 = vmatprep.subr.mxu0 0.0
      %2448 = vmatpush1.msra.mxu0 0.0
      %2449 = vmatprep.subr.mxu0 0.0
      %2450 = vmatpush1.msra.mxu0 0.0
      %2451 = vmatprep.subr.mxu0 0.0
      %2452 = vmatpush1.msra.mxu0 0.0
      %2453 = vmatprep.subr.mxu0 0.0
      %2454 = vmatpush1.msra.mxu0 0.0
      %2455 = vmatprep.subr.mxu0 0.0
      %2456 = vmatpush1.msra.mxu0 0.0
      %2457 = vmatprep.subr.mxu0 0.0
      %2458 = vmatpush1.msra.mxu0 0.0
      %2459 = vmatprep.subr.mxu0 0.0
      %2460 = vmatpush1.msra.mxu0 0.0
      %2461 = vmatprep.subr.mxu0 0.0
      %2462 = vmatpush1.msra.mxu0 0.0
      %2463 = vmatprep.mubr.f32.mxu0 0.0
      %2464 = vmatmul.mubr.f32.gmra.mrb[0].mxu0 %v2304
      %v2465 = vpop.f32.mrb[0].mxu0
      %v2466 = vadd.f32 0.0, %v2465
      %v2467 = vpop.f32.mrb[0].mxu0
      %2468 = vmatprep.mubr.f32.mxu0 0.0
      %2469 = vmatmul.mubr.f32.gmra.mrb[0].mxu0 %v2307
      %v2470 = vpop.f32.mrb[0].mxu0
      %v2471 = vadd.f32 0.0, %v2470
      %v2472 = vpop.f32.mrb[0].mxu0
      %2473 = vmatprep.mubr.f32.mxu0 0.0
      %2474 = vmatmul.mubr.f32.gmra.mrb[0].mxu0 %v2310
      %v2475 = vpop.f32.mrb[0].mxu0
      %v2476 = vadd.f32 0.0, %v2475
      %v2477 = vpop.f32.mrb[0].mxu0
      %2478 = vmatprep.mubr.f32.mxu0 0.0
      %2479 = vmatmul.mubr.f32.gmra.mrb[0].mxu0 %v2313
      %v2480 = vpop.f32.mrb[0].mxu0
      %v2481 = vadd.f32 0.0, %v2480
      %v2482 = vpop.f32.mrb[0].mxu0
      %2483 = vmatprep.mubr.f32.mxu0 0.0
      %2484 = vmatmul.mubr.f32.gmra.mrb[0].mxu0 %v2316
      %v2485 = vpop.f32.mrb[0].mxu0
      %v2486 = vadd.f32 0.0, %v2485
      %v2487 = vpop.f32.mrb[0].mxu0
      %2488 = vmatprep.mubr.f32.mxu0 0.0
      %2489 = vmatmul.mubr.f32.gmra.mrb[0].mxu0 %v2319
      %v2490 = vpop.f32.mrb[0].mxu0
      %v2491 = vadd.f32 0.0, %v2490
      %v2492 = vpop.f32.mrb[0].mxu0
      %2493 = vmatprep.mubr.f32.mxu0 0.0
      %2494 = vmatmul.mubr.f32.gmra.mrb[0].mxu0 %v2322
      %v2495 = vpop.f32.mrb[0].mxu0
      %v2496 = vadd.f32 0.0, %v2495
      %v2497 = vpop.f32.mrb[0].mxu0
      %2498 = vmatprep.mubr.f32.mxu0 0.0
      %2499 = vmatmul.mubr.f32.gmra.mrb[0].mxu0 %v2325
      %v2500 = vpop.f32.mrb[0].mxu0
      %v2501 = vadd.f32 0.0, %v2500
      %v2502 = vpop.f32.mrb[0].mxu0
      %2503 = vmatprep.mubr.f32.mxu0 0.0
      %2504 = vmatmul.mubr.f32.gmra.mrb[0].mxu0 %v2328
      %v2505 = vpop.f32.mrb[0].mxu0
      %v2506 = vadd.f32 0.0, %v2505
      %v2507 = vpop.f32.mrb[0].mxu0
      %2508 = vmatprep.mubr.f32.mxu0 0.0
      %2509 = vmatmul.mubr.f32.gmra.mrb[0].mxu0 %v2331
      %v2510 = vpop.f32.mrb[0].mxu0
      %v2511 = vadd.f32 0.0, %v2510
      %v2512 = vpop.f32.mrb[0].mxu0
      %2513 = vmatprep.mubr.f32.mxu0 0.0
      %2514 = vmatmul.mubr.f32.gmra.mrb[0].mxu0 %v2334
      %v2515 = vpop.f32.mrb[0].mxu0
      %v2516 = vadd.f32 0.0, %v2515
      %v2517 = vpop.f32.mrb[0].mxu0
      %2518 = vmatprep.mubr.f32.mxu0 0.0
      %2519 = vmatmul.mubr.f32.gmra.mrb[0].mxu0 %v2337
      %v2520 = vpop.f32.mrb[0].mxu0
      %v2521 = vadd.f32 0.0, %v2520
      %v2522 = vpop.f32.mrb[0].mxu0
      %2523 = vmatprep.mubr.f32.mxu0 0.0
      %2524 = vmatmul.mubr.f32.gmra.mrb[0].mxu0 %v2340
      %v2525 = vpop.f32.mrb[0].mxu0
      %v2526 = vadd.f32 0.0, %v2525
      %v2527 = vpop.f32.mrb[0].mxu0
      %2528 = vmatprep.mubr.f32.mxu0 0.0
      %2529 = vmatmul.mubr.f32.gmra.mrb[0].mxu0 %v2343
      %v2530 = vpop.f32.mrb[0].mxu0
      %v2531 = vadd.f32 0.0, %v2530
      %v2532 = vpop.f32.mrb[0].mxu0
      %2533 = vmatprep.mubr.f32.mxu0 0.0
      %2534 = vmatmul.mubr.f32.gmra.mrb[0].mxu0 %v2346
      %v2535 = vpop.f32.mrb[0].mxu0
      %v2536 = vadd.f32 0.0, %v2535
      %v2537 = vpop.f32.mrb[0].mxu0
      %2538 = vmatprep.mubr.f32.mxu0 0.0
      %2539 = vmatmul.mubr.f32.gmra.mrb[0].mxu0 %v2349
      %v2540 = vpop.f32.mrb[0].mxu0
      %v2541 = vadd.f32 0.0, %v2540
      %v2542 = vpop.f32.mrb[0].mxu0
      %2543 = vmatprep.mubr.f32.mxu0 0.0
      %2544 = vmatmul.mubr.f32.gmra.mrb[0].mxu0 %v2352
      %v2545 = vpop.f32.mrb[0].mxu0
      %v2546 = vadd.f32 0.0, %v2545
      %v2547 = vpop.f32.mrb[0].mxu0
      %2548 = vmatprep.mubr.f32.mxu0 0.0
      %2549 = vmatmul.mubr.f32.gmra.mrb[0].mxu0 %v2355
      %v2550 = vpop.f32.mrb[0].mxu0
      %v2551 = vadd.f32 0.0, %v2550
      %v2552 = vpop.f32.mrb[0].mxu0
      %2553 = vmatprep.mubr.f32.mxu0 0.0
      %2554 = vmatmul.mubr.f32.gmra.mrb[0].mxu0 %v2358
      %v2555 = vpop.f32.mrb[0].mxu0
      %v2556 = vadd.f32 0.0, %v2555
      %v2557 = vpop.f32.mrb[0].mxu0
      %2558 = vmatprep.mubr.f32.mxu0 0.0
      %2559 = vmatmul.mubr.f32.gmra.mrb[0].mxu0 %v2361
      %v2560 = vpop.f32.mrb[0].mxu0
      %v2561 = vadd.f32 0.0, %v2560
      %v2562 = vpop.f32.mrb[0].mxu0
      %2563 = vmatprep.mubr.f32.mxu0 0.0
      %2564 = vmatmul.mubr.f32.gmra.mrb[0].mxu0 %v2364
      %v2565 = vpop.f32.mrb[0].mxu0
      %v2566 = vadd.f32 0.0, %v2565
      %v2567 = vpop.f32.mrb[0].mxu0
      %2568 = vmatprep.mubr.f32.mxu0 0.0
      %2569 = vmatmul.mubr.f32.gmra.mrb[0].mxu0 %v2367
      %v2570 = vpop.f32.mrb[0].mxu0
      %v2571 = vadd.f32 0.0, %v2570
      %v2572 = vpop.f32.mrb[0].mxu0
      %2573 = vmatprep.mubr.f32.mxu0 0.0
      %2574 = vmatmul.mubr.f32.gmra.mrb[0].mxu0 %v2370
      %v2575 = vpop.f32.mrb[0].mxu0
      %v2576 = vadd.f32 0.0, %v2575
      %v2577 = vpop.f32.mrb[0].mxu0
      %2578 = vmatprep.mubr.f32.mxu0 0.0
      %2579 = vmatmul.mubr.f32.gmra.mrb[0].mxu0 %v2373
      %v2580 = vpop.f32.mrb[0].mxu0
      %v2581 = vadd.f32 0.0, %v2580
      %v2582 = vpop.f32.mrb[0].mxu0
      %2583 = vmatprep.mubr.f32.mxu0 0.0
      %2584 = vmatmul.mubr.f32.gmra.mrb[0].mxu0 %v2376
      %v2585 = vpop.f32.mrb[0].mxu0
      %v2586 = vadd.f32 0.0, %v2585
      %v2587 = vpop.f32.mrb[0].mxu0
      %2588 = vmatprep.mubr.f32.mxu0 0.0
      %2589 = vmatmul.mubr.f32.gmra.mrb[0].mxu0 %v2379
      %v2590 = vpop.f32.mrb[0].mxu0
      %v2591 = vadd.f32 0.0, %v2590
      %v2592 = vpop.f32.mrb[0].mxu0
      %2593 = vmatprep.mubr.f32.mxu0 0.0
      %2594 = vmatmul.mubr.f32.gmra.mrb[0].mxu0 %v2382
      %v2595 = vpop.f32.mrb[0].mxu0
      %v2596 = vadd.f32 0.0, %v2595
      %v2597 = vpop.f32.mrb[0].mxu0
      %2598 = vmatprep.mubr.f32.mxu0 0.0
      %2599 = vmatmul.mubr.f32.gmra.mrb[0].mxu0 %v2385
      %v2600 = vpop.f32.mrb[0].mxu0
      %v2601 = vadd.f32 0.0, %v2600
      %v2602 = vpop.f32.mrb[0].mxu0
      %2603 = vmatprep.mubr.f32.mxu0 0.0
      %2604 = vmatmul.mubr.f32.gmra.mrb[0].mxu0 %v2388
      %v2605 = vpop.f32.mrb[0].mxu0
      %v2606 = vadd.f32 0.0, %v2605
      %v2607 = vpop.f32.mrb[0].mxu0
      %2608 = vmatprep.mubr.f32.mxu0 0.0
      %2609 = vmatmul.mubr.f32.gmra.mrb[0].mxu0 %v2391
      %v2610 = vpop.f32.mrb[0].mxu0
      %v2611 = vadd.f32 0.0, %v2610
      %v2612 = vpop.f32.mrb[0].mxu0
      %2613 = vmatprep.mubr.f32.mxu0 0.0
      %2614 = vmatmul.mubr.f32.gmra.mrb[0].mxu0 %v2394
      %v2615 = vpop.f32.mrb[0].mxu0
      %v2616 = vadd.f32 0.0, %v2615
      %v2617 = vpop.f32.mrb[0].mxu0
      %2618 = vmatprep.mubr.f32.mxu0 0.0
      %2619 = vmatmul.mubr.f32.gmra.mrb[0].mxu0 %v2397
      %v2620 = vpop.f32.mrb[0].mxu0
      %v2621 = vadd.f32 0.0, %v2620
      %v2622 = vpop.f32.mrb[0].mxu0
      %2623 = vdwg.mxu0
      %v2624 = vadd.f32 %v2236, %v2466
      %v2625 = vadd.f32 %v2237, %v2471
      %v2626 = vadd.f32 %v2238, %v2476
      %v2627 = vadd.f32 %v2239, %v2481
      %v2628 = vadd.f32 %v2240, %v2486
      %v2629 = vadd.f32 %v2241, %v2491
      %v2630 = vadd.f32 %v2242, %v2496
      %v2631 = vadd.f32 %v2243, %v2501
      %v2632 = vadd.f32 %v2244, %v2506
      %v2633 = vadd.f32 %v2245, %v2511
      %v2634 = vadd.f32 %v2246, %v2516
      %v2635 = vadd.f32 %v2247, %v2521
      %v2636 = vadd.f32 %v2248, %v2526
      %v2637 = vadd.f32 %v2249, %v2531
      %v2638 = vadd.f32 %v2250, %v2536
      %v2639 = vadd.f32 %v2251, %v2541
      %v2640 = vadd.f32 %v2252, %v2546
      %v2641 = vadd.f32 %v2253, %v2551
      %v2642 = vadd.f32 %v2254, %v2556
      %v2643 = vadd.f32 %v2255, %v2561
      %v2644 = vadd.f32 %v2256, %v2566
      %v2645 = vadd.f32 %v2257, %v2571
      %v2646 = vadd.f32 %v2258, %v2576
      %v2647 = vadd.f32 %v2259, %v2581
      %v2648 = vadd.f32 %v2260, %v2586
      %v2649 = vadd.f32 %v2261, %v2591
      %v2650 = vadd.f32 %v2262, %v2596
      %v2651 = vadd.f32 %v2263, %v2601
      %v2652 = vadd.f32 %v2264, %v2606
      %v2653 = vadd.f32 %v2265, %v2611
      %v2654 = vadd.f32 %v2266, %v2616
      %v2655 = vadd.f32 %v2267, %v2621
      %s2656 = scalar_lea.vmem [#allocation2], 32
      %v2657 = vld [vmem:[%s2656] sm:$0xff]
      %v2658 = vld [vmem:[%s2656 + $0x8] sm:$0xff]
      %v2659 = vld [vmem:[%s2656 + $0x10] sm:$0xff]
      %v2660 = vld [vmem:[%s2656 + $0x18] sm:$0xff]
      %v2661 = vld [vmem:[%s2656 + $0x20] sm:$0xff]
      %v2662 = vld [vmem:[%s2656 + $0x28] sm:$0xff]
      %v2663 = vld [vmem:[%s2656 + $0x30] sm:$0xff]
      %v2664 = vld [vmem:[%s2656 + $0x38] sm:$0xff]
      %v2665 = vld [vmem:[%s2656 + $0x40] sm:$0xff]
      %v2666 = vld [vmem:[%s2656 + $0x48] sm:$0xff]
      %v2667 = vld [vmem:[%s2656 + $0x50] sm:$0xff]
      %v2668 = vld [vmem:[%s2656 + $0x58] sm:$0xff]
      %v2669 = vld [vmem:[%s2656 + $0x60] sm:$0xff]
      %v2670 = vld [vmem:[%s2656 + $0x68] sm:$0xff]
      %v2671 = vld [vmem:[%s2656 + $0x70] sm:$0xff]
      %v2672 = vld [vmem:[%s2656 + $0x78] sm:$0xff]
      %v2673 = vld [vmem:[%s2656 + $0x80] sm:$0xff]
      %v2674 = vld [vmem:[%s2656 + $0x88] sm:$0xff]
      %v2675 = vld [vmem:[%s2656 + $0x90] sm:$0xff]
      %v2676 = vld [vmem:[%s2656 + $0x98] sm:$0xff]
      %v2677 = vld [vmem:[%s2656 + $0xa0] sm:$0xff]
      %v2678 = vld [vmem:[%s2656 + $0xa8] sm:$0xff]
      %v2679 = vld [vmem:[%s2656 + $0xb0] sm:$0xff]
      %v2680 = vld [vmem:[%s2656 + $0xb8] sm:$0xff]
      %v2681 = vld [vmem:[%s2656 + $0xc0] sm:$0xff]
      %v2682 = vld [vmem:[%s2656 + $0xc8] sm:$0xff]
      %v2683 = vld [vmem:[%s2656 + $0xd0] sm:$0xff]
      %v2684 = vld [vmem:[%s2656 + $0xd8] sm:$0xff]
      %v2685 = vld [vmem:[%s2656 + $0xe0] sm:$0xff]
      %v2686 = vld [vmem:[%s2656 + $0xe8] sm:$0xff]
      %v2687 = vld [vmem:[%s2656 + $0xf0] sm:$0xff]
      %v2688 = vld [vmem:[%s2656 + $0xf8] sm:$0xff]
      %s2689 = scalar_lea.vmem %s1, 96
      %v2690 = vld [vmem:[%s2689] sm:$0xff]
      %v2691 = vld [vmem:[%s2689 + $0x8] sm:$0xff]
      %v2693 = vsel %vm144, %v2657, 0
      %v2696 = vsel %vm144, %v2658, 0
      %v2699 = vsel %vm144, %v2659, 0
      %v2702 = vsel %vm144, %v2660, 0
      %v2705 = vsel %vm144, %v2661, 0
      %v2708 = vsel %vm144, %v2662, 0
      %v2711 = vsel %vm144, %v2663, 0
      %v2714 = vsel %vm144, %v2664, 0
      %v2717 = vsel %vm144, %v2665, 0
      %v2720 = vsel %vm144, %v2666, 0
      %v2723 = vsel %vm144, %v2667, 0
      %v2726 = vsel %vm144, %v2668, 0
      %v2729 = vsel %vm144, %v2669, 0
      %v2732 = vsel %vm144, %v2670, 0
      %v2735 = vsel %vm144, %v2671, 0
      %v2738 = vsel %vm144, %v2672, 0
      %v2741 = vsel %vm144, %v2673, 0
      %v2744 = vsel %vm144, %v2674, 0
      %v2747 = vsel %vm144, %v2675, 0
      %v2750 = vsel %vm144, %v2676, 0
      %v2753 = vsel %vm144, %v2677, 0
      %v2756 = vsel %vm144, %v2678, 0
      %v2759 = vsel %vm144, %v2679, 0
      %v2762 = vsel %vm144, %v2680, 0
      %v2765 = vsel %vm144, %v2681, 0
      %v2768 = vsel %vm144, %v2682, 0
      %v2771 = vsel %vm144, %v2683, 0
      %v2774 = vsel %vm144, %v2684, 0
      %v2777 = vsel %vm144, %v2685, 0
      %v2780 = vsel %vm144, %v2686, 0
      %v2783 = vsel %vm144, %v2687, 0
      %v2786 = vsel %vm144, %v2688, 0
      %2788 = vmatprep.subr.mxu0 0.0
      %2789 = vmatpush1.msra.mxu0 %v2690
      %2790 = vmatprep.subr.mxu0 0.0
      %2791 = vmatpush1.msra.mxu0 %v2691
      %2792 = vmatprep.subr.mxu0 0.0
      %2793 = vmatpush1.msra.mxu0 0.0
      %2794 = vmatprep.subr.mxu0 0.0
      %2795 = vmatpush1.msra.mxu0 0.0
      %2796 = vmatprep.subr.mxu0 0.0
      %2797 = vmatpush1.msra.mxu0 0.0
      %2798 = vmatprep.subr.mxu0 0.0
      %2799 = vmatpush1.msra.mxu0 0.0
      %2800 = vmatprep.subr.mxu0 0.0
      %2801 = vmatpush1.msra.mxu0 0.0
      %2802 = vmatprep.subr.mxu0 0.0
      %2803 = vmatpush1.msra.mxu0 0.0
      %2804 = vmatprep.subr.mxu0 0.0
      %2805 = vmatpush1.msra.mxu0 0.0
      %2806 = vmatprep.subr.mxu0 0.0
      %2807 = vmatpush1.msra.mxu0 0.0
      %2808 = vmatprep.subr.mxu0 0.0
      %2809 = vmatpush1.msra.mxu0 0.0
      %2810 = vmatprep.subr.mxu0 0.0
      %2811 = vmatpush1.msra.mxu0 0.0
      %2812 = vmatprep.subr.mxu0 0.0
      %2813 = vmatpush1.msra.mxu0 0.0
      %2814 = vmatprep.subr.mxu0 0.0
      %2815 = vmatpush1.msra.mxu0 0.0
      %2816 = vmatprep.subr.mxu0 0.0
      %2817 = vmatpush1.msra.mxu0 0.0
      %2818 = vmatprep.subr.mxu0 0.0
      %2819 = vmatpush1.msra.mxu0 0.0
      %2820 = vmatprep.subr.mxu0 0.0
      %2821 = vmatpush1.msra.mxu0 0.0
      %2822 = vmatprep.subr.mxu0 0.0
      %2823 = vmatpush1.msra.mxu0 0.0
      %2824 = vmatprep.subr.mxu0 0.0
      %2825 = vmatpush1.msra.mxu0 0.0
      %2826 = vmatprep.subr.mxu0 0.0
      %2827 = vmatpush1.msra.mxu0 0.0
      %2828 = vmatprep.subr.mxu0 0.0
      %2829 = vmatpush1.msra.mxu0 0.0
      %2830 = vmatprep.subr.mxu0 0.0
      %2831 = vmatpush1.msra.mxu0 0.0
      %2832 = vmatprep.subr.mxu0 0.0
      %2833 = vmatpush1.msra.mxu0 0.0
      %2834 = vmatprep.subr.mxu0 0.0
      %2835 = vmatpush1.msra.mxu0 0.0
      %2836 = vmatprep.subr.mxu0 0.0
      %2837 = vmatpush1.msra.mxu0 0.0
      %2838 = vmatprep.subr.mxu0 0.0
      %2839 = vmatpush1.msra.mxu0 0.0
      %2840 = vmatprep.subr.mxu0 0.0
      %2841 = vmatpush1.msra.mxu0 0.0
      %2842 = vmatprep.subr.mxu0 0.0
      %2843 = vmatpush1.msra.mxu0 0.0
      %2844 = vmatprep.subr.mxu0 0.0
      %2845 = vmatpush1.msra.mxu0 0.0
      %2846 = vmatprep.subr.mxu0 0.0
      %2847 = vmatpush1.msra.mxu0 0.0
      %2848 = vmatprep.subr.mxu0 0.0
      %2849 = vmatpush1.msra.mxu0 0.0
      %2850 = vmatprep.subr.mxu0 0.0
      %2851 = vmatpush1.msra.mxu0 0.0
      %2852 = vmatprep.mubr.f32.mxu0 0.0
      %2853 = vmatmul.mubr.f32.gmra.mrb[0].mxu0 %v2693
      %v2854 = vpop.f32.mrb[0].mxu0
      %v2855 = vadd.f32 0.0, %v2854
      %v2856 = vpop.f32.mrb[0].mxu0
      %2857 = vmatprep.mubr.f32.mxu0 0.0
      %2858 = vmatmul.mubr.f32.gmra.mrb[0].mxu0 %v2696
      %v2859 = vpop.f32.mrb[0].mxu0
      %v2860 = vadd.f32 0.0, %v2859
      %v2861 = vpop.f32.mrb[0].mxu0
      %2862 = vmatprep.mubr.f32.mxu0 0.0
      %2863 = vmatmul.mubr.f32.gmra.mrb[0].mxu0 %v2699
      %v2864 = vpop.f32.mrb[0].mxu0
      %v2865 = vadd.f32 0.0, %v2864
      %v2866 = vpop.f32.mrb[0].mxu0
      %2867 = vmatprep.mubr.f32.mxu0 0.0
      %2868 = vmatmul.mubr.f32.gmra.mrb[0].mxu0 %v2702
      %v2869 = vpop.f32.mrb[0].mxu0
      %v2870 = vadd.f32 0.0, %v2869
      %v2871 = vpop.f32.mrb[0].mxu0
      %2872 = vmatprep.mubr.f32.mxu0 0.0
      %2873 = vmatmul.mubr.f32.gmra.mrb[0].mxu0 %v2705
      %v2874 = vpop.f32.mrb[0].mxu0
      %v2875 = vadd.f32 0.0, %v2874
      %v2876 = vpop.f32.mrb[0].mxu0
      %2877 = vmatprep.mubr.f32.mxu0 0.0
      %2878 = vmatmul.mubr.f32.gmra.mrb[0].mxu0 %v2708
      %v2879 = vpop.f32.mrb[0].mxu0
      %v2880 = vadd.f32 0.0, %v2879
      %v2881 = vpop.f32.mrb[0].mxu0
      %2882 = vmatprep.mubr.f32.mxu0 0.0
      %2883 = vmatmul.mubr.f32.gmra.mrb[0].mxu0 %v2711
      %v2884 = vpop.f32.mrb[0].mxu0
      %v2885 = vadd.f32 0.0, %v2884
      %v2886 = vpop.f32.mrb[0].mxu0
      %2887 = vmatprep.mubr.f32.mxu0 0.0
      %2888 = vmatmul.mubr.f32.gmra.mrb[0].mxu0 %v2714
      %v2889 = vpop.f32.mrb[0].mxu0
      %v2890 = vadd.f32 0.0, %v2889
      %v2891 = vpop.f32.mrb[0].mxu0
      %2892 = vmatprep.mubr.f32.mxu0 0.0
      %2893 = vmatmul.mubr.f32.gmra.mrb[0].mxu0 %v2717
      %v2894 = vpop.f32.mrb[0].mxu0
      %v2895 = vadd.f32 0.0, %v2894
      %v2896 = vpop.f32.mrb[0].mxu0
      %2897 = vmatprep.mubr.f32.mxu0 0.0
      %2898 = vmatmul.mubr.f32.gmra.mrb[0].mxu0 %v2720
      %v2899 = vpop.f32.mrb[0].mxu0
      %v2900 = vadd.f32 0.0, %v2899
      %v2901 = vpop.f32.mrb[0].mxu0
      %2902 = vmatprep.mubr.f32.mxu0 0.0
      %2903 = vmatmul.mubr.f32.gmra.mrb[0].mxu0 %v2723
      %v2904 = vpop.f32.mrb[0].mxu0
      %v2905 = vadd.f32 0.0, %v2904
      %v2906 = vpop.f32.mrb[0].mxu0
      %2907 = vmatprep.mubr.f32.mxu0 0.0
      %2908 = vmatmul.mubr.f32.gmra.mrb[0].mxu0 %v2726
      %v2909 = vpop.f32.mrb[0].mxu0
      %v2910 = vadd.f32 0.0, %v2909
      %v2911 = vpop.f32.mrb[0].mxu0
      %2912 = vmatprep.mubr.f32.mxu0 0.0
      %2913 = vmatmul.mubr.f32.gmra.mrb[0].mxu0 %v2729
      %v2914 = vpop.f32.mrb[0].mxu0
      %v2915 = vadd.f32 0.0, %v2914
      %v2916 = vpop.f32.mrb[0].mxu0
      %2917 = vmatprep.mubr.f32.mxu0 0.0
      %2918 = vmatmul.mubr.f32.gmra.mrb[0].mxu0 %v2732
      %v2919 = vpop.f32.mrb[0].mxu0
      %v2920 = vadd.f32 0.0, %v2919
      %v2921 = vpop.f32.mrb[0].mxu0
      %2922 = vmatprep.mubr.f32.mxu0 0.0
      %2923 = vmatmul.mubr.f32.gmra.mrb[0].mxu0 %v2735
      %v2924 = vpop.f32.mrb[0].mxu0
      %v2925 = vadd.f32 0.0, %v2924
      %v2926 = vpop.f32.mrb[0].mxu0
      %2927 = vmatprep.mubr.f32.mxu0 0.0
      %2928 = vmatmul.mubr.f32.gmra.mrb[0].mxu0 %v2738
      %v2929 = vpop.f32.mrb[0].mxu0
      %v2930 = vadd.f32 0.0, %v2929
      %v2931 = vpop.f32.mrb[0].mxu0
      %2932 = vmatprep.mubr.f32.mxu0 0.0
      %2933 = vmatmul.mubr.f32.gmra.mrb[0].mxu0 %v2741
      %v2934 = vpop.f32.mrb[0].mxu0
      %v2935 = vadd.f32 0.0, %v2934
      %v2936 = vpop.f32.mrb[0].mxu0
      %2937 = vmatprep.mubr.f32.mxu0 0.0
      %2938 = vmatmul.mubr.f32.gmra.mrb[0].mxu0 %v2744
      %v2939 = vpop.f32.mrb[0].mxu0
      %v2940 = vadd.f32 0.0, %v2939
      %v2941 = vpop.f32.mrb[0].mxu0
      %2942 = vmatprep.mubr.f32.mxu0 0.0
      %2943 = vmatmul.mubr.f32.gmra.mrb[0].mxu0 %v2747
      %v2944 = vpop.f32.mrb[0].mxu0
      %v2945 = vadd.f32 0.0, %v2944
      %v2946 = vpop.f32.mrb[0].mxu0
      %2947 = vmatprep.mubr.f32.mxu0 0.0
      %2948 = vmatmul.mubr.f32.gmra.mrb[0].mxu0 %v2750
      %v2949 = vpop.f32.mrb[0].mxu0
      %v2950 = vadd.f32 0.0, %v2949
      %v2951 = vpop.f32.mrb[0].mxu0
      %2952 = vmatprep.mubr.f32.mxu0 0.0
      %2953 = vmatmul.mubr.f32.gmra.mrb[0].mxu0 %v2753
      %v2954 = vpop.f32.mrb[0].mxu0
      %v2955 = vadd.f32 0.0, %v2954
      %v2956 = vpop.f32.mrb[0].mxu0
      %2957 = vmatprep.mubr.f32.mxu0 0.0
      %2958 = vmatmul.mubr.f32.gmra.mrb[0].mxu0 %v2756
      %v2959 = vpop.f32.mrb[0].mxu0
      %v2960 = vadd.f32 0.0, %v2959
      %v2961 = vpop.f32.mrb[0].mxu0
      %2962 = vmatprep.mubr.f32.mxu0 0.0
      %2963 = vmatmul.mubr.f32.gmra.mrb[0].mxu0 %v2759
      %v2964 = vpop.f32.mrb[0].mxu0
      %v2965 = vadd.f32 0.0, %v2964
      %v2966 = vpop.f32.mrb[0].mxu0
      %2967 = vmatprep.mubr.f32.mxu0 0.0
      %2968 = vmatmul.mubr.f32.gmra.mrb[0].mxu0 %v2762
      %v2969 = vpop.f32.mrb[0].mxu0
      %v2970 = vadd.f32 0.0, %v2969
      %v2971 = vpop.f32.mrb[0].mxu0
      %2972 = vmatprep.mubr.f32.mxu0 0.0
      %2973 = vmatmul.mubr.f32.gmra.mrb[0].mxu0 %v2765
      %v2974 = vpop.f32.mrb[0].mxu0
      %v2975 = vadd.f32 0.0, %v2974
      %v2976 = vpop.f32.mrb[0].mxu0
      %2977 = vmatprep.mubr.f32.mxu0 0.0
      %2978 = vmatmul.mubr.f32.gmra.mrb[0].mxu0 %v2768
      %v2979 = vpop.f32.mrb[0].mxu0
      %v2980 = vadd.f32 0.0, %v2979
      %v2981 = vpop.f32.mrb[0].mxu0
      %2982 = vmatprep.mubr.f32.mxu0 0.0
      %2983 = vmatmul.mubr.f32.gmra.mrb[0].mxu0 %v2771
      %v2984 = vpop.f32.mrb[0].mxu0
      %v2985 = vadd.f32 0.0, %v2984
      %v2986 = vpop.f32.mrb[0].mxu0
      %2987 = vmatprep.mubr.f32.mxu0 0.0
      %2988 = vmatmul.mubr.f32.gmra.mrb[0].mxu0 %v2774
      %v2989 = vpop.f32.mrb[0].mxu0
      %v2990 = vadd.f32 0.0, %v2989
      %v2991 = vpop.f32.mrb[0].mxu0
      %2992 = vmatprep.mubr.f32.mxu0 0.0
      %2993 = vmatmul.mubr.f32.gmra.mrb[0].mxu0 %v2777
      %v2994 = vpop.f32.mrb[0].mxu0
      %v2995 = vadd.f32 0.0, %v2994
      %v2996 = vpop.f32.mrb[0].mxu0
      %2997 = vmatprep.mubr.f32.mxu0 0.0
      %2998 = vmatmul.mubr.f32.gmra.mrb[0].mxu0 %v2780
      %v2999 = vpop.f32.mrb[0].mxu0
      %v3000 = vadd.f32 0.0, %v2999
      %v3001 = vpop.f32.mrb[0].mxu0
      %3002 = vmatprep.mubr.f32.mxu0 0.0
      %3003 = vmatmul.mubr.f32.gmra.mrb[0].mxu0 %v2783
      %v3004 = vpop.f32.mrb[0].mxu0
      %v3005 = vadd.f32 0.0, %v3004
      %v3006 = vpop.f32.mrb[0].mxu0
      %3007 = vmatprep.mubr.f32.mxu0 0.0
      %3008 = vmatmul.mubr.f32.gmra.mrb[0].mxu0 %v2786
      %v3009 = vpop.f32.mrb[0].mxu0
      %v3010 = vadd.f32 0.0, %v3009
      %v3011 = vpop.f32.mrb[0].mxu0
      %3012 = vdwg.mxu0
      %v3013 = vadd.f32 %v2624, %v2855
      %v3014 = vadd.f32 %v2625, %v2860
      %v3015 = vadd.f32 %v2626, %v2865
      %v3016 = vadd.f32 %v2627, %v2870
      %v3017 = vadd.f32 %v2628, %v2875
      %v3018 = vadd.f32 %v2629, %v2880
      %v3019 = vadd.f32 %v2630, %v2885
      %v3020 = vadd.f32 %v2631, %v2890
      %v3021 = vadd.f32 %v2632, %v2895
      %v3022 = vadd.f32 %v2633, %v2900
      %v3023 = vadd.f32 %v2634, %v2905
      %v3024 = vadd.f32 %v2635, %v2910
      %v3025 = vadd.f32 %v2636, %v2915
      %v3026 = vadd.f32 %v2637, %v2920
      %v3027 = vadd.f32 %v2638, %v2925
      %v3028 = vadd.f32 %v2639, %v2930
      %v3029 = vadd.f32 %v2640, %v2935
      %v3030 = vadd.f32 %v2641, %v2940
      %v3031 = vadd.f32 %v2642, %v2945
      %v3032 = vadd.f32 %v2643, %v2950
      %v3033 = vadd.f32 %v2644, %v2955
      %v3034 = vadd.f32 %v2645, %v2960
      %v3035 = vadd.f32 %v2646, %v2965
      %v3036 = vadd.f32 %v2647, %v2970
      %v3037 = vadd.f32 %v2648, %v2975
      %v3038 = vadd.f32 %v2649, %v2980
      %v3039 = vadd.f32 %v2650, %v2985
      %v3040 = vadd.f32 %v2651, %v2990
      %v3041 = vadd.f32 %v2652, %v2995
      %v3042 = vadd.f32 %v2653, %v3000
      %v3043 = vadd.f32 %v2654, %v3005
      %v3044 = vadd.f32 %v2655, %v3010
      %s3045 = scalar_lea.vmem [#allocation2], 320
      %v3046 = vld [vmem:[%s3045] sm:$0xff]
      %v3047 = vld [vmem:[%s3045 + $0x8] sm:$0xff]
      %v3048 = vld [vmem:[%s3045 + $0x10] sm:$0xff]
      %v3049 = vld [vmem:[%s3045 + $0x18] sm:$0xff]
      %v3050 = vld [vmem:[%s3045 + $0x20] sm:$0xff]
      %v3051 = vld [vmem:[%s3045 + $0x28] sm:$0xff]
      %v3052 = vld [vmem:[%s3045 + $0x30] sm:$0xff]
      %v3053 = vld [vmem:[%s3045 + $0x38] sm:$0xff]
      %v3054 = vld [vmem:[%s3045 + $0x40] sm:$0xff]
      %v3055 = vld [vmem:[%s3045 + $0x48] sm:$0xff]
      %v3056 = vld [vmem:[%s3045 + $0x50] sm:$0xff]
      %v3057 = vld [vmem:[%s3045 + $0x58] sm:$0xff]
      %v3058 = vld [vmem:[%s3045 + $0x60] sm:$0xff]
      %v3059 = vld [vmem:[%s3045 + $0x68] sm:$0xff]
      %v3060 = vld [vmem:[%s3045 + $0x70] sm:$0xff]
      %v3061 = vld [vmem:[%s3045 + $0x78] sm:$0xff]
      %v3062 = vld [vmem:[%s3045 + $0x80] sm:$0xff]
      %v3063 = vld [vmem:[%s3045 + $0x88] sm:$0xff]
      %v3064 = vld [vmem:[%s3045 + $0x90] sm:$0xff]
      %v3065 = vld [vmem:[%s3045 + $0x98] sm:$0xff]
      %v3066 = vld [vmem:[%s3045 + $0xa0] sm:$0xff]
      %v3067 = vld [vmem:[%s3045 + $0xa8] sm:$0xff]
      %v3068 = vld [vmem:[%s3045 + $0xb0] sm:$0xff]
      %v3069 = vld [vmem:[%s3045 + $0xb8] sm:$0xff]
      %v3070 = vld [vmem:[%s3045 + $0xc0] sm:$0xff]
      %v3071 = vld [vmem:[%s3045 + $0xc8] sm:$0xff]
      %v3072 = vld [vmem:[%s3045 + $0xd0] sm:$0xff]
      %v3073 = vld [vmem:[%s3045 + $0xd8] sm:$0xff]
      %v3074 = vld [vmem:[%s3045 + $0xe0] sm:$0xff]
      %v3075 = vld [vmem:[%s3045 + $0xe8] sm:$0xff]
      %v3076 = vld [vmem:[%s3045 + $0xf0] sm:$0xff]
      %v3077 = vld [vmem:[%s3045 + $0xf8] sm:$0xff]
      %s3078 = scalar_lea.vmem %s1, 112
      %v3079 = vld [vmem:[%s3078] sm:$0xff]
      %v3080 = vld [vmem:[%s3078 + $0x8] sm:$0xff]
      %v3082 = vsel %vm144, %v3046, 0
      %v3085 = vsel %vm144, %v3047, 0
      %v3088 = vsel %vm144, %v3048, 0
      %v3091 = vsel %vm144, %v3049, 0
      %v3094 = vsel %vm144, %v3050, 0
      %v3097 = vsel %vm144, %v3051, 0
      %v3100 = vsel %vm144, %v3052, 0
      %v3103 = vsel %vm144, %v3053, 0
      %v3106 = vsel %vm144, %v3054, 0
      %v3109 = vsel %vm144, %v3055, 0
      %v3112 = vsel %vm144, %v3056, 0
      %v3115 = vsel %vm144, %v3057, 0
      %v3118 = vsel %vm144, %v3058, 0
      %v3121 = vsel %vm144, %v3059, 0
      %v3124 = vsel %vm144, %v3060, 0
      %v3127 = vsel %vm144, %v3061, 0
      %v3130 = vsel %vm144, %v3062, 0
      %v3133 = vsel %vm144, %v3063, 0
      %v3136 = vsel %vm144, %v3064, 0
      %v3139 = vsel %vm144, %v3065, 0
      %v3142 = vsel %vm144, %v3066, 0
      %v3145 = vsel %vm144, %v3067, 0
      %v3148 = vsel %vm144, %v3068, 0
      %v3151 = vsel %vm144, %v3069, 0
      %v3154 = vsel %vm144, %v3070, 0
      %v3157 = vsel %vm144, %v3071, 0
      %v3160 = vsel %vm144, %v3072, 0
      %v3163 = vsel %vm144, %v3073, 0
      %v3166 = vsel %vm144, %v3074, 0
      %v3169 = vsel %vm144, %v3075, 0
      %v3172 = vsel %vm144, %v3076, 0
      %v3175 = vsel %vm144, %v3077, 0
      %3177 = vmatprep.subr.mxu0 0.0
      %3178 = vmatpush1.msra.mxu0 %v3079
      %3179 = vmatprep.subr.mxu0 0.0
      %3180 = vmatpush1.msra.mxu0 %v3080
      %3181 = vmatprep.subr.mxu0 0.0
      %3182 = vmatpush1.msra.mxu0 0.0
      %3183 = vmatprep.subr.mxu0 0.0
      %3184 = vmatpush1.msra.mxu0 0.0
      %3185 = vmatprep.subr.mxu0 0.0
      %3186 = vmatpush1.msra.mxu0 0.0
      %3187 = vmatprep.subr.mxu0 0.0
      %3188 = vmatpush1.msra.mxu0 0.0
      %3189 = vmatprep.subr.mxu0 0.0
      %3190 = vmatpush1.msra.mxu0 0.0
      %3191 = vmatprep.subr.mxu0 0.0
      %3192 = vmatpush1.msra.mxu0 0.0
      %3193 = vmatprep.subr.mxu0 0.0
      %3194 = vmatpush1.msra.mxu0 0.0
      %3195 = vmatprep.subr.mxu0 0.0
      %3196 = vmatpush1.msra.mxu0 0.0
      %3197 = vmatprep.subr.mxu0 0.0
      %3198 = vmatpush1.msra.mxu0 0.0
      %3199 = vmatprep.subr.mxu0 0.0
      %3200 = vmatpush1.msra.mxu0 0.0
      %3201 = vmatprep.subr.mxu0 0.0
      %3202 = vmatpush1.msra.mxu0 0.0
      %3203 = vmatprep.subr.mxu0 0.0
      %3204 = vmatpush1.msra.mxu0 0.0
      %3205 = vmatprep.subr.mxu0 0.0
      %3206 = vmatpush1.msra.mxu0 0.0
      %3207 = vmatprep.subr.mxu0 0.0
      %3208 = vmatpush1.msra.mxu0 0.0
      %3209 = vmatprep.subr.mxu0 0.0
      %3210 = vmatpush1.msra.mxu0 0.0
      %3211 = vmatprep.subr.mxu0 0.0
      %3212 = vmatpush1.msra.mxu0 0.0
      %3213 = vmatprep.subr.mxu0 0.0
      %3214 = vmatpush1.msra.mxu0 0.0
      %3215 = vmatprep.subr.mxu0 0.0
      %3216 = vmatpush1.msra.mxu0 0.0
      %3217 = vmatprep.subr.mxu0 0.0
      %3218 = vmatpush1.msra.mxu0 0.0
      %3219 = vmatprep.subr.mxu0 0.0
      %3220 = vmatpush1.msra.mxu0 0.0
      %3221 = vmatprep.subr.mxu0 0.0
      %3222 = vmatpush1.msra.mxu0 0.0
      %3223 = vmatprep.subr.mxu0 0.0
      %3224 = vmatpush1.msra.mxu0 0.0
      %3225 = vmatprep.subr.mxu0 0.0
      %3226 = vmatpush1.msra.mxu0 0.0
      %3227 = vmatprep.subr.mxu0 0.0
      %3228 = vmatpush1.msra.mxu0 0.0
      %3229 = vmatprep.subr.mxu0 0.0
      %3230 = vmatpush1.msra.mxu0 0.0
      %3231 = vmatprep.subr.mxu0 0.0
      %3232 = vmatpush1.msra.mxu0 0.0
      %3233 = vmatprep.subr.mxu0 0.0
      %3234 = vmatpush1.msra.mxu0 0.0
      %3235 = vmatprep.subr.mxu0 0.0
      %3236 = vmatpush1.msra.mxu0 0.0
      %3237 = vmatprep.subr.mxu0 0.0
      %3238 = vmatpush1.msra.mxu0 0.0
      %3239 = vmatprep.subr.mxu0 0.0
      %3240 = vmatpush1.msra.mxu0 0.0
      %3241 = vmatprep.mubr.f32.mxu0 0.0
      %3242 = vmatmul.mubr.f32.gmra.mrb[0].mxu0 %v3082
      %v3243 = vpop.f32.mrb[0].mxu0
      %v3244 = vadd.f32 0.0, %v3243
      %v3245 = vpop.f32.mrb[0].mxu0
      %3246 = vmatprep.mubr.f32.mxu0 0.0
      %3247 = vmatmul.mubr.f32.gmra.mrb[0].mxu0 %v3085
      %v3248 = vpop.f32.mrb[0].mxu0
      %v3249 = vadd.f32 0.0, %v3248
      %v3250 = vpop.f32.mrb[0].mxu0
      %3251 = vmatprep.mubr.f32.mxu0 0.0
      %3252 = vmatmul.mubr.f32.gmra.mrb[0].mxu0 %v3088
      %v3253 = vpop.f32.mrb[0].mxu0
      %v3254 = vadd.f32 0.0, %v3253
      %v3255 = vpop.f32.mrb[0].mxu0
      %3256 = vmatprep.mubr.f32.mxu0 0.0
      %3257 = vmatmul.mubr.f32.gmra.mrb[0].mxu0 %v3091
      %v3258 = vpop.f32.mrb[0].mxu0
      %v3259 = vadd.f32 0.0, %v3258
      %v3260 = vpop.f32.mrb[0].mxu0
      %3261 = vmatprep.mubr.f32.mxu0 0.0
      %3262 = vmatmul.mubr.f32.gmra.mrb[0].mxu0 %v3094
      %v3263 = vpop.f32.mrb[0].mxu0
      %v3264 = vadd.f32 0.0, %v3263
      %v3265 = vpop.f32.mrb[0].mxu0
      %3266 = vmatprep.mubr.f32.mxu0 0.0
      %3267 = vmatmul.mubr.f32.gmra.mrb[0].mxu0 %v3097
      %v3268 = vpop.f32.mrb[0].mxu0
      %v3269 = vadd.f32 0.0, %v3268
      %v3270 = vpop.f32.mrb[0].mxu0
      %3271 = vmatprep.mubr.f32.mxu0 0.0
      %3272 = vmatmul.mubr.f32.gmra.mrb[0].mxu0 %v3100
      %v3273 = vpop.f32.mrb[0].mxu0
      %v3274 = vadd.f32 0.0, %v3273
      %v3275 = vpop.f32.mrb[0].mxu0
      %3276 = vmatprep.mubr.f32.mxu0 0.0
      %3277 = vmatmul.mubr.f32.gmra.mrb[0].mxu0 %v3103
      %v3278 = vpop.f32.mrb[0].mxu0
      %v3279 = vadd.f32 0.0, %v3278
      %v3280 = vpop.f32.mrb[0].mxu0
      %3281 = vmatprep.mubr.f32.mxu0 0.0
      %3282 = vmatmul.mubr.f32.gmra.mrb[0].mxu0 %v3106
      %v3283 = vpop.f32.mrb[0].mxu0
      %v3284 = vadd.f32 0.0, %v3283
      %v3285 = vpop.f32.mrb[0].mxu0
      %3286 = vmatprep.mubr.f32.mxu0 0.0
      %3287 = vmatmul.mubr.f32.gmra.mrb[0].mxu0 %v3109
      %v3288 = vpop.f32.mrb[0].mxu0
      %v3289 = vadd.f32 0.0, %v3288
      %v3290 = vpop.f32.mrb[0].mxu0
      %3291 = vmatprep.mubr.f32.mxu0 0.0
      %3292 = vmatmul.mubr.f32.gmra.mrb[0].mxu0 %v3112
      %v3293 = vpop.f32.mrb[0].mxu0
      %v3294 = vadd.f32 0.0, %v3293
      %v3295 = vpop.f32.mrb[0].mxu0
      %3296 = vmatprep.mubr.f32.mxu0 0.0
      %3297 = vmatmul.mubr.f32.gmra.mrb[0].mxu0 %v3115
      %v3298 = vpop.f32.mrb[0].mxu0
      %v3299 = vadd.f32 0.0, %v3298
      %v3300 = vpop.f32.mrb[0].mxu0
      %3301 = vmatprep.mubr.f32.mxu0 0.0
      %3302 = vmatmul.mubr.f32.gmra.mrb[0].mxu0 %v3118
      %v3303 = vpop.f32.mrb[0].mxu0
      %v3304 = vadd.f32 0.0, %v3303
      %v3305 = vpop.f32.mrb[0].mxu0
      %3306 = vmatprep.mubr.f32.mxu0 0.0
      %3307 = vmatmul.mubr.f32.gmra.mrb[0].mxu0 %v3121
      %v3308 = vpop.f32.mrb[0].mxu0
      %v3309 = vadd.f32 0.0, %v3308
      %v3310 = vpop.f32.mrb[0].mxu0
      %3311 = vmatprep.mubr.f32.mxu0 0.0
      %3312 = vmatmul.mubr.f32.gmra.mrb[0].mxu0 %v3124
      %v3313 = vpop.f32.mrb[0].mxu0
      %v3314 = vadd.f32 0.0, %v3313
      %v3315 = vpop.f32.mrb[0].mxu0
      %3316 = vmatprep.mubr.f32.mxu0 0.0
      %3317 = vmatmul.mubr.f32.gmra.mrb[0].mxu0 %v3127
      %v3318 = vpop.f32.mrb[0].mxu0
      %v3319 = vadd.f32 0.0, %v3318
      %v3320 = vpop.f32.mrb[0].mxu0
      %3321 = vmatprep.mubr.f32.mxu0 0.0
      %3322 = vmatmul.mubr.f32.gmra.mrb[0].mxu0 %v3130
      %v3323 = vpop.f32.mrb[0].mxu0
      %v3324 = vadd.f32 0.0, %v3323
      %v3325 = vpop.f32.mrb[0].mxu0
      %3326 = vmatprep.mubr.f32.mxu0 0.0
      %3327 = vmatmul.mubr.f32.gmra.mrb[0].mxu0 %v3133
      %v3328 = vpop.f32.mrb[0].mxu0
      %v3329 = vadd.f32 0.0, %v3328
      %v3330 = vpop.f32.mrb[0].mxu0
      %3331 = vmatprep.mubr.f32.mxu0 0.0
      %3332 = vmatmul.mubr.f32.gmra.mrb[0].mxu0 %v3136
      %v3333 = vpop.f32.mrb[0].mxu0
      %v3334 = vadd.f32 0.0, %v3333
      %v3335 = vpop.f32.mrb[0].mxu0
      %3336 = vmatprep.mubr.f32.mxu0 0.0
      %3337 = vmatmul.mubr.f32.gmra.mrb[0].mxu0 %v3139
      %v3338 = vpop.f32.mrb[0].mxu0
      %v3339 = vadd.f32 0.0, %v3338
      %v3340 = vpop.f32.mrb[0].mxu0
      %3341 = vmatprep.mubr.f32.mxu0 0.0
      %3342 = vmatmul.mubr.f32.gmra.mrb[0].mxu0 %v3142
      %v3343 = vpop.f32.mrb[0].mxu0
      %v3344 = vadd.f32 0.0, %v3343
      %v3345 = vpop.f32.mrb[0].mxu0
      %3346 = vmatprep.mubr.f32.mxu0 0.0
      %3347 = vmatmul.mubr.f32.gmra.mrb[0].mxu0 %v3145
      %v3348 = vpop.f32.mrb[0].mxu0
      %v3349 = vadd.f32 0.0, %v3348
      %v3350 = vpop.f32.mrb[0].mxu0
      %3351 = vmatprep.mubr.f32.mxu0 0.0
      %3352 = vmatmul.mubr.f32.gmra.mrb[0].mxu0 %v3148
      %v3353 = vpop.f32.mrb[0].mxu0
      %v3354 = vadd.f32 0.0, %v3353
      %v3355 = vpop.f32.mrb[0].mxu0
      %3356 = vmatprep.mubr.f32.mxu0 0.0
      %3357 = vmatmul.mubr.f32.gmra.mrb[0].mxu0 %v3151
      %v3358 = vpop.f32.mrb[0].mxu0
      %v3359 = vadd.f32 0.0, %v3358
      %v3360 = vpop.f32.mrb[0].mxu0
      %3361 = vmatprep.mubr.f32.mxu0 0.0
      %3362 = vmatmul.mubr.f32.gmra.mrb[0].mxu0 %v3154
      %v3363 = vpop.f32.mrb[0].mxu0
      %v3364 = vadd.f32 0.0, %v3363
      %v3365 = vpop.f32.mrb[0].mxu0
      %3366 = vmatprep.mubr.f32.mxu0 0.0
      %3367 = vmatmul.mubr.f32.gmra.mrb[0].mxu0 %v3157
      %v3368 = vpop.f32.mrb[0].mxu0
      %v3369 = vadd.f32 0.0, %v3368
      %v3370 = vpop.f32.mrb[0].mxu0
      %3371 = vmatprep.mubr.f32.mxu0 0.0
      %3372 = vmatmul.mubr.f32.gmra.mrb[0].mxu0 %v3160
      %v3373 = vpop.f32.mrb[0].mxu0
      %v3374 = vadd.f32 0.0, %v3373
      %v3375 = vpop.f32.mrb[0].mxu0
      %3376 = vmatprep.mubr.f32.mxu0 0.0
      %3377 = vmatmul.mubr.f32.gmra.mrb[0].mxu0 %v3163
      %v3378 = vpop.f32.mrb[0].mxu0
      %v3379 = vadd.f32 0.0, %v3378
      %v3380 = vpop.f32.mrb[0].mxu0
      %3381 = vmatprep.mubr.f32.mxu0 0.0
      %3382 = vmatmul.mubr.f32.gmra.mrb[0].mxu0 %v3166
      %v3383 = vpop.f32.mrb[0].mxu0
      %v3384 = vadd.f32 0.0, %v3383
      %v3385 = vpop.f32.mrb[0].mxu0
      %3386 = vmatprep.mubr.f32.mxu0 0.0
      %3387 = vmatmul.mubr.f32.gmra.mrb[0].mxu0 %v3169
      %v3388 = vpop.f32.mrb[0].mxu0
      %v3389 = vadd.f32 0.0, %v3388
      %v3390 = vpop.f32.mrb[0].mxu0
      %3391 = vmatprep.mubr.f32.mxu0 0.0
      %3392 = vmatmul.mubr.f32.gmra.mrb[0].mxu0 %v3172
      %v3393 = vpop.f32.mrb[0].mxu0
      %v3394 = vadd.f32 0.0, %v3393
      %v3395 = vpop.f32.mrb[0].mxu0
      %3396 = vmatprep.mubr.f32.mxu0 0.0
      %3397 = vmatmul.mubr.f32.gmra.mrb[0].mxu0 %v3175
      %v3398 = vpop.f32.mrb[0].mxu0
      %v3399 = vadd.f32 0.0, %v3398
      %v3400 = vpop.f32.mrb[0].mxu0
      %3401 = vdwg.mxu0
      %v3402 = vadd.f32 %v3013, %v3244
      %v3403 = vadd.f32 %v3014, %v3249
      %v3404 = vadd.f32 %v3015, %v3254
      %v3405 = vadd.f32 %v3016, %v3259
      %v3406 = vadd.f32 %v3017, %v3264
      %v3407 = vadd.f32 %v3018, %v3269
      %v3408 = vadd.f32 %v3019, %v3274
      %v3409 = vadd.f32 %v3020, %v3279
      %v3410 = vadd.f32 %v3021, %v3284
      %v3411 = vadd.f32 %v3022, %v3289
      %v3412 = vadd.f32 %v3023, %v3294
      %v3413 = vadd.f32 %v3024, %v3299
      %v3414 = vadd.f32 %v3025, %v3304
      %v3415 = vadd.f32 %v3026, %v3309
      %v3416 = vadd.f32 %v3027, %v3314
      %v3417 = vadd.f32 %v3028, %v3319
      %v3418 = vadd.f32 %v3029, %v3324
      %v3419 = vadd.f32 %v3030, %v3329
      %v3420 = vadd.f32 %v3031, %v3334
      %v3421 = vadd.f32 %v3032, %v3339
      %v3422 = vadd.f32 %v3033, %v3344
      %v3423 = vadd.f32 %v3034, %v3349
      %v3424 = vadd.f32 %v3035, %v3354
      %v3425 = vadd.f32 %v3036, %v3359
      %v3426 = vadd.f32 %v3037, %v3364
      %v3427 = vadd.f32 %v3038, %v3369
      %v3428 = vadd.f32 %v3039, %v3374
      %v3429 = vadd.f32 %v3040, %v3379
      %v3430 = vadd.f32 %v3041, %v3384
      %v3431 = vadd.f32 %v3042, %v3389
      %v3432 = vadd.f32 %v3043, %v3394
      %v3433 = vadd.f32 %v3044, %v3399
      %s3434 = scalar_lea.vmem [#allocation2], 608
      %v3435 = vld [vmem:[%s3434] sm:$0xff]
      %v3436 = vld [vmem:[%s3434 + $0x8] sm:$0xff]
      %v3437 = vld [vmem:[%s3434 + $0x10] sm:$0xff]
      %v3438 = vld [vmem:[%s3434 + $0x18] sm:$0xff]
      %v3439 = vld [vmem:[%s3434 + $0x20] sm:$0xff]
      %v3440 = vld [vmem:[%s3434 + $0x28] sm:$0xff]
      %v3441 = vld [vmem:[%s3434 + $0x30] sm:$0xff]
      %v3442 = vld [vmem:[%s3434 + $0x38] sm:$0xff]
      %v3443 = vld [vmem:[%s3434 + $0x40] sm:$0xff]
      %v3444 = vld [vmem:[%s3434 + $0x48] sm:$0xff]
      %v3445 = vld [vmem:[%s3434 + $0x50] sm:$0xff]
      %v3446 = vld [vmem:[%s3434 + $0x58] sm:$0xff]
      %v3447 = vld [vmem:[%s3434 + $0x60] sm:$0xff]
      %v3448 = vld [vmem:[%s3434 + $0x68] sm:$0xff]
      %v3449 = vld [vmem:[%s3434 + $0x70] sm:$0xff]
      %v3450 = vld [vmem:[%s3434 + $0x78] sm:$0xff]
      %v3451 = vld [vmem:[%s3434 + $0x80] sm:$0xff]
      %v3452 = vld [vmem:[%s3434 + $0x88] sm:$0xff]
      %v3453 = vld [vmem:[%s3434 + $0x90] sm:$0xff]
      %v3454 = vld [vmem:[%s3434 + $0x98] sm:$0xff]
      %v3455 = vld [vmem:[%s3434 + $0xa0] sm:$0xff]
      %v3456 = vld [vmem:[%s3434 + $0xa8] sm:$0xff]
      %v3457 = vld [vmem:[%s3434 + $0xb0] sm:$0xff]
      %v3458 = vld [vmem:[%s3434 + $0xb8] sm:$0xff]
      %v3459 = vld [vmem:[%s3434 + $0xc0] sm:$0xff]
      %v3460 = vld [vmem:[%s3434 + $0xc8] sm:$0xff]
      %v3461 = vld [vmem:[%s3434 + $0xd0] sm:$0xff]
      %v3462 = vld [vmem:[%s3434 + $0xd8] sm:$0xff]
      %v3463 = vld [vmem:[%s3434 + $0xe0] sm:$0xff]
      %v3464 = vld [vmem:[%s3434 + $0xe8] sm:$0xff]
      %v3465 = vld [vmem:[%s3434 + $0xf0] sm:$0xff]
      %v3466 = vld [vmem:[%s3434 + $0xf8] sm:$0xff]
      %s3467 = scalar_lea.vmem %s1, 128
      %v3468 = vld [vmem:[%s3467] sm:$0xff]
      %v3469 = vld [vmem:[%s3467 + $0x8] sm:$0xff]
      %v3471 = vsel %vm144, %v3435, 0
      %v3474 = vsel %vm144, %v3436, 0
      %v3477 = vsel %vm144, %v3437, 0
      %v3480 = vsel %vm144, %v3438, 0
      %v3483 = vsel %vm144, %v3439, 0
      %v3486 = vsel %vm144, %v3440, 0
      %v3489 = vsel %vm144, %v3441, 0
      %v3492 = vsel %vm144, %v3442, 0
      %v3495 = vsel %vm144, %v3443, 0
      %v3498 = vsel %vm144, %v3444, 0
      %v3501 = vsel %vm144, %v3445, 0
      %v3504 = vsel %vm144, %v3446, 0
      %v3507 = vsel %vm144, %v3447, 0
      %v3510 = vsel %vm144, %v3448, 0
      %v3513 = vsel %vm144, %v3449, 0
      %v3516 = vsel %vm144, %v3450, 0
      %v3519 = vsel %vm144, %v3451, 0
      %v3522 = vsel %vm144, %v3452, 0
      %v3525 = vsel %vm144, %v3453, 0
      %v3528 = vsel %vm144, %v3454, 0
      %v3531 = vsel %vm144, %v3455, 0
      %v3534 = vsel %vm144, %v3456, 0
      %v3537 = vsel %vm144, %v3457, 0
      %v3540 = vsel %vm144, %v3458, 0
      %v3543 = vsel %vm144, %v3459, 0
      %v3546 = vsel %vm144, %v3460, 0
      %v3549 = vsel %vm144, %v3461, 0
      %v3552 = vsel %vm144, %v3462, 0
      %v3555 = vsel %vm144, %v3463, 0
      %v3558 = vsel %vm144, %v3464, 0
      %v3561 = vsel %vm144, %v3465, 0
      %v3564 = vsel %vm144, %v3466, 0
      %3566 = vmatprep.subr.mxu0 0.0
      %3567 = vmatpush1.msra.mxu0 %v3468
      %3568 = vmatprep.subr.mxu0 0.0
      %3569 = vmatpush1.msra.mxu0 %v3469
      %3570 = vmatprep.subr.mxu0 0.0
      %3571 = vmatpush1.msra.mxu0 0.0
      %3572 = vmatprep.subr.mxu0 0.0
      %3573 = vmatpush1.msra.mxu0 0.0
      %3574 = vmatprep.subr.mxu0 0.0
      %3575 = vmatpush1.msra.mxu0 0.0
      %3576 = vmatprep.subr.mxu0 0.0
      %3577 = vmatpush1.msra.mxu0 0.0
      %3578 = vmatprep.subr.mxu0 0.0
      %3579 = vmatpush1.msra.mxu0 0.0
      %3580 = vmatprep.subr.mxu0 0.0
      %3581 = vmatpush1.msra.mxu0 0.0
      %3582 = vmatprep.subr.mxu0 0.0
      %3583 = vmatpush1.msra.mxu0 0.0
      %3584 = vmatprep.subr.mxu0 0.0
      %3585 = vmatpush1.msra.mxu0 0.0
      %3586 = vmatprep.subr.mxu0 0.0
      %3587 = vmatpush1.msra.mxu0 0.0
      %3588 = vmatprep.subr.mxu0 0.0
      %3589 = vmatpush1.msra.mxu0 0.0
      %3590 = vmatprep.subr.mxu0 0.0
      %3591 = vmatpush1.msra.mxu0 0.0
      %3592 = vmatprep.subr.mxu0 0.0
      %3593 = vmatpush1.msra.mxu0 0.0
      %3594 = vmatprep.subr.mxu0 0.0
      %3595 = vmatpush1.msra.mxu0 0.0
      %3596 = vmatprep.subr.mxu0 0.0
      %3597 = vmatpush1.msra.mxu0 0.0
      %3598 = vmatprep.subr.mxu0 0.0
      %3599 = vmatpush1.msra.mxu0 0.0
      %3600 = vmatprep.subr.mxu0 0.0
      %3601 = vmatpush1.msra.mxu0 0.0
      %3602 = vmatprep.subr.mxu0 0.0
      %3603 = vmatpush1.msra.mxu0 0.0
      %3604 = vmatprep.subr.mxu0 0.0
      %3605 = vmatpush1.msra.mxu0 0.0
      %3606 = vmatprep.subr.mxu0 0.0
      %3607 = vmatpush1.msra.mxu0 0.0
      %3608 = vmatprep.subr.mxu0 0.0
      %3609 = vmatpush1.msra.mxu0 0.0
      %3610 = vmatprep.subr.mxu0 0.0
      %3611 = vmatpush1.msra.mxu0 0.0
      %3612 = vmatprep.subr.mxu0 0.0
      %3613 = vmatpush1.msra.mxu0 0.0
      %3614 = vmatprep.subr.mxu0 0.0
      %3615 = vmatpush1.msra.mxu0 0.0
      %3616 = vmatprep.subr.mxu0 0.0
      %3617 = vmatpush1.msra.mxu0 0.0
      %3618 = vmatprep.subr.mxu0 0.0
      %3619 = vmatpush1.msra.mxu0 0.0
      %3620 = vmatprep.subr.mxu0 0.0
      %3621 = vmatpush1.msra.mxu0 0.0
      %3622 = vmatprep.subr.mxu0 0.0
      %3623 = vmatpush1.msra.mxu0 0.0
      %3624 = vmatprep.subr.mxu0 0.0
      %3625 = vmatpush1.msra.mxu0 0.0
      %3626 = vmatprep.subr.mxu0 0.0
      %3627 = vmatpush1.msra.mxu0 0.0
      %3628 = vmatprep.subr.mxu0 0.0
      %3629 = vmatpush1.msra.mxu0 0.0
      %3630 = vmatprep.mubr.f32.mxu0 0.0
      %3631 = vmatmul.mubr.f32.gmra.mrb[0].mxu0 %v3471
      %v3632 = vpop.f32.mrb[0].mxu0
      %v3633 = vadd.f32 0.0, %v3632
      %v3634 = vpop.f32.mrb[0].mxu0
      %3635 = vmatprep.mubr.f32.mxu0 0.0
      %3636 = vmatmul.mubr.f32.gmra.mrb[0].mxu0 %v3474
      %v3637 = vpop.f32.mrb[0].mxu0
      %v3638 = vadd.f32 0.0, %v3637
      %v3639 = vpop.f32.mrb[0].mxu0
      %3640 = vmatprep.mubr.f32.mxu0 0.0
      %3641 = vmatmul.mubr.f32.gmra.mrb[0].mxu0 %v3477
      %v3642 = vpop.f32.mrb[0].mxu0
      %v3643 = vadd.f32 0.0, %v3642
      %v3644 = vpop.f32.mrb[0].mxu0
      %3645 = vmatprep.mubr.f32.mxu0 0.0
      %3646 = vmatmul.mubr.f32.gmra.mrb[0].mxu0 %v3480
      %v3647 = vpop.f32.mrb[0].mxu0
      %v3648 = vadd.f32 0.0, %v3647
      %v3649 = vpop.f32.mrb[0].mxu0
      %3650 = vmatprep.mubr.f32.mxu0 0.0
      %3651 = vmatmul.mubr.f32.gmra.mrb[0].mxu0 %v3483
      %v3652 = vpop.f32.mrb[0].mxu0
      %v3653 = vadd.f32 0.0, %v3652
      %v3654 = vpop.f32.mrb[0].mxu0
      %3655 = vmatprep.mubr.f32.mxu0 0.0
      %3656 = vmatmul.mubr.f32.gmra.mrb[0].mxu0 %v3486
      %v3657 = vpop.f32.mrb[0].mxu0
      %v3658 = vadd.f32 0.0, %v3657
      %v3659 = vpop.f32.mrb[0].mxu0
      %3660 = vmatprep.mubr.f32.mxu0 0.0
      %3661 = vmatmul.mubr.f32.gmra.mrb[0].mxu0 %v3489
      %v3662 = vpop.f32.mrb[0].mxu0
      %v3663 = vadd.f32 0.0, %v3662
      %v3664 = vpop.f32.mrb[0].mxu0
      %3665 = vmatprep.mubr.f32.mxu0 0.0
      %3666 = vmatmul.mubr.f32.gmra.mrb[0].mxu0 %v3492
      %v3667 = vpop.f32.mrb[0].mxu0
      %v3668 = vadd.f32 0.0, %v3667
      %v3669 = vpop.f32.mrb[0].mxu0
      %3670 = vmatprep.mubr.f32.mxu0 0.0
      %3671 = vmatmul.mubr.f32.gmra.mrb[0].mxu0 %v3495
      %v3672 = vpop.f32.mrb[0].mxu0
      %v3673 = vadd.f32 0.0, %v3672
      %v3674 = vpop.f32.mrb[0].mxu0
      %3675 = vmatprep.mubr.f32.mxu0 0.0
      %3676 = vmatmul.mubr.f32.gmra.mrb[0].mxu0 %v3498
      %v3677 = vpop.f32.mrb[0].mxu0
      %v3678 = vadd.f32 0.0, %v3677
      %v3679 = vpop.f32.mrb[0].mxu0
      %3680 = vmatprep.mubr.f32.mxu0 0.0
      %3681 = vmatmul.mubr.f32.gmra.mrb[0].mxu0 %v3501
      %v3682 = vpop.f32.mrb[0].mxu0
      %v3683 = vadd.f32 0.0, %v3682
      %v3684 = vpop.f32.mrb[0].mxu0
      %3685 = vmatprep.mubr.f32.mxu0 0.0
      %3686 = vmatmul.mubr.f32.gmra.mrb[0].mxu0 %v3504
      %v3687 = vpop.f32.mrb[0].mxu0
      %v3688 = vadd.f32 0.0, %v3687
      %v3689 = vpop.f32.mrb[0].mxu0
      %3690 = vmatprep.mubr.f32.mxu0 0.0
      %3691 = vmatmul.mubr.f32.gmra.mrb[0].mxu0 %v3507
      %v3692 = vpop.f32.mrb[0].mxu0
      %v3693 = vadd.f32 0.0, %v3692
      %v3694 = vpop.f32.mrb[0].mxu0
      %3695 = vmatprep.mubr.f32.mxu0 0.0
      %3696 = vmatmul.mubr.f32.gmra.mrb[0].mxu0 %v3510
      %v3697 = vpop.f32.mrb[0].mxu0
      %v3698 = vadd.f32 0.0, %v3697
      %v3699 = vpop.f32.mrb[0].mxu0
      %3700 = vmatprep.mubr.f32.mxu0 0.0
      %3701 = vmatmul.mubr.f32.gmra.mrb[0].mxu0 %v3513
      %v3702 = vpop.f32.mrb[0].mxu0
      %v3703 = vadd.f32 0.0, %v3702
      %v3704 = vpop.f32.mrb[0].mxu0
      %3705 = vmatprep.mubr.f32.mxu0 0.0
      %3706 = vmatmul.mubr.f32.gmra.mrb[0].mxu0 %v3516
      %v3707 = vpop.f32.mrb[0].mxu0
      %v3708 = vadd.f32 0.0, %v3707
      %v3709 = vpop.f32.mrb[0].mxu0
      %3710 = vmatprep.mubr.f32.mxu0 0.0
      %3711 = vmatmul.mubr.f32.gmra.mrb[0].mxu0 %v3519
      %v3712 = vpop.f32.mrb[0].mxu0
      %v3713 = vadd.f32 0.0, %v3712
      %v3714 = vpop.f32.mrb[0].mxu0
      %3715 = vmatprep.mubr.f32.mxu0 0.0
      %3716 = vmatmul.mubr.f32.gmra.mrb[0].mxu0 %v3522
      %v3717 = vpop.f32.mrb[0].mxu0
      %v3718 = vadd.f32 0.0, %v3717
      %v3719 = vpop.f32.mrb[0].mxu0
      %3720 = vmatprep.mubr.f32.mxu0 0.0
      %3721 = vmatmul.mubr.f32.gmra.mrb[0].mxu0 %v3525
      %v3722 = vpop.f32.mrb[0].mxu0
      %v3723 = vadd.f32 0.0, %v3722
      %v3724 = vpop.f32.mrb[0].mxu0
      %3725 = vmatprep.mubr.f32.mxu0 0.0
      %3726 = vmatmul.mubr.f32.gmra.mrb[0].mxu0 %v3528
      %v3727 = vpop.f32.mrb[0].mxu0
      %v3728 = vadd.f32 0.0, %v3727
      %v3729 = vpop.f32.mrb[0].mxu0
      %3730 = vmatprep.mubr.f32.mxu0 0.0
      %3731 = vmatmul.mubr.f32.gmra.mrb[0].mxu0 %v3531
      %v3732 = vpop.f32.mrb[0].mxu0
      %v3733 = vadd.f32 0.0, %v3732
      %v3734 = vpop.f32.mrb[0].mxu0
      %3735 = vmatprep.mubr.f32.mxu0 0.0
      %3736 = vmatmul.mubr.f32.gmra.mrb[0].mxu0 %v3534
      %v3737 = vpop.f32.mrb[0].mxu0
      %v3738 = vadd.f32 0.0, %v3737
      %v3739 = vpop.f32.mrb[0].mxu0
      %3740 = vmatprep.mubr.f32.mxu0 0.0
      %3741 = vmatmul.mubr.f32.gmra.mrb[0].mxu0 %v3537
      %v3742 = vpop.f32.mrb[0].mxu0
      %v3743 = vadd.f32 0.0, %v3742
      %v3744 = vpop.f32.mrb[0].mxu0
      %3745 = vmatprep.mubr.f32.mxu0 0.0
      %3746 = vmatmul.mubr.f32.gmra.mrb[0].mxu0 %v3540
      %v3747 = vpop.f32.mrb[0].mxu0
      %v3748 = vadd.f32 0.0, %v3747
      %v3749 = vpop.f32.mrb[0].mxu0
      %3750 = vmatprep.mubr.f32.mxu0 0.0
      %3751 = vmatmul.mubr.f32.gmra.mrb[0].mxu0 %v3543
      %v3752 = vpop.f32.mrb[0].mxu0
      %v3753 = vadd.f32 0.0, %v3752
      %v3754 = vpop.f32.mrb[0].mxu0
      %3755 = vmatprep.mubr.f32.mxu0 0.0
      %3756 = vmatmul.mubr.f32.gmra.mrb[0].mxu0 %v3546
      %v3757 = vpop.f32.mrb[0].mxu0
      %v3758 = vadd.f32 0.0, %v3757
      %v3759 = vpop.f32.mrb[0].mxu0
      %3760 = vmatprep.mubr.f32.mxu0 0.0
      %3761 = vmatmul.mubr.f32.gmra.mrb[0].mxu0 %v3549
      %v3762 = vpop.f32.mrb[0].mxu0
      %v3763 = vadd.f32 0.0, %v3762
      %v3764 = vpop.f32.mrb[0].mxu0
      %3765 = vmatprep.mubr.f32.mxu0 0.0
      %3766 = vmatmul.mubr.f32.gmra.mrb[0].mxu0 %v3552
      %v3767 = vpop.f32.mrb[0].mxu0
      %v3768 = vadd.f32 0.0, %v3767
      %v3769 = vpop.f32.mrb[0].mxu0
      %3770 = vmatprep.mubr.f32.mxu0 0.0
      %3771 = vmatmul.mubr.f32.gmra.mrb[0].mxu0 %v3555
      %v3772 = vpop.f32.mrb[0].mxu0
      %v3773 = vadd.f32 0.0, %v3772
      %v3774 = vpop.f32.mrb[0].mxu0
      %3775 = vmatprep.mubr.f32.mxu0 0.0
      %3776 = vmatmul.mubr.f32.gmra.mrb[0].mxu0 %v3558
      %v3777 = vpop.f32.mrb[0].mxu0
      %v3778 = vadd.f32 0.0, %v3777
      %v3779 = vpop.f32.mrb[0].mxu0
      %3780 = vmatprep.mubr.f32.mxu0 0.0
      %3781 = vmatmul.mubr.f32.gmra.mrb[0].mxu0 %v3561
      %v3782 = vpop.f32.mrb[0].mxu0
      %v3783 = vadd.f32 0.0, %v3782
      %v3784 = vpop.f32.mrb[0].mxu0
      %3785 = vmatprep.mubr.f32.mxu0 0.0
      %3786 = vmatmul.mubr.f32.gmra.mrb[0].mxu0 %v3564
      %v3787 = vpop.f32.mrb[0].mxu0
      %v3788 = vadd.f32 0.0, %v3787
      %v3789 = vpop.f32.mrb[0].mxu0
      %3790 = vdwg.mxu0
      %v3791 = vadd.f32 %v3402, %v3633
      %v3792 = vadd.f32 %v3403, %v3638
      %v3793 = vadd.f32 %v3404, %v3643
      %v3794 = vadd.f32 %v3405, %v3648
      %v3795 = vadd.f32 %v3406, %v3653
      %v3796 = vadd.f32 %v3407, %v3658
      %v3797 = vadd.f32 %v3408, %v3663
      %v3798 = vadd.f32 %v3409, %v3668
      %v3799 = vadd.f32 %v3410, %v3673
      %v3800 = vadd.f32 %v3411, %v3678
      %v3801 = vadd.f32 %v3412, %v3683
      %v3802 = vadd.f32 %v3413, %v3688
      %v3803 = vadd.f32 %v3414, %v3693
      %v3804 = vadd.f32 %v3415, %v3698
      %v3805 = vadd.f32 %v3416, %v3703
      %v3806 = vadd.f32 %v3417, %v3708
      %v3807 = vadd.f32 %v3418, %v3713
      %v3808 = vadd.f32 %v3419, %v3718
      %v3809 = vadd.f32 %v3420, %v3723
      %v3810 = vadd.f32 %v3421, %v3728
      %v3811 = vadd.f32 %v3422, %v3733
      %v3812 = vadd.f32 %v3423, %v3738
      %v3813 = vadd.f32 %v3424, %v3743
      %v3814 = vadd.f32 %v3425, %v3748
      %v3815 = vadd.f32 %v3426, %v3753
      %v3816 = vadd.f32 %v3427, %v3758
      %v3817 = vadd.f32 %v3428, %v3763
      %v3818 = vadd.f32 %v3429, %v3768
      %v3819 = vadd.f32 %v3430, %v3773
      %v3820 = vadd.f32 %v3431, %v3778
      %v3821 = vadd.f32 %v3432, %v3783
      %v3822 = vadd.f32 %v3433, %v3788
      %vm3823 = vcmask 64512
      %3824 = vst.msk [vmem:[%s143] sm:$0xff] %vm3823, %v3791
      %3825 = vst.msk [vmem:[%s143 + $0x8] sm:$0xff] %vm3823, %v3792
      %3826 = vst.msk [vmem:[%s143 + $0x10] sm:$0xff] %vm3823, %v3793
      %3827 = vst.msk [vmem:[%s143 + $0x18] sm:$0xff] %vm3823, %v3794
      %3828 = vst.msk [vmem:[%s143 + $0x20] sm:$0xff] %vm3823, %v3795
      %3829 = vst.msk [vmem:[%s143 + $0x28] sm:$0xff] %vm3823, %v3796
      %3830 = vst.msk [vmem:[%s143 + $0x30] sm:$0xff] %vm3823, %v3797
      %3831 = vst.msk [vmem:[%s143 + $0x38] sm:$0xff] %vm3823, %v3798
      %3832 = vst.msk [vmem:[%s143 + $0x40] sm:$0xff] %vm3823, %v3799
      %3833 = vst.msk [vmem:[%s143 + $0x48] sm:$0xff] %vm3823, %v3800
      %3834 = vst.msk [vmem:[%s143 + $0x50] sm:$0xff] %vm3823, %v3801
      %3835 = vst.msk [vmem:[%s143 + $0x58] sm:$0xff] %vm3823, %v3802
      %3836 = vst.msk [vmem:[%s143 + $0x60] sm:$0xff] %vm3823, %v3803
      %3837 = vst.msk [vmem:[%s143 + $0x68] sm:$0xff] %vm3823, %v3804
      %3838 = vst.msk [vmem:[%s143 + $0x70] sm:$0xff] %vm3823, %v3805
      %3839 = vst.msk [vmem:[%s143 + $0x78] sm:$0xff] %vm3823, %v3806
      %3840 = vst.msk [vmem:[%s143 + $0x80] sm:$0xff] %vm3823, %v3807
      %3841 = vst.msk [vmem:[%s143 + $0x88] sm:$0xff] %vm3823, %v3808
      %3842 = vst.msk [vmem:[%s143 + $0x90] sm:$0xff] %vm3823, %v3809
      %3843 = vst.msk [vmem:[%s143 + $0x98] sm:$0xff] %vm3823, %v3810
      %3844 = vst.msk [vmem:[%s143 + $0xa0] sm:$0xff] %vm3823, %v3811
      %3845 = vst.msk [vmem:[%s143 + $0xa8] sm:$0xff] %vm3823, %v3812
      %3846 = vst.msk [vmem:[%s143 + $0xb0] sm:$0xff] %vm3823, %v3813
      %3847 = vst.msk [vmem:[%s143 + $0xb8] sm:$0xff] %vm3823, %v3814
      %3848 = vst.msk [vmem:[%s143 + $0xc0] sm:$0xff] %vm3823, %v3815
      %3849 = vst.msk [vmem:[%s143 + $0xc8] sm:$0xff] %vm3823, %v3816
      %3850 = vst.msk [vmem:[%s143 + $0xd0] sm:$0xff] %vm3823, %v3817
      %3851 = vst.msk [vmem:[%s143 + $0xd8] sm:$0xff] %vm3823, %v3818
      %3852 = vst.msk [vmem:[%s143 + $0xe0] sm:$0xff] %vm3823, %v3819
      %3853 = vst.msk [vmem:[%s143 + $0xe8] sm:$0xff] %vm3823, %v3820
      %3854 = vst.msk [vmem:[%s143 + $0xf0] sm:$0xff] %vm3823, %v3821
      %3855 = vst.msk [vmem:[%s143 + $0xf8] sm:$0xff] %vm3823, %v3822
      %p3856 = scmp.lt.s32.totalorder %s13, 1
      %s3857 = scalar_select %p3856, %s13, 1
      %s3858 = smul.addr %s3857, 32
      %s3859 = smul.addr %s3858, 8
      %s3860 = scalar_lea.vmem %s2, %s3859
      // Predicated region
      $region29: #{cdownsample.1} parent=27 // pred_check
        %p3861 = pneg %p78
      $region30: #{cdownsample.1} parent=27 // pred_check_branch
        %3863 = sbr.rel (%p3861) target = $region32
      $region31: #{cdownsample.1} parent=27 // pred_region
        _
      $region32: #{cdownsample.1} parent=27 // pred_fallthru
        _
    $region28: #{cdownsample.1} parent=5 // pred_fallthru
      _
    %p3864 = scmp.le.s32.totalorder 2, %s8
    // Predicated region
    $region33: #{cdownsample.1} parent=5 // pred_check
      %p3865 = pneg %p3864
    $region34: #{cdownsample.1} parent=5 // pred_check_branch
      %3867 = sbr.rel (%p3865) target = $region36
    $region35: #{cdownsample.1} parent=5 // pred_region
      %s3868 = ssub.s32 %s8, 2
      // Predicated region
      $region37: #{cdownsample.1} parent=35 // pred_check
        %p3869 = pneg %p84
      $region38: #{cdownsample.1} parent=35 // pred_check_branch
        %3871 = sbr.rel (%p3869) target = $region40
      $region39: #{cdownsample.1} parent=35 // pred_region
        %p3872 = scmp.lt.s32.totalorder %s14, 1
        %s3873 = scalar_select %p3872, %s14, 1
        %s3874 = smul.addr %s3873, 32
        %s3875 = smul.addr %s3874, 8
        %s3876 = scalar_lea.vmem %s2, %s3875
      $region40: #{cdownsample.1} parent=35 // pred_fallthru
        _
    $region36: #{cdownsample.1} parent=5 // pred_fallthru
      _
  $region6: #{cdownsample.1} parent=0 // loop_footer
    %s12 = sadd.s32 1, %s8
  $region7: #{cdownsample.1} parent=0 // loop_footer_branch
    %7 = sbr.rel target = $region3
  $region8: #{cdownsample.1} parent=0 // loop_exit
    _

</llo_original>
